<compile_context>
chip_gen: v6e
topology: v6e:2x2x1
jax: 0.10.0
libtpu: 0.0.40
codegen_flags: <defaults>
</compile_context>

<pallas_src>
import jax
import jax.numpy as jnp
import numpy as np
from jax.experimental import pallas as pl
from jax.experimental.pallas import tpu as pltpu

B = 64        # batch (forced by hard-coded torch.zeros(64, 1, hidden_size))
T = 10        # seq length (forced by x[:, 9 - i, :] / `if i == 9`)
I = 16        # input_size
H = 32        # hidden_size
L = 2 * B     # 128 lanes per step block: [fwd batch | bwd batch]


def _bisru_kernel(x_ref, wp_ref, wn_ref, hcat_ref, states_ref):
    # x_ref:   (2I, T*128)   block-diag packed inputs.  Step t's 128-lane block:
    #                        rows 0..I-1,  lanes 0..63   = x[:, t, :]^T      (fwd)
    #                        rows I..2I-1, lanes 64..127 = x[:, T-1-t, :]^T  (bwd)
    # wp_ref:  (5H, 2I)      persistent weights, transposed, gate-major rows
    #                        [xs | xr | f_s | r_s | r_f]; cols = [fwd | bwd]
    # wn_ref:  (T, 2H, 2I)   per-step node weights, transposed: rows [xs | f_s]
    # hcat_ref:   (H, 128)   last-step hidden, lanes packed [h_f^T | h_b^T]
    # states_ref: (T, 2H, 128) per step rows [c | f], lanes packed [fwd | bwd]

    x_all = x_ref[...]                                   # (2I, T*128)
    wp = wp_ref[...]                                     # (5H, 2I)

    # ---- all MXU work hoisted out of the recurrence (independent of the carry)
    zp = jnp.dot(wp, x_all, preferred_element_type=jnp.float32)       # (5H, T*128)
    zn = [jnp.dot(wn_ref[t], x_all[:, t * L:(t + 1) * L],
                  preferred_element_type=jnp.float32) for t in range(T)]  # (2H, 128)

    # ---- all transcendentals hoisted: dense EUP pipeline off the serial chain
    xs_all = zp[0 * H:1 * H, :]                          # (H, T*128)  xs
    g_all = jax.nn.sigmoid(zp[2 * H:3 * H, :])           # (H, T*128)  f_s gate
    nxs = [z[0:H, :] for z in zn]                        # node xs
    ngs = [jax.nn.sigmoid(z[H:2 * H, :]) for z in zn]    # node f_s gate
    # last-step-only hidden gates (only the final prev_x survives in PyTorch)
    xr_l = zp[1 * H:2 * H, (T - 1) * L:T * L]
    rs_l = jax.nn.sigmoid(zp[3 * H:4 * H, (T - 1) * L:T * L])
    rf_l = jax.nn.sigmoid(zp[4 * H:5 * H, (T - 1) * L:T * L])

    # ---- serial carry chain: a few fully lane-dense (H,128) VPU MACs per step
    s = jnp.zeros((H, L), jnp.float32)
    f = jnp.zeros((H, L), jnp.float32)
    c_t = f_t = None
    for t in range(T):                                   # statically unrolled, T = 10
        xs = xs_all[:, t * L:(t + 1) * L]
        g = g_all[:, t * L:(t + 1) * L]
        c_t = xs * (1.0 - g) + s * g                     # persistent cell "s"
        f_t = xs * g + f * (1.0 - g)                     # persistent cell "f"
        states_ref[t, 0:H, :] = c_t                      # aligned sublane-slice stores
        states_ref[t, H:2 * H, :] = f_t
        # carry update via the fresh per-step node cell (same prev state)
        ng = ngs[t]
        ns = nxs[t]
        s = ns * (1.0 - ng) + s * ng
        f = ns * ng + f * (1.0 - ng)

    # final step hidden: h = tanh(c)*r_s + tanh(f)*r_f + (2 - r_s - r_f)*xr
    hcat_ref[...] = (jnp.tanh(c_t) * rs_l + jnp.tanh(f_t) * rf_l
                     + (2.0 - rs_l - rf_l) * xr_l)


def bisru_forward(x, wf, wb, nwf, nwb):
    x = x.astype(jnp.float32)

    # ---- wrapper-side layout plumbing: transposed, lane-packed operands ----
    # Block-diagonal packed input so one matmul handles fwd (own weights) and
    # bwd (own weights, reversed time) in the same 128 lanes.
    xfT = jnp.transpose(x, (1, 2, 0))                                   # (T, I, B)
    xbT = xfT[::-1]                                                     # time-reversed
    zpad = jnp.zeros_like(xfT)
    xbd = jnp.concatenate(
        [jnp.concatenate([xfT, zpad], axis=2),
         jnp.concatenate([zpad, xbT], axis=2)], axis=1)                 # (T, 2I, 2B)
    x_all = jnp.transpose(xbd, (1, 0, 2)).reshape(2 * I, T * L)         # (2I, T*128)

    # Persistent weights passed ONCE (no T-fold broadcast), transposed, fwd|bwd
    # packed along the contraction axis.
    wp = jnp.concatenate(
        [jnp.transpose(wf, (0, 2, 1)).reshape(5 * H, I),
         jnp.transpose(wb, (0, 2, 1)).reshape(5 * H, I)], axis=1)       # (5H, 2I)
    # Per-step node weights (the only genuinely time-varying weights).
    wn = jnp.concatenate(
        [jnp.transpose(nwf, (0, 1, 3, 2)).reshape(T, 2 * H, I),
         jnp.transpose(nwb, (0, 1, 3, 2)).reshape(T, 2 * H, I)], axis=2)  # (T, 2H, 2I)

    hcat_t, states = pl.pallas_call(
        _bisru_kernel,
        out_shape=(
            jax.ShapeDtypeStruct((H, L), jnp.float32),
            jax.ShapeDtypeStruct((T, 2 * H, L), jnp.float32),
        ),
        # single invocation, no grid: whole problem (<3 MiB) resident in VMEM
        in_specs=[pl.BlockSpec(memory_space=pltpu.MemorySpace.VMEM)] * 3,
        out_specs=(pl.BlockSpec(memory_space=pltpu.MemorySpace.VMEM),
                   pl.BlockSpec(memory_space=pltpu.MemorySpace.VMEM)),
    )(x_all, wp, wn)

    # ---- unpack to the PyTorch output shapes ----
    csf = jnp.transpose(states[:, 0:H, 0:B], (0, 2, 1))        # (T, B, H)
    fsf = jnp.transpose(states[:, H:2 * H, 0:B], (0, 2, 1))
    csb = jnp.transpose(states[:, 0:H, B:L], (0, 2, 1))
    fsb = jnp.transpose(states[:, H:2 * H, B:L], (0, 2, 1))
    prev_x = jnp.concatenate([hcat_t[:, 0:B].T, hcat_t[:, B:L].T], axis=-1)  # (B, 2H)

    # PyTorch shapes: prev_x (B,1,2H); stacked states (T,B,1,H).
    return (prev_x[:, None, :],
            csf[:, :, None, :], fsf[:, :, None, :],
            csb[:, :, None, :], fsb[:, :, None, :])


# ------------------- plain-JAX reference for verification -------------------
def _ref_cell(x, w, s_prev, f_prev):
    xs = x @ w[0]
    xr = x @ w[1]
    f_s = jax.nn.sigmoid(x @ w[2])
    r_s = jax.nn.sigmoid(x @ w[3])
    r_f = jax.nn.sigmoid(x @ w[4])
    s = xs * (1.0 - f_s) + s_prev * f_s
    f = xs * f_s + f_prev * (1.0 - f_s)
    h = jnp.tanh(s) * r_s + (1.0 - r_s) * xr + jnp.tanh(f) * r_f + (1.0 - r_f) * xr
    return s, f, h


def _ref_node(x, w, s_prev, f_prev):
    xs = x @ w[0]
    f_s = jax.nn.sigmoid(x @ w[1])
    s = xs * (1.0 - f_s) + s_prev * f_s
    f = xs * f_s + f_prev * (1.0 - f_s)
    return s, f


def reference_forward(x, wf, wb, nwf, nwb):
    s_f = f_f = s_b = f_b = jnp.zeros((B, H), jnp.float32)
    cs_f, fs_f, cs_b, fs_b = [], [], [], []
    hcat = None
    for i in range(T):
        xf = x[:, i, :]
        xb = x[:, T - 1 - i, :]
        c1, o1, h1 = _ref_cell(xf, wf, s_f, f_f)
        c2, o2, h2 = _ref_cell(xb, wb, s_b, f_b)
        cs_f.append(c1); fs_f.append(o1); cs_b.append(c2); fs_b.append(o2)
        hcat = jnp.concatenate([h1, h2], axis=-1)
        s_f, f_f = _ref_node(xf, nwf[i], s_f, f_f)
        s_b, f_b = _ref_node(xb, nwb[i], s_b, f_b)
    return (hcat[:, None, :],
            jnp.stack(cs_f)[:, :, None, :], jnp.stack(fs_f)[:, :, None, :],
            jnp.stack(cs_b)[:, :, None, :], jnp.stack(fs_b)[:, :, None, :])


def _xavier_uniform(key, shape):
    fan_in, fan_out = shape[-2], shape[-1]
    bound = float(np.sqrt(6.0 / (fan_in + fan_out)))
    return jax.random.uniform(key, shape, jnp.float32, -bound, bound)


if __name__ == "__main__":
    key = jax.random.PRNGKey(0)
    kx, kwf, kwb, knf, knb = jax.random.split(key, 5)

    x = jax.random.normal(kx, (B, T, I), jnp.float32)
    wf = _xavier_uniform(kwf, (5, I, H))        # lstm_f: [w_s, wx, wf_s, wr_s, wr_f]
    wb = _xavier_uniform(kwb, (5, I, H))        # lstm_b: [w_s, wx, wf_s, wr_s, wr_f]
    nwf = _xavier_uniform(knf, (T, 2, I, H))    # per-step node cells (fwd): [w_s, wf_s]
    nwb = _xavier_uniform(knb, (T, 2, I, H))    # per-step node cells (bwd): [w_s, wf_s]

    outs = jax.block_until_ready(bisru_forward(x, wf, wb, nwf, nwb))
    refs = jax.block_until_ready(reference_forward(x, wf, wb, nwf, nwb))

    for got, want in zip(outs, refs):
        np.testing.assert_allclose(np.asarray(got), np.asarray(want),
                                   rtol=1e-3, atol=1e-3)
    print("KERNEL_OK")
</pallas_src>

<mosaic_0001>
module attributes {stable_mosaic.version = 11 : i64} {
  func.func @_bisru_kernel(%arg0: memref<32x1280xf32, #tpu.memory_space<vmem>>, %arg1: memref<160x32xf32, #tpu.memory_space<vmem>>, %arg2: memref<10x64x32xf32, #tpu.memory_space<vmem>>, %arg3: memref<32x128xf32, #tpu.memory_space<vmem>>, %arg4: memref<10x64x128xf32, #tpu.memory_space<vmem>>) attributes {dimension_semantics = [], scalar_prefetch = 0 : i64, scratch_operands = 0 : i64, tpu.core_type = #tpu.core_type<tc>} {
    %c0 = arith.constant 0 : index
    %c0_0 = arith.constant 0 : index
    %0 = vector.load %arg0[%c0, %c0_0] : memref<32x1280xf32, #tpu.memory_space<vmem>>, vector<32x1280xf32>
    %c0_1 = arith.constant 0 : index
    %c0_2 = arith.constant 0 : index
    %1 = vector.load %arg1[%c0_1, %c0_2] : memref<160x32xf32, #tpu.memory_space<vmem>>, vector<160x32xf32>
    %cst = arith.constant dense<0.000000e+00> : vector<160x1280xf32>
    %2 = tpu.matmul %1, %0, %cst {dimension_numbers = #tpu.dot_dimension_numbers<[1], [0], [0], [1], [0, 0, 1, 1], [], []>} : vector<160x32xf32>, vector<32x1280xf32>, vector<160x1280xf32> -> vector<160x1280xf32>
    %c0_3 = arith.constant 0 : index
    %c0_4 = arith.constant 0 : index
    %c0_5 = arith.constant 0 : index
    %3 = vector.load %arg2[%c0_3, %c0_4, %c0_5] : memref<10x64x32xf32, #tpu.memory_space<vmem>>, vector<1x64x32xf32>
    %4 = vector.shape_cast %3 : vector<1x64x32xf32> to vector<64x32xf32>
    %5 = vector.extract_strided_slice %0 {offsets = [0, 0], sizes = [32, 128], strides = [1, 1]} : vector<32x1280xf32> to vector<32x128xf32>
    %cst_6 = arith.constant dense<0.000000e+00> : vector<64x128xf32>
    %6 = tpu.matmul %4, %5, %cst_6 {dimension_numbers = #tpu.dot_dimension_numbers<[1], [0], [0], [1], [0, 0, 1, 1], [], []>} : vector<64x32xf32>, vector<32x128xf32>, vector<64x128xf32> -> vector<64x128xf32>
    %c1 = arith.constant 1 : index
    %c0_7 = arith.constant 0 : index
    %c0_8 = arith.constant 0 : index
    %7 = vector.load %arg2[%c1, %c0_7, %c0_8] : memref<10x64x32xf32, #tpu.memory_space<vmem>>, vector<1x64x32xf32>
    %8 = vector.shape_cast %7 : vector<1x64x32xf32> to vector<64x32xf32>
    %9 = vector.extract_strided_slice %0 {offsets = [0, 128], sizes = [32, 128], strides = [1, 1]} : vector<32x1280xf32> to vector<32x128xf32>
    %cst_9 = arith.constant dense<0.000000e+00> : vector<64x128xf32>
    %10 = tpu.matmul %8, %9, %cst_9 {dimension_numbers = #tpu.dot_dimension_numbers<[1], [0], [0], [1], [0, 0, 1, 1], [], []>} : vector<64x32xf32>, vector<32x128xf32>, vector<64x128xf32> -> vector<64x128xf32>
    %c2 = arith.constant 2 : index
    %c0_10 = arith.constant 0 : index
    %c0_11 = arith.constant 0 : index
    %11 = vector.load %arg2[%c2, %c0_10, %c0_11] : memref<10x64x32xf32, #tpu.memory_space<vmem>>, vector<1x64x32xf32>
    %12 = vector.shape_cast %11 : vector<1x64x32xf32> to vector<64x32xf32>
    %13 = vector.extract_strided_slice %0 {offsets = [0, 256], sizes = [32, 128], strides = [1, 1]} : vector<32x1280xf32> to vector<32x128xf32>
    %cst_12 = arith.constant dense<0.000000e+00> : vector<64x128xf32>
    %14 = tpu.matmul %12, %13, %cst_12 {dimension_numbers = #tpu.dot_dimension_numbers<[1], [0], [0], [1], [0, 0, 1, 1], [], []>} : vector<64x32xf32>, vector<32x128xf32>, vector<64x128xf32> -> vector<64x128xf32>
    %c3 = arith.constant 3 : index
    %c0_13 = arith.constant 0 : index
    %c0_14 = arith.constant 0 : index
    %15 = vector.load %arg2[%c3, %c0_13, %c0_14] : memref<10x64x32xf32, #tpu.memory_space<vmem>>, vector<1x64x32xf32>
    %16 = vector.shape_cast %15 : vector<1x64x32xf32> to vector<64x32xf32>
    %17 = vector.extract_strided_slice %0 {offsets = [0, 384], sizes = [32, 128], strides = [1, 1]} : vector<32x1280xf32> to vector<32x128xf32>
    %cst_15 = arith.constant dense<0.000000e+00> : vector<64x128xf32>
    %18 = tpu.matmul %16, %17, %cst_15 {dimension_numbers = #tpu.dot_dimension_numbers<[1], [0], [0], [1], [0, 0, 1, 1], [], []>} : vector<64x32xf32>, vector<32x128xf32>, vector<64x128xf32> -> vector<64x128xf32>
    %c4 = arith.constant 4 : index
    %c0_16 = arith.constant 0 : index
    %c0_17 = arith.constant 0 : index
    %19 = vector.load %arg2[%c4, %c0_16, %c0_17] : memref<10x64x32xf32, #tpu.memory_space<vmem>>, vector<1x64x32xf32>
    %20 = vector.shape_cast %19 : vector<1x64x32xf32> to vector<64x32xf32>
    %21 = vector.extract_strided_slice %0 {offsets = [0, 512], sizes = [32, 128], strides = [1, 1]} : vector<32x1280xf32> to vector<32x128xf32>
    %cst_18 = arith.constant dense<0.000000e+00> : vector<64x128xf32>
    %22 = tpu.matmul %20, %21, %cst_18 {dimension_numbers = #tpu.dot_dimension_numbers<[1], [0], [0], [1], [0, 0, 1, 1], [], []>} : vector<64x32xf32>, vector<32x128xf32>, vector<64x128xf32> -> vector<64x128xf32>
    %c5 = arith.constant 5 : index
    %c0_19 = arith.constant 0 : index
    %c0_20 = arith.constant 0 : index
    %23 = vector.load %arg2[%c5, %c0_19, %c0_20] : memref<10x64x32xf32, #tpu.memory_space<vmem>>, vector<1x64x32xf32>
    %24 = vector.shape_cast %23 : vector<1x64x32xf32> to vector<64x32xf32>
    %25 = vector.extract_strided_slice %0 {offsets = [0, 640], sizes = [32, 128], strides = [1, 1]} : vector<32x1280xf32> to vector<32x128xf32>
    %cst_21 = arith.constant dense<0.000000e+00> : vector<64x128xf32>
    %26 = tpu.matmul %24, %25, %cst_21 {dimension_numbers = #tpu.dot_dimension_numbers<[1], [0], [0], [1], [0, 0, 1, 1], [], []>} : vector<64x32xf32>, vector<32x128xf32>, vector<64x128xf32> -> vector<64x128xf32>
    %c6 = arith.constant 6 : index
    %c0_22 = arith.constant 0 : index
    %c0_23 = arith.constant 0 : index
    %27 = vector.load %arg2[%c6, %c0_22, %c0_23] : memref<10x64x32xf32, #tpu.memory_space<vmem>>, vector<1x64x32xf32>
    %28 = vector.shape_cast %27 : vector<1x64x32xf32> to vector<64x32xf32>
    %29 = vector.extract_strided_slice %0 {offsets = [0, 768], sizes = [32, 128], strides = [1, 1]} : vector<32x1280xf32> to vector<32x128xf32>
    %cst_24 = arith.constant dense<0.000000e+00> : vector<64x128xf32>
    %30 = tpu.matmul %28, %29, %cst_24 {dimension_numbers = #tpu.dot_dimension_numbers<[1], [0], [0], [1], [0, 0, 1, 1], [], []>} : vector<64x32xf32>, vector<32x128xf32>, vector<64x128xf32> -> vector<64x128xf32>
    %c7 = arith.constant 7 : index
    %c0_25 = arith.constant 0 : index
    %c0_26 = arith.constant 0 : index
    %31 = vector.load %arg2[%c7, %c0_25, %c0_26] : memref<10x64x32xf32, #tpu.memory_space<vmem>>, vector<1x64x32xf32>
    %32 = vector.shape_cast %31 : vector<1x64x32xf32> to vector<64x32xf32>
    %33 = vector.extract_strided_slice %0 {offsets = [0, 896], sizes = [32, 128], strides = [1, 1]} : vector<32x1280xf32> to vector<32x128xf32>
    %cst_27 = arith.constant dense<0.000000e+00> : vector<64x128xf32>
    %34 = tpu.matmul %32, %33, %cst_27 {dimension_numbers = #tpu.dot_dimension_numbers<[1], [0], [0], [1], [0, 0, 1, 1], [], []>} : vector<64x32xf32>, vector<32x128xf32>, vector<64x128xf32> -> vector<64x128xf32>
    %c8 = arith.constant 8 : index
    %c0_28 = arith.constant 0 : index
    %c0_29 = arith.constant 0 : index
    %35 = vector.load %arg2[%c8, %c0_28, %c0_29] : memref<10x64x32xf32, #tpu.memory_space<vmem>>, vector<1x64x32xf32>
    %36 = vector.shape_cast %35 : vector<1x64x32xf32> to vector<64x32xf32>
    %37 = vector.extract_strided_slice %0 {offsets = [0, 1024], sizes = [32, 128], strides = [1, 1]} : vector<32x1280xf32> to vector<32x128xf32>
    %cst_30 = arith.constant dense<0.000000e+00> : vector<64x128xf32>
    %38 = tpu.matmul %36, %37, %cst_30 {dimension_numbers = #tpu.dot_dimension_numbers<[1], [0], [0], [1], [0, 0, 1, 1], [], []>} : vector<64x32xf32>, vector<32x128xf32>, vector<64x128xf32> -> vector<64x128xf32>
    %39 = vector.extract_strided_slice %2 {offsets = [0, 0], sizes = [32, 1280], strides = [1, 1]} : vector<160x1280xf32> to vector<32x1280xf32>
    %40 = vector.extract_strided_slice %2 {offsets = [64, 0], sizes = [32, 1280], strides = [1, 1]} : vector<160x1280xf32> to vector<32x1280xf32>
    %41 = arith.negf %40 : vector<32x1280xf32>
    %42 = math.exp %41 : vector<32x1280xf32>
    %cst_31 = arith.constant 1.000000e+00 : f32
    %43 = vector.broadcast %cst_31 : f32 to vector<32x1280xf32>
    %44 = arith.addf %43, %42 : vector<32x1280xf32>
    %45 = arith.divf %43, %44 : vector<32x1280xf32>
    %46 = vector.extract_strided_slice %6 {offsets = [0, 0], sizes = [32, 128], strides = [1, 1]} : vector<64x128xf32> to vector<32x128xf32>
    %47 = vector.extract_strided_slice %10 {offsets = [0, 0], sizes = [32, 128], strides = [1, 1]} : vector<64x128xf32> to vector<32x128xf32>
    %48 = vector.extract_strided_slice %14 {offsets = [0, 0], sizes = [32, 128], strides = [1, 1]} : vector<64x128xf32> to vector<32x128xf32>
    %49 = vector.extract_strided_slice %18 {offsets = [0, 0], sizes = [32, 128], strides = [1, 1]} : vector<64x128xf32> to vector<32x128xf32>
    %50 = vector.extract_strided_slice %22 {offsets = [0, 0], sizes = [32, 128], strides = [1, 1]} : vector<64x128xf32> to vector<32x128xf32>
    %51 = vector.extract_strided_slice %26 {offsets = [0, 0], sizes = [32, 128], strides = [1, 1]} : vector<64x128xf32> to vector<32x128xf32>
    %52 = vector.extract_strided_slice %30 {offsets = [0, 0], sizes = [32, 128], strides = [1, 1]} : vector<64x128xf32> to vector<32x128xf32>
    %53 = vector.extract_strided_slice %34 {offsets = [0, 0], sizes = [32, 128], strides = [1, 1]} : vector<64x128xf32> to vector<32x128xf32>
    %54 = vector.extract_strided_slice %38 {offsets = [0, 0], sizes = [32, 128], strides = [1, 1]} : vector<64x128xf32> to vector<32x128xf32>
    %55 = vector.extract_strided_slice %6 {offsets = [32, 0], sizes = [32, 128], strides = [1, 1]} : vector<64x128xf32> to vector<32x128xf32>
    %56 = arith.negf %55 : vector<32x128xf32>
    %57 = math.exp %56 : vector<32x128xf32>
    %cst_32 = arith.constant 1.000000e+00 : f32
    %58 = vector.broadcast %cst_32 : f32 to vector<32x128xf32>
    %59 = arith.addf %58, %57 : vector<32x128xf32>
    %60 = arith.divf %58, %59 : vector<32x128xf32>
    %61 = vector.extract_strided_slice %10 {offsets = [32, 0], sizes = [32, 128], strides = [1, 1]} : vector<64x128xf32> to vector<32x128xf32>
    %62 = arith.negf %61 : vector<32x128xf32>
    %63 = math.exp %62 : vector<32x128xf32>
    %cst_33 = arith.constant 1.000000e+00 : f32
    %64 = vector.broadcast %cst_33 : f32 to vector<32x128xf32>
    %65 = arith.addf %64, %63 : vector<32x128xf32>
    %66 = arith.divf %64, %65 : vector<32x128xf32>
    %67 = vector.extract_strided_slice %14 {offsets = [32, 0], sizes = [32, 128], strides = [1, 1]} : vector<64x128xf32> to vector<32x128xf32>
    %68 = arith.negf %67 : vector<32x128xf32>
    %69 = math.exp %68 : vector<32x128xf32>
    %cst_34 = arith.constant 1.000000e+00 : f32
    %70 = vector.broadcast %cst_34 : f32 to vector<32x128xf32>
    %71 = arith.addf %70, %69 : vector<32x128xf32>
    %72 = arith.divf %70, %71 : vector<32x128xf32>
    %73 = vector.extract_strided_slice %18 {offsets = [32, 0], sizes = [32, 128], strides = [1, 1]} : vector<64x128xf32> to vector<32x128xf32>
    %74 = arith.negf %73 : vector<32x128xf32>
    %75 = math.exp %74 : vector<32x128xf32>
    %cst_35 = arith.constant 1.000000e+00 : f32
    %76 = vector.broadcast %cst_35 : f32 to vector<32x128xf32>
    %77 = arith.addf %76, %75 : vector<32x128xf32>
    %78 = arith.divf %76, %77 : vector<32x128xf32>
    %79 = vector.extract_strided_slice %22 {offsets = [32, 0], sizes = [32, 128], strides = [1, 1]} : vector<64x128xf32> to vector<32x128xf32>
    %80 = arith.negf %79 : vector<32x128xf32>
    %81 = math.exp %80 : vector<32x128xf32>
    %cst_36 = arith.constant 1.000000e+00 : f32
    %82 = vector.broadcast %cst_36 : f32 to vector<32x128xf32>
    %83 = arith.addf %82, %81 : vector<32x128xf32>
    %84 = arith.divf %82, %83 : vector<32x128xf32>
    %85 = vector.extract_strided_slice %26 {offsets = [32, 0], sizes = [32, 128], strides = [1, 1]} : vector<64x128xf32> to vector<32x128xf32>
    %86 = arith.negf %85 : vector<32x128xf32>
    %87 = math.exp %86 : vector<32x128xf32>
    %cst_37 = arith.constant 1.000000e+00 : f32
    %88 = vector.broadcast %cst_37 : f32 to vector<32x128xf32>
    %89 = arith.addf %88, %87 : vector<32x128xf32>
    %90 = arith.divf %88, %89 : vector<32x128xf32>
    %91 = vector.extract_strided_slice %30 {offsets = [32, 0], sizes = [32, 128], strides = [1, 1]} : vector<64x128xf32> to vector<32x128xf32>
    %92 = arith.negf %91 : vector<32x128xf32>
    %93 = math.exp %92 : vector<32x128xf32>
    %cst_38 = arith.constant 1.000000e+00 : f32
    %94 = vector.broadcast %cst_38 : f32 to vector<32x128xf32>
    %95 = arith.addf %94, %93 : vector<32x128xf32>
    %96 = arith.divf %94, %95 : vector<32x128xf32>
    %97 = vector.extract_strided_slice %34 {offsets = [32, 0], sizes = [32, 128], strides = [1, 1]} : vector<64x128xf32> to vector<32x128xf32>
    %98 = arith.negf %97 : vector<32x128xf32>
    %99 = math.exp %98 : vector<32x128xf32>
    %cst_39 = arith.constant 1.000000e+00 : f32
    %100 = vector.broadcast %cst_39 : f32 to vector<32x128xf32>
    %101 = arith.addf %100, %99 : vector<32x128xf32>
    %102 = arith.divf %100, %101 : vector<32x128xf32>
    %103 = vector.extract_strided_slice %38 {offsets = [32, 0], sizes = [32, 128], strides = [1, 1]} : vector<64x128xf32> to vector<32x128xf32>
    %104 = arith.negf %103 : vector<32x128xf32>
    %105 = math.exp %104 : vector<32x128xf32>
    %cst_40 = arith.constant 1.000000e+00 : f32
    %106 = vector.broadcast %cst_40 : f32 to vector<32x128xf32>
    %107 = arith.addf %106, %105 : vector<32x128xf32>
    %108 = arith.divf %106, %107 : vector<32x128xf32>
    %109 = vector.extract_strided_slice %2 {offsets = [32, 1152], sizes = [32, 128], strides = [1, 1]} : vector<160x1280xf32> to vector<32x128xf32>
    %110 = vector.extract_strided_slice %2 {offsets = [96, 1152], sizes = [32, 128], strides = [1, 1]} : vector<160x1280xf32> to vector<32x128xf32>
    %111 = arith.negf %110 : vector<32x128xf32>
    %112 = math.exp %111 : vector<32x128xf32>
    %cst_41 = arith.constant 1.000000e+00 : f32
    %113 = vector.broadcast %cst_41 : f32 to vector<32x128xf32>
    %114 = arith.addf %113, %112 : vector<32x128xf32>
    %115 = arith.divf %113, %114 : vector<32x128xf32>
    %116 = vector.extract_strided_slice %2 {offsets = [128, 1152], sizes = [32, 128], strides = [1, 1]} : vector<160x1280xf32> to vector<32x128xf32>
    %117 = arith.negf %116 : vector<32x128xf32>
    %118 = math.exp %117 : vector<32x128xf32>
    %cst_42 = arith.constant 1.000000e+00 : f32
    %119 = vector.broadcast %cst_42 : f32 to vector<32x128xf32>
    %120 = arith.addf %119, %118 : vector<32x128xf32>
    %121 = arith.divf %119, %120 : vector<32x128xf32>
    %cst_43 = arith.constant 0.000000e+00 : f32
    %122 = vector.broadcast %cst_43 : f32 to vector<32x128xf32>
    %cst_44 = arith.constant 0.000000e+00 : f32
    %123 = vector.broadcast %cst_44 : f32 to vector<32x128xf32>
    %124 = vector.extract_strided_slice %39 {offsets = [0, 0], sizes = [32, 128], strides = [1, 1]} : vector<32x1280xf32> to vector<32x128xf32>
    %125 = vector.extract_strided_slice %45 {offsets = [0, 0], sizes = [32, 128], strides = [1, 1]} : vector<32x1280xf32> to vector<32x128xf32>
    %cst_45 = arith.constant 1.000000e+00 : f32
    %126 = vector.broadcast %cst_45 : f32 to vector<32x128xf32>
    %127 = arith.subf %126, %125 : vector<32x128xf32>
    %128 = arith.mulf %124, %127 : vector<32x128xf32>
    %129 = arith.mulf %122, %125 : vector<32x128xf32>
    %130 = arith.addf %128, %129 : vector<32x128xf32>
    %131 = arith.mulf %124, %125 : vector<32x128xf32>
    %cst_46 = arith.constant 1.000000e+00 : f32
    %132 = vector.broadcast %cst_46 : f32 to vector<32x128xf32>
    %133 = arith.subf %132, %125 : vector<32x128xf32>
    %134 = arith.mulf %123, %133 : vector<32x128xf32>
    %135 = arith.addf %131, %134 : vector<32x128xf32>
    %c0_47 = arith.constant 0 : index
    %c0_48 = arith.constant 0 : index
    %c0_49 = arith.constant 0 : index
    %136 = vector.load %arg4[%c0_47, %c0_48, %c0_49] : memref<10x64x128xf32, #tpu.memory_space<vmem>>, vector<1x32x128xf32>
    %137 = vector.shape_cast %136 : vector<1x32x128xf32> to vector<32x128xf32>
    %138 = vector.shape_cast %130 : vector<32x128xf32> to vector<1x32x128xf32>
    tpu.vector_store %arg4[%c0_47, %c0_48, %c0_49], %138 {strides = array<i32>} : memref<10x64x128xf32, #tpu.memory_space<vmem>>, vector<1x32x128xf32>,
    %c0_50 = arith.constant 0 : index
    %c32 = arith.constant 32 : index
    %c0_51 = arith.constant 0 : index
    %139 = vector.load %arg4[%c0_50, %c32, %c0_51] : memref<10x64x128xf32, #tpu.memory_space<vmem>>, vector<1x32x128xf32>
    %140 = vector.shape_cast %139 : vector<1x32x128xf32> to vector<32x128xf32>
    %141 = vector.shape_cast %135 : vector<32x128xf32> to vector<1x32x128xf32>
    tpu.vector_store %arg4[%c0_50, %c32, %c0_51], %141 {strides = array<i32>} : memref<10x64x128xf32, #tpu.memory_space<vmem>>, vector<1x32x128xf32>,
    %cst_52 = arith.constant 1.000000e+00 : f32
    %142 = vector.broadcast %cst_52 : f32 to vector<32x128xf32>
    %143 = arith.subf %142, %60 : vector<32x128xf32>
    %144 = arith.mulf %46, %143 : vector<32x128xf32>
    %145 = arith.mulf %122, %60 : vector<32x128xf32>
    %146 = arith.addf %144, %145 : vector<32x128xf32>
    %147 = arith.mulf %46, %60 : vector<32x128xf32>
    %cst_53 = arith.constant 1.000000e+00 : f32
    %148 = vector.broadcast %cst_53 : f32 to vector<32x128xf32>
    %149 = arith.subf %148, %60 : vector<32x128xf32>
    %150 = arith.mulf %123, %149 : vector<32x128xf32>
    %151 = arith.addf %147, %150 : vector<32x128xf32>
    %152 = vector.extract_strided_slice %39 {offsets = [0, 128], sizes = [32, 128], strides = [1, 1]} : vector<32x1280xf32> to vector<32x128xf32>
    %153 = vector.extract_strided_slice %45 {offsets = [0, 128], sizes = [32, 128], strides = [1, 1]} : vector<32x1280xf32> to vector<32x128xf32>
    %cst_54 = arith.constant 1.000000e+00 : f32
    %154 = vector.broadcast %cst_54 : f32 to vector<32x128xf32>
    %155 = arith.subf %154, %153 : vector<32x128xf32>
    %156 = arith.mulf %152, %155 : vector<32x128xf32>
    %157 = arith.mulf %146, %153 : vector<32x128xf32>
    %158 = arith.addf %156, %157 : vector<32x128xf32>
    %159 = arith.mulf %152, %153 : vector<32x128xf32>
    %cst_55 = arith.constant 1.000000e+00 : f32
    %160 = vector.broadcast %cst_55 : f32 to vector<32x128xf32>
    %161 = arith.subf %160, %153 : vector<32x128xf32>
    %162 = arith.mulf %151, %161 : vector<32x128xf32>
    %163 = arith.addf %159, %162 : vector<32x128xf32>
    %c1_56 = arith.constant 1 : index
    %c0_57 = arith.constant 0 : index
    %c0_58 = arith.constant 0 : index
    %164 = vector.load %arg4[%c1_56, %c0_57, %c0_58] : memref<10x64x128xf32, #tpu.memory_space<vmem>>, vector<1x32x128xf32>
    %165 = vector.shape_cast %164 : vector<1x32x128xf32> to vector<32x128xf32>
    %166 = vector.shape_cast %158 : vector<32x128xf32> to vector<1x32x128xf32>
    tpu.vector_store %arg4[%c1_56, %c0_57, %c0_58], %166 {strides = array<i32>} : memref<10x64x128xf32, #tpu.memory_space<vmem>>, vector<1x32x128xf32>,
    %c1_59 = arith.constant 1 : index
    %c32_60 = arith.constant 32 : index
    %c0_61 = arith.constant 0 : index
    %167 = vector.load %arg4[%c1_59, %c32_60, %c0_61] : memref<10x64x128xf32, #tpu.memory_space<vmem>>, vector<1x32x128xf32>
    %168 = vector.shape_cast %167 : vector<1x32x128xf32> to vector<32x128xf32>
    %169 = vector.shape_cast %163 : vector<32x128xf32> to vector<1x32x128xf32>
    tpu.vector_store %arg4[%c1_59, %c32_60, %c0_61], %169 {strides = array<i32>} : memref<10x64x128xf32, #tpu.memory_space<vmem>>, vector<1x32x128xf32>,
    %cst_62 = arith.constant 1.000000e+00 : f32
    %170 = vector.broadcast %cst_62 : f32 to vector<32x128xf32>
    %171 = arith.subf %170, %66 : vector<32x128xf32>
    %172 = arith.mulf %47, %171 : vector<32x128xf32>
    %173 = arith.mulf %146, %66 : vector<32x128xf32>
    %174 = arith.addf %172, %173 : vector<32x128xf32>
    %175 = arith.mulf %47, %66 : vector<32x128xf32>
    %cst_63 = arith.constant 1.000000e+00 : f32
    %176 = vector.broadcast %cst_63 : f32 to vector<32x128xf32>
    %177 = arith.subf %176, %66 : vector<32x128xf32>
    %178 = arith.mulf %151, %177 : vector<32x128xf32>
    %179 = arith.addf %175, %178 : vector<32x128xf32>
    %180 = vector.extract_strided_slice %39 {offsets = [0, 256], sizes = [32, 128], strides = [1, 1]} : vector<32x1280xf32> to vector<32x128xf32>
    %181 = vector.extract_strided_slice %45 {offsets = [0, 256], sizes = [32, 128], strides = [1, 1]} : vector<32x1280xf32> to vector<32x128xf32>
    %cst_64 = arith.constant 1.000000e+00 : f32
    %182 = vector.broadcast %cst_64 : f32 to vector<32x128xf32>
    %183 = arith.subf %182, %181 : vector<32x128xf32>
    %184 = arith.mulf %180, %183 : vector<32x128xf32>
    %185 = arith.mulf %174, %181 : vector<32x128xf32>
    %186 = arith.addf %184, %185 : vector<32x128xf32>
    %187 = arith.mulf %180, %181 : vector<32x128xf32>
    %cst_65 = arith.constant 1.000000e+00 : f32
    %188 = vector.broadcast %cst_65 : f32 to vector<32x128xf32>
    %189 = arith.subf %188, %181 : vector<32x128xf32>
    %190 = arith.mulf %179, %189 : vector<32x128xf32>
    %191 = arith.addf %187, %190 : vector<32x128xf32>
    %c2_66 = arith.constant 2 : index
    %c0_67 = arith.constant 0 : index
    %c0_68 = arith.constant 0 : index
    %192 = vector.load %arg4[%c2_66, %c0_67, %c0_68] : memref<10x64x128xf32, #tpu.memory_space<vmem>>, vector<1x32x128xf32>
    %193 = vector.shape_cast %192 : vector<1x32x128xf32> to vector<32x128xf32>
    %194 = vector.shape_cast %186 : vector<32x128xf32> to vector<1x32x128xf32>
    tpu.vector_store %arg4[%c2_66, %c0_67, %c0_68], %194 {strides = array<i32>} : memref<10x64x128xf32, #tpu.memory_space<vmem>>, vector<1x32x128xf32>,
    %c2_69 = arith.constant 2 : index
    %c32_70 = arith.constant 32 : index
    %c0_71 = arith.constant 0 : index
    %195 = vector.load %arg4[%c2_69, %c32_70, %c0_71] : memref<10x64x128xf32, #tpu.memory_space<vmem>>, vector<1x32x128xf32>
    %196 = vector.shape_cast %195 : vector<1x32x128xf32> to vector<32x128xf32>
    %197 = vector.shape_cast %191 : vector<32x128xf32> to vector<1x32x128xf32>
    tpu.vector_store %arg4[%c2_69, %c32_70, %c0_71], %197 {strides = array<i32>} : memref<10x64x128xf32, #tpu.memory_space<vmem>>, vector<1x32x128xf32>,
    %cst_72 = arith.constant 1.000000e+00 : f32
    %198 = vector.broadcast %cst_72 : f32 to vector<32x128xf32>
    %199 = arith.subf %198, %72 : vector<32x128xf32>
    %200 = arith.mulf %48, %199 : vector<32x128xf32>
    %201 = arith.mulf %174, %72 : vector<32x128xf32>
    %202 = arith.addf %200, %201 : vector<32x128xf32>
    %203 = arith.mulf %48, %72 : vector<32x128xf32>
    %cst_73 = arith.constant 1.000000e+00 : f32
    %204 = vector.broadcast %cst_73 : f32 to vector<32x128xf32>
    %205 = arith.subf %204, %72 : vector<32x128xf32>
    %206 = arith.mulf %179, %205 : vector<32x128xf32>
    %207 = arith.addf %203, %206 : vector<32x128xf32>
    %208 = vector.extract_strided_slice %39 {offsets = [0, 384], sizes = [32, 128], strides = [1, 1]} : vector<32x1280xf32> to vector<32x128xf32>
    %209 = vector.extract_strided_slice %45 {offsets = [0, 384], sizes = [32, 128], strides = [1, 1]} : vector<32x1280xf32> to vector<32x128xf32>
    %cst_74 = arith.constant 1.000000e+00 : f32
    %210 = vector.broadcast %cst_74 : f32 to vector<32x128xf32>
    %211 = arith.subf %210, %209 : vector<32x128xf32>
    %212 = arith.mulf %208, %211 : vector<32x128xf32>
    %213 = arith.mulf %202, %209 : vector<32x128xf32>
    %214 = arith.addf %212, %213 : vector<32x128xf32>
    %215 = arith.mulf %208, %209 : vector<32x128xf32>
    %cst_75 = arith.constant 1.000000e+00 : f32
    %216 = vector.broadcast %cst_75 : f32 to vector<32x128xf32>
    %217 = arith.subf %216, %209 : vector<32x128xf32>
    %218 = arith.mulf %207, %217 : vector<32x128xf32>
    %219 = arith.addf %215, %218 : vector<32x128xf32>
    %c3_76 = arith.constant 3 : index
    %c0_77 = arith.constant 0 : index
    %c0_78 = arith.constant 0 : index
    %220 = vector.load %arg4[%c3_76, %c0_77, %c0_78] : memref<10x64x128xf32, #tpu.memory_space<vmem>>, vector<1x32x128xf32>
    %221 = vector.shape_cast %220 : vector<1x32x128xf32> to vector<32x128xf32>
    %222 = vector.shape_cast %214 : vector<32x128xf32> to vector<1x32x128xf32>
    tpu.vector_store %arg4[%c3_76, %c0_77, %c0_78], %222 {strides = array<i32>} : memref<10x64x128xf32, #tpu.memory_space<vmem>>, vector<1x32x128xf32>,
    %c3_79 = arith.constant 3 : index
    %c32_80 = arith.constant 32 : index
    %c0_81 = arith.constant 0 : index
    %223 = vector.load %arg4[%c3_79, %c32_80, %c0_81] : memref<10x64x128xf32, #tpu.memory_space<vmem>>, vector<1x32x128xf32>
    %224 = vector.shape_cast %223 : vector<1x32x128xf32> to vector<32x128xf32>
    %225 = vector.shape_cast %219 : vector<32x128xf32> to vector<1x32x128xf32>
    tpu.vector_store %arg4[%c3_79, %c32_80, %c0_81], %225 {strides = array<i32>} : memref<10x64x128xf32, #tpu.memory_space<vmem>>, vector<1x32x128xf32>,
    %cst_82 = arith.constant 1.000000e+00 : f32
    %226 = vector.broadcast %cst_82 : f32 to vector<32x128xf32>
    %227 = arith.subf %226, %78 : vector<32x128xf32>
    %228 = arith.mulf %49, %227 : vector<32x128xf32>
    %229 = arith.mulf %202, %78 : vector<32x128xf32>
    %230 = arith.addf %228, %229 : vector<32x128xf32>
    %231 = arith.mulf %49, %78 : vector<32x128xf32>
    %cst_83 = arith.constant 1.000000e+00 : f32
    %232 = vector.broadcast %cst_83 : f32 to vector<32x128xf32>
    %233 = arith.subf %232, %78 : vector<32x128xf32>
    %234 = arith.mulf %207, %233 : vector<32x128xf32>
    %235 = arith.addf %231, %234 : vector<32x128xf32>
    %236 = vector.extract_strided_slice %39 {offsets = [0, 512], sizes = [32, 128], strides = [1, 1]} : vector<32x1280xf32> to vector<32x128xf32>
    %237 = vector.extract_strided_slice %45 {offsets = [0, 512], sizes = [32, 128], strides = [1, 1]} : vector<32x1280xf32> to vector<32x128xf32>
    %cst_84 = arith.constant 1.000000e+00 : f32
    %238 = vector.broadcast %cst_84 : f32 to vector<32x128xf32>
    %239 = arith.subf %238, %237 : vector<32x128xf32>
    %240 = arith.mulf %236, %239 : vector<32x128xf32>
    %241 = arith.mulf %230, %237 : vector<32x128xf32>
    %242 = arith.addf %240, %241 : vector<32x128xf32>
    %243 = arith.mulf %236, %237 : vector<32x128xf32>
    %cst_85 = arith.constant 1.000000e+00 : f32
    %244 = vector.broadcast %cst_85 : f32 to vector<32x128xf32>
    %245 = arith.subf %244, %237 : vector<32x128xf32>
    %246 = arith.mulf %235, %245 : vector<32x128xf32>
    %247 = arith.addf %243, %246 : vector<32x128xf32>
    %c4_86 = arith.constant 4 : index
    %c0_87 = arith.constant 0 : index
    %c0_88 = arith.constant 0 : index
    %248 = vector.load %arg4[%c4_86, %c0_87, %c0_88] : memref<10x64x128xf32, #tpu.memory_space<vmem>>, vector<1x32x128xf32>
    %249 = vector.shape_cast %248 : vector<1x32x128xf32> to vector<32x128xf32>
    %250 = vector.shape_cast %242 : vector<32x128xf32> to vector<1x32x128xf32>
    tpu.vector_store %arg4[%c4_86, %c0_87, %c0_88], %250 {strides = array<i32>} : memref<10x64x128xf32, #tpu.memory_space<vmem>>, vector<1x32x128xf32>,
    %c4_89 = arith.constant 4 : index
    %c32_90 = arith.constant 32 : index
    %c0_91 = arith.constant 0 : index
    %251 = vector.load %arg4[%c4_89, %c32_90, %c0_91] : memref<10x64x128xf32, #tpu.memory_space<vmem>>, vector<1x32x128xf32>
    %252 = vector.shape_cast %251 : vector<1x32x128xf32> to vector<32x128xf32>
    %253 = vector.shape_cast %247 : vector<32x128xf32> to vector<1x32x128xf32>
    tpu.vector_store %arg4[%c4_89, %c32_90, %c0_91], %253 {strides = array<i32>} : memref<10x64x128xf32, #tpu.memory_space<vmem>>, vector<1x32x128xf32>,
    %cst_92 = arith.constant 1.000000e+00 : f32
    %254 = vector.broadcast %cst_92 : f32 to vector<32x128xf32>
    %255 = arith.subf %254, %84 : vector<32x128xf32>
    %256 = arith.mulf %50, %255 : vector<32x128xf32>
    %257 = arith.mulf %230, %84 : vector<32x128xf32>
    %258 = arith.addf %256, %257 : vector<32x128xf32>
    %259 = arith.mulf %50, %84 : vector<32x128xf32>
    %cst_93 = arith.constant 1.000000e+00 : f32
    %260 = vector.broadcast %cst_93 : f32 to vector<32x128xf32>
    %261 = arith.subf %260, %84 : vector<32x128xf32>
    %262 = arith.mulf %235, %261 : vector<32x128xf32>
    %263 = arith.addf %259, %262 : vector<32x128xf32>
    %264 = vector.extract_strided_slice %39 {offsets = [0, 640], sizes = [32, 128], strides = [1, 1]} : vector<32x1280xf32> to vector<32x128xf32>
    %265 = vector.extract_strided_slice %45 {offsets = [0, 640], sizes = [32, 128], strides = [1, 1]} : vector<32x1280xf32> to vector<32x128xf32>
    %cst_94 = arith.constant 1.000000e+00 : f32
    %266 = vector.broadcast %cst_94 : f32 to vector<32x128xf32>
    %267 = arith.subf %266, %265 : vector<32x128xf32>
    %268 = arith.mulf %264, %267 : vector<32x128xf32>
    %269 = arith.mulf %258, %265 : vector<32x128xf32>
    %270 = arith.addf %268, %269 : vector<32x128xf32>
    %271 = arith.mulf %264, %265 : vector<32x128xf32>
    %cst_95 = arith.constant 1.000000e+00 : f32
    %272 = vector.broadcast %cst_95 : f32 to vector<32x128xf32>
    %273 = arith.subf %272, %265 : vector<32x128xf32>
    %274 = arith.mulf %263, %273 : vector<32x128xf32>
    %275 = arith.addf %271, %274 : vector<32x128xf32>
    %c5_96 = arith.constant 5 : index
    %c0_97 = arith.constant 0 : index
    %c0_98 = arith.constant 0 : index
    %276 = vector.load %arg4[%c5_96, %c0_97, %c0_98] : memref<10x64x128xf32, #tpu.memory_space<vmem>>, vector<1x32x128xf32>
    %277 = vector.shape_cast %276 : vector<1x32x128xf32> to vector<32x128xf32>
    %278 = vector.shape_cast %270 : vector<32x128xf32> to vector<1x32x128xf32>
    tpu.vector_store %arg4[%c5_96, %c0_97, %c0_98], %278 {strides = array<i32>} : memref<10x64x128xf32, #tpu.memory_space<vmem>>, vector<1x32x128xf32>,
    %c5_99 = arith.constant 5 : index
    %c32_100 = arith.constant 32 : index
    %c0_101 = arith.constant 0 : index
    %279 = vector.load %arg4[%c5_99, %c32_100, %c0_101] : memref<10x64x128xf32, #tpu.memory_space<vmem>>, vector<1x32x128xf32>
    %280 = vector.shape_cast %279 : vector<1x32x128xf32> to vector<32x128xf32>
    %281 = vector.shape_cast %275 : vector<32x128xf32> to vector<1x32x128xf32>
    tpu.vector_store %arg4[%c5_99, %c32_100, %c0_101], %281 {strides = array<i32>} : memref<10x64x128xf32, #tpu.memory_space<vmem>>, vector<1x32x128xf32>,
    %cst_102 = arith.constant 1.000000e+00 : f32
    %282 = vector.broadcast %cst_102 : f32 to vector<32x128xf32>
    %283 = arith.subf %282, %90 : vector<32x128xf32>
    %284 = arith.mulf %51, %283 : vector<32x128xf32>
    %285 = arith.mulf %258, %90 : vector<32x128xf32>
    %286 = arith.addf %284, %285 : vector<32x128xf32>
    %287 = arith.mulf %51, %90 : vector<32x128xf32>
    %cst_103 = arith.constant 1.000000e+00 : f32
    %288 = vector.broadcast %cst_103 : f32 to vector<32x128xf32>
    %289 = arith.subf %288, %90 : vector<32x128xf32>
    %290 = arith.mulf %263, %289 : vector<32x128xf32>
    %291 = arith.addf %287, %290 : vector<32x128xf32>
    %292 = vector.extract_strided_slice %39 {offsets = [0, 768], sizes = [32, 128], strides = [1, 1]} : vector<32x1280xf32> to vector<32x128xf32>
    %293 = vector.extract_strided_slice %45 {offsets = [0, 768], sizes = [32, 128], strides = [1, 1]} : vector<32x1280xf32> to vector<32x128xf32>
    %cst_104 = arith.constant 1.000000e+00 : f32
    %294 = vector.broadcast %cst_104 : f32 to vector<32x128xf32>
    %295 = arith.subf %294, %293 : vector<32x128xf32>
    %296 = arith.mulf %292, %295 : vector<32x128xf32>
    %297 = arith.mulf %286, %293 : vector<32x128xf32>
    %298 = arith.addf %296, %297 : vector<32x128xf32>
    %299 = arith.mulf %292, %293 : vector<32x128xf32>
    %cst_105 = arith.constant 1.000000e+00 : f32
    %300 = vector.broadcast %cst_105 : f32 to vector<32x128xf32>
    %301 = arith.subf %300, %293 : vector<32x128xf32>
    %302 = arith.mulf %291, %301 : vector<32x128xf32>
    %303 = arith.addf %299, %302 : vector<32x128xf32>
    %c6_106 = arith.constant 6 : index
    %c0_107 = arith.constant 0 : index
    %c0_108 = arith.constant 0 : index
    %304 = vector.load %arg4[%c6_106, %c0_107, %c0_108] : memref<10x64x128xf32, #tpu.memory_space<vmem>>, vector<1x32x128xf32>
    %305 = vector.shape_cast %304 : vector<1x32x128xf32> to vector<32x128xf32>
    %306 = vector.shape_cast %298 : vector<32x128xf32> to vector<1x32x128xf32>
    tpu.vector_store %arg4[%c6_106, %c0_107, %c0_108], %306 {strides = array<i32>} : memref<10x64x128xf32, #tpu.memory_space<vmem>>, vector<1x32x128xf32>,
    %c6_109 = arith.constant 6 : index
    %c32_110 = arith.constant 32 : index
    %c0_111 = arith.constant 0 : index
    %307 = vector.load %arg4[%c6_109, %c32_110, %c0_111] : memref<10x64x128xf32, #tpu.memory_space<vmem>>, vector<1x32x128xf32>
    %308 = vector.shape_cast %307 : vector<1x32x128xf32> to vector<32x128xf32>
    %309 = vector.shape_cast %303 : vector<32x128xf32> to vector<1x32x128xf32>
    tpu.vector_store %arg4[%c6_109, %c32_110, %c0_111], %309 {strides = array<i32>} : memref<10x64x128xf32, #tpu.memory_space<vmem>>, vector<1x32x128xf32>,
    %cst_112 = arith.constant 1.000000e+00 : f32
    %310 = vector.broadcast %cst_112 : f32 to vector<32x128xf32>
    %311 = arith.subf %310, %96 : vector<32x128xf32>
    %312 = arith.mulf %52, %311 : vector<32x128xf32>
    %313 = arith.mulf %286, %96 : vector<32x128xf32>
    %314 = arith.addf %312, %313 : vector<32x128xf32>
    %315 = arith.mulf %52, %96 : vector<32x128xf32>
    %cst_113 = arith.constant 1.000000e+00 : f32
    %316 = vector.broadcast %cst_113 : f32 to vector<32x128xf32>
    %317 = arith.subf %316, %96 : vector<32x128xf32>
    %318 = arith.mulf %291, %317 : vector<32x128xf32>
    %319 = arith.addf %315, %318 : vector<32x128xf32>
    %320 = vector.extract_strided_slice %39 {offsets = [0, 896], sizes = [32, 128], strides = [1, 1]} : vector<32x1280xf32> to vector<32x128xf32>
    %321 = vector.extract_strided_slice %45 {offsets = [0, 896], sizes = [32, 128], strides = [1, 1]} : vector<32x1280xf32> to vector<32x128xf32>
    %cst_114 = arith.constant 1.000000e+00 : f32
    %322 = vector.broadcast %cst_114 : f32 to vector<32x128xf32>
    %323 = arith.subf %322, %321 : vector<32x128xf32>
    %324 = arith.mulf %320, %323 : vector<32x128xf32>
    %325 = arith.mulf %314, %321 : vector<32x128xf32>
    %326 = arith.addf %324, %325 : vector<32x128xf32>
    %327 = arith.mulf %320, %321 : vector<32x128xf32>
    %cst_115 = arith.constant 1.000000e+00 : f32
    %328 = vector.broadcast %cst_115 : f32 to vector<32x128xf32>
    %329 = arith.subf %328, %321 : vector<32x128xf32>
    %330 = arith.mulf %319, %329 : vector<32x128xf32>
    %331 = arith.addf %327, %330 : vector<32x128xf32>
    %c7_116 = arith.constant 7 : index
    %c0_117 = arith.constant 0 : index
    %c0_118 = arith.constant 0 : index
    %332 = vector.load %arg4[%c7_116, %c0_117, %c0_118] : memref<10x64x128xf32, #tpu.memory_space<vmem>>, vector<1x32x128xf32>
    %333 = vector.shape_cast %332 : vector<1x32x128xf32> to vector<32x128xf32>
    %334 = vector.shape_cast %326 : vector<32x128xf32> to vector<1x32x128xf32>
    tpu.vector_store %arg4[%c7_116, %c0_117, %c0_118], %334 {strides = array<i32>} : memref<10x64x128xf32, #tpu.memory_space<vmem>>, vector<1x32x128xf32>,
    %c7_119 = arith.constant 7 : index
    %c32_120 = arith.constant 32 : index
    %c0_121 = arith.constant 0 : index
    %335 = vector.load %arg4[%c7_119, %c32_120, %c0_121] : memref<10x64x128xf32, #tpu.memory_space<vmem>>, vector<1x32x128xf32>
    %336 = vector.shape_cast %335 : vector<1x32x128xf32> to vector<32x128xf32>
    %337 = vector.shape_cast %331 : vector<32x128xf32> to vector<1x32x128xf32>
    tpu.vector_store %arg4[%c7_119, %c32_120, %c0_121], %337 {strides = array<i32>} : memref<10x64x128xf32, #tpu.memory_space<vmem>>, vector<1x32x128xf32>,
    %cst_122 = arith.constant 1.000000e+00 : f32
    %338 = vector.broadcast %cst_122 : f32 to vector<32x128xf32>
    %339 = arith.subf %338, %102 : vector<32x128xf32>
    %340 = arith.mulf %53, %339 : vector<32x128xf32>
    %341 = arith.mulf %314, %102 : vector<32x128xf32>
    %342 = arith.addf %340, %341 : vector<32x128xf32>
    %343 = arith.mulf %53, %102 : vector<32x128xf32>
    %cst_123 = arith.constant 1.000000e+00 : f32
    %344 = vector.broadcast %cst_123 : f32 to vector<32x128xf32>
    %345 = arith.subf %344, %102 : vector<32x128xf32>
    %346 = arith.mulf %319, %345 : vector<32x128xf32>
    %347 = arith.addf %343, %346 : vector<32x128xf32>
    %348 = vector.extract_strided_slice %39 {offsets = [0, 1024], sizes = [32, 128], strides = [1, 1]} : vector<32x1280xf32> to vector<32x128xf32>
    %349 = vector.extract_strided_slice %45 {offsets = [0, 1024], sizes = [32, 128], strides = [1, 1]} : vector<32x1280xf32> to vector<32x128xf32>
    %cst_124 = arith.constant 1.000000e+00 : f32
    %350 = vector.broadcast %cst_124 : f32 to vector<32x128xf32>
    %351 = arith.subf %350, %349 : vector<32x128xf32>
    %352 = arith.mulf %348, %351 : vector<32x128xf32>
    %353 = arith.mulf %342, %349 : vector<32x128xf32>
    %354 = arith.addf %352, %353 : vector<32x128xf32>
    %355 = arith.mulf %348, %349 : vector<32x128xf32>
    %cst_125 = arith.constant 1.000000e+00 : f32
    %356 = vector.broadcast %cst_125 : f32 to vector<32x128xf32>
    %357 = arith.subf %356, %349 : vector<32x128xf32>
    %358 = arith.mulf %347, %357 : vector<32x128xf32>
    %359 = arith.addf %355, %358 : vector<32x128xf32>
    %c8_126 = arith.constant 8 : index
    %c0_127 = arith.constant 0 : index
    %c0_128 = arith.constant 0 : index
    %360 = vector.load %arg4[%c8_126, %c0_127, %c0_128] : memref<10x64x128xf32, #tpu.memory_space<vmem>>, vector<1x32x128xf32>
    %361 = vector.shape_cast %360 : vector<1x32x128xf32> to vector<32x128xf32>
    %362 = vector.shape_cast %354 : vector<32x128xf32> to vector<1x32x128xf32>
    tpu.vector_store %arg4[%c8_126, %c0_127, %c0_128], %362 {strides = array<i32>} : memref<10x64x128xf32, #tpu.memory_space<vmem>>, vector<1x32x128xf32>,
    %c8_129 = arith.constant 8 : index
    %c32_130 = arith.constant 32 : index
    %c0_131 = arith.constant 0 : index
    %363 = vector.load %arg4[%c8_129, %c32_130, %c0_131] : memref<10x64x128xf32, #tpu.memory_space<vmem>>, vector<1x32x128xf32>
    %364 = vector.shape_cast %363 : vector<1x32x128xf32> to vector<32x128xf32>
    %365 = vector.shape_cast %359 : vector<32x128xf32> to vector<1x32x128xf32>
    tpu.vector_store %arg4[%c8_129, %c32_130, %c0_131], %365 {strides = array<i32>} : memref<10x64x128xf32, #tpu.memory_space<vmem>>, vector<1x32x128xf32>,
    %cst_132 = arith.constant 1.000000e+00 : f32
    %366 = vector.broadcast %cst_132 : f32 to vector<32x128xf32>
    %367 = arith.subf %366, %108 : vector<32x128xf32>
    %368 = arith.mulf %54, %367 : vector<32x128xf32>
    %369 = arith.mulf %342, %108 : vector<32x128xf32>
    %370 = arith.addf %368, %369 : vector<32x128xf32>
    %371 = arith.mulf %54, %108 : vector<32x128xf32>
    %cst_133 = arith.constant 1.000000e+00 : f32
    %372 = vector.broadcast %cst_133 : f32 to vector<32x128xf32>
    %373 = arith.subf %372, %108 : vector<32x128xf32>
    %374 = arith.mulf %347, %373 : vector<32x128xf32>
    %375 = arith.addf %371, %374 : vector<32x128xf32>
    %376 = vector.extract_strided_slice %39 {offsets = [0, 1152], sizes = [32, 128], strides = [1, 1]} : vector<32x1280xf32> to vector<32x128xf32>
    %377 = vector.extract_strided_slice %45 {offsets = [0, 1152], sizes = [32, 128], strides = [1, 1]} : vector<32x1280xf32> to vector<32x128xf32>
    %cst_134 = arith.constant 1.000000e+00 : f32
    %378 = vector.broadcast %cst_134 : f32 to vector<32x128xf32>
    %379 = arith.subf %378, %377 : vector<32x128xf32>
    %380 = arith.mulf %376, %379 : vector<32x128xf32>
    %381 = arith.mulf %370, %377 : vector<32x128xf32>
    %382 = arith.addf %380, %381 : vector<32x128xf32>
    %383 = arith.mulf %376, %377 : vector<32x128xf32>
    %cst_135 = arith.constant 1.000000e+00 : f32
    %384 = vector.broadcast %cst_135 : f32 to vector<32x128xf32>
    %385 = arith.subf %384, %377 : vector<32x128xf32>
    %386 = arith.mulf %375, %385 : vector<32x128xf32>
    %387 = arith.addf %383, %386 : vector<32x128xf32>
    %c9 = arith.constant 9 : index
    %c0_136 = arith.constant 0 : index
    %c0_137 = arith.constant 0 : index
    %388 = vector.load %arg4[%c9, %c0_136, %c0_137] : memref<10x64x128xf32, #tpu.memory_space<vmem>>, vector<1x32x128xf32>
    %389 = vector.shape_cast %388 : vector<1x32x128xf32> to vector<32x128xf32>
    %390 = vector.shape_cast %382 : vector<32x128xf32> to vector<1x32x128xf32>
    tpu.vector_store %arg4[%c9, %c0_136, %c0_137], %390 {strides = array<i32>} : memref<10x64x128xf32, #tpu.memory_space<vmem>>, vector<1x32x128xf32>,
    %c9_138 = arith.constant 9 : index
    %c32_139 = arith.constant 32 : index
    %c0_140 = arith.constant 0 : index
    %391 = vector.load %arg4[%c9_138, %c32_139, %c0_140] : memref<10x64x128xf32, #tpu.memory_space<vmem>>, vector<1x32x128xf32>
    %392 = vector.shape_cast %391 : vector<1x32x128xf32> to vector<32x128xf32>
    %393 = vector.shape_cast %387 : vector<32x128xf32> to vector<1x32x128xf32>
    tpu.vector_store %arg4[%c9_138, %c32_139, %c0_140], %393 {strides = array<i32>} : memref<10x64x128xf32, #tpu.memory_space<vmem>>, vector<1x32x128xf32>,
    %394 = math.tanh %382 : vector<32x128xf32>
    %395 = arith.mulf %394, %115 : vector<32x128xf32>
    %396 = math.tanh %387 : vector<32x128xf32>
    %397 = arith.mulf %396, %121 : vector<32x128xf32>
    %398 = arith.addf %395, %397 : vector<32x128xf32>
    %cst_141 = arith.constant 2.000000e+00 : f32
    %399 = vector.broadcast %cst_141 : f32 to vector<32x128xf32>
    %400 = arith.subf %399, %115 : vector<32x128xf32>
    %401 = arith.subf %400, %121 : vector<32x128xf32>
    %402 = arith.mulf %401, %109 : vector<32x128xf32>
    %403 = arith.addf %398, %402 : vector<32x128xf32>
    %c0_142 = arith.constant 0 : index
    %c0_143 = arith.constant 0 : index
    %404 = vector.load %arg3[%c0_142, %c0_143] : memref<32x128xf32, #tpu.memory_space<vmem>>, vector<32x128xf32>
    tpu.vector_store %arg3[%c0_142, %c0_143], %403 {strides = array<i32>} : memref<32x128xf32, #tpu.memory_space<vmem>>, vector<32x128xf32>,
    return
  }
}

</mosaic_0001>

<llo_original>
// kernel: tpu_custom_call.1
$region0: #{tpu_custom_call.1}
  #allocation0 [shape = 'u32[]', space=smem, size = 0x4, offset = 0x4, fixed_abs, tag = 'smem constant byte address 0x4 - core index']
  #allocation1 [shape = 'u32[144,128]{1,0:T(1,128)}', space=vmem, size = 0x12000, scoped, tag = 'internal scratch']
  %s0 = inlined_call_operand.vmem [shape: f32[32,1280], index: 0, kind: input, shape index: {}]
  %s1 = inlined_call_operand.vmem [shape: f32[160,32], index: 1, kind: input, shape index: {}]
  %s2 = inlined_call_operand.vmem [shape: f32[10,64,32], index: 2, kind: input, shape index: {}]
  %s3 = inlined_call_operand.hbm [shape: f32[32,128], index: 3, kind: output, shape index: {0}]
  %s4 = inlined_call_operand.hbm [shape: f32[10,64,128], index: 4, kind: output, shape index: {1}]
  %5 = xla_tuple %s3, %s4
  %s6 = sld [smem:[#allocation0]]
  $region30: #{tpu_custom_call.1} parent=0
    _
  %s8 = ssub.s32 1, %s6
  %s9 = scalar_select 0, %s8, %s6
  $region1: #{tpu_custom_call.1} parent=0
    #allocation2 [shape = 'u8[16384]{0}', space=vmem, size = 0x4000, scoped, tag = 'output window, operand 0, single buffered']
    #allocation3 [shape = 's32[1]{0}', space=sflag, size = 0x4, scoped, tag = 'scoped memory for tpu_custom_call.1']
    #allocation4 [shape = 'u8[327680]{0}', space=vmem, size = 0x50000, scoped, tag = 'output window, operand 1, single buffered']
    #allocation5 [shape = 's32[1]{0}', space=sflag, size = 0x4, scoped, tag = 'scoped memory for tpu_custom_call.1']
    %10 = vsyncpa [#allocation3], 0
    %11 = vsyncpa [#allocation5], 0
    // Predicated region
    $region2: #{tpu_custom_call.1} parent=1 // pred_check
      _
    $region3: #{tpu_custom_call.1} parent=1 // pred_check_branch
      %13 = sbr.rel (0) target = $region5
    $region4: #{tpu_custom_call.1} parent=1 // pred_region
      _
    $region5: #{tpu_custom_call.1} parent=1 // pred_fallthru
      _
    // Predicated region
    $region6: #{tpu_custom_call.1} parent=1 // pred_check
      _
    $region7: #{tpu_custom_call.1} parent=1 // pred_check_branch
      %15 = sbr.rel (0) target = $region9
    $region8: #{tpu_custom_call.1} parent=1 // pred_region
      _
    $region9: #{tpu_custom_call.1} parent=1 // pred_fallthru
      _
    // Predicated region
    $region10: #{tpu_custom_call.1} parent=1 // pred_check
      _
    $region11: #{tpu_custom_call.1} parent=1 // pred_check_branch
      %17 = sbr.rel (0) target = $region13
    $region12: #{tpu_custom_call.1} parent=1 // pred_region
      _
    $region13: #{tpu_custom_call.1} parent=1 // pred_fallthru
      _
    %v18 = vld [vmem:[%s0] sm:$0xff]
    %v19 = vld [vmem:[%s0 + $0x8] sm:$0xff]
    %v20 = vld [vmem:[%s0 + $0x10] sm:$0xff]
    %v21 = vld [vmem:[%s0 + $0x18] sm:$0xff]
    %v22 = vld [vmem:[%s0 + $0x20] sm:$0xff]
    %v23 = vld [vmem:[%s0 + $0x28] sm:$0xff]
    %v24 = vld [vmem:[%s0 + $0x30] sm:$0xff]
    %v25 = vld [vmem:[%s0 + $0x38] sm:$0xff]
    %v26 = vld [vmem:[%s0 + $0x40] sm:$0xff]
    %v27 = vld [vmem:[%s0 + $0x48] sm:$0xff]
    %v28 = vld [vmem:[%s0 + $0x50] sm:$0xff]
    %v29 = vld [vmem:[%s0 + $0x58] sm:$0xff]
    %v30 = vld [vmem:[%s0 + $0x60] sm:$0xff]
    %v31 = vld [vmem:[%s0 + $0x68] sm:$0xff]
    %v32 = vld [vmem:[%s0 + $0x70] sm:$0xff]
    %v33 = vld [vmem:[%s0 + $0x78] sm:$0xff]
    %v34 = vld [vmem:[%s0 + $0x80] sm:$0xff]
    %v35 = vld [vmem:[%s0 + $0x88] sm:$0xff]
    %v36 = vld [vmem:[%s0 + $0x90] sm:$0xff]
    %v37 = vld [vmem:[%s0 + $0x98] sm:$0xff]
    %v38 = vld [vmem:[%s0 + $0xa0] sm:$0xff]
    %v39 = vld [vmem:[%s0 + $0xa8] sm:$0xff]
    %v40 = vld [vmem:[%s0 + $0xb0] sm:$0xff]
    %v41 = vld [vmem:[%s0 + $0xb8] sm:$0xff]
    %v42 = vld [vmem:[%s0 + $0xc0] sm:$0xff]
    %v43 = vld [vmem:[%s0 + $0xc8] sm:$0xff]
    %v44 = vld [vmem:[%s0 + $0xd0] sm:$0xff]
    %v45 = vld [vmem:[%s0 + $0xd8] sm:$0xff]
    %v46 = vld [vmem:[%s0 + $0xe0] sm:$0xff]
    %v47 = vld [vmem:[%s0 + $0xe8] sm:$0xff]
    %v48 = vld [vmem:[%s0 + $0xf0] sm:$0xff]
    %v49 = vld [vmem:[%s0 + $0xf8] sm:$0xff]
    %v50 = vld [vmem:[%s0 + $0x100] sm:$0xff]
    %v51 = vld [vmem:[%s0 + $0x108] sm:$0xff]
    %v52 = vld [vmem:[%s0 + $0x110] sm:$0xff]
    %v53 = vld [vmem:[%s0 + $0x118] sm:$0xff]
    %v54 = vld [vmem:[%s0 + $0x120] sm:$0xff]
    %v55 = vld [vmem:[%s0 + $0x128] sm:$0xff]
    %v56 = vld [vmem:[%s0 + $0x130] sm:$0xff]
    %v57 = vld [vmem:[%s0 + $0x138] sm:$0xff]
    %v58 = vld [vmem:[%s1] sm:$0xff]
    %v59 = vld [vmem:[%s1 + $0x8] sm:$0xff]
    %v60 = vld [vmem:[%s1 + $0x10] sm:$0xff]
    %v61 = vld [vmem:[%s1 + $0x18] sm:$0xff]
    %v62 = vld [vmem:[%s1 + $0x20] sm:$0xff]
    %v63 = vld [vmem:[%s1 + $0x28] sm:$0xff]
    %v64 = vld [vmem:[%s1 + $0x30] sm:$0xff]
    %v65 = vld [vmem:[%s1 + $0x38] sm:$0xff]
    %v66 = vld [vmem:[%s1 + $0x40] sm:$0xff]
    %v67 = vld [vmem:[%s1 + $0x48] sm:$0xff]
    %v68 = vld [vmem:[%s1 + $0x50] sm:$0xff]
    %v69 = vld [vmem:[%s1 + $0x58] sm:$0xff]
    %v70 = vld [vmem:[%s1 + $0x60] sm:$0xff]
    %v71 = vld [vmem:[%s1 + $0x68] sm:$0xff]
    %v72 = vld [vmem:[%s1 + $0x70] sm:$0xff]
    %v73 = vld [vmem:[%s1 + $0x78] sm:$0xff]
    %v74 = vld [vmem:[%s1 + $0x80] sm:$0xff]
    %v75 = vld [vmem:[%s1 + $0x88] sm:$0xff]
    %v76 = vld [vmem:[%s1 + $0x90] sm:$0xff]
    %v77 = vld [vmem:[%s1 + $0x98] sm:$0xff]
    %vm78 = vcmask 261120
    %v80 = vsel %vm78, %v58, 0
    %v83 = vsel %vm78, %v59, 0
    %v86 = vsel %vm78, %v60, 0
    %v89 = vsel %vm78, %v61, 0
    %v92 = vsel %vm78, %v62, 0
    %v95 = vsel %vm78, %v63, 0
    %v98 = vsel %vm78, %v64, 0
    %v101 = vsel %vm78, %v65, 0
    %v104 = vsel %vm78, %v66, 0
    %v107 = vsel %vm78, %v67, 0
    %v110 = vsel %vm78, %v68, 0
    %v113 = vsel %vm78, %v69, 0
    %v116 = vsel %vm78, %v70, 0
    %v119 = vsel %vm78, %v71, 0
    %v122 = vsel %vm78, %v72, 0
    %v125 = vsel %vm78, %v73, 0
    %v128 = vsel %vm78, %v74, 0
    %v131 = vsel %vm78, %v75, 0
    %v134 = vsel %vm78, %v76, 0
    %v137 = vsel %vm78, %v77, 0
    %139 = vmatprep.subr.mxu0 0.0
    %140 = vmatpush1.msra.mxu0 0.0
    %141 = vmatprep.subr.mxu0 0.0
    %142 = vmatpush1.msra.mxu0 0.0
    %143 = vmatprep.subr.mxu0 0.0
    %144 = vmatpush1.msra.mxu0 0.0
    %145 = vmatprep.subr.mxu0 0.0
    %146 = vmatpush1.msra.mxu0 0.0
    %147 = vmatprep.subr.mxu0 0.0
    %148 = vmatpush1.msra.mxu0 0.0
    %149 = vmatprep.subr.mxu0 0.0
    %150 = vmatpush1.msra.mxu0 0.0
    %151 = vmatprep.subr.mxu0 0.0
    %152 = vmatpush1.msra.mxu0 0.0
    %153 = vmatprep.subr.mxu0 0.0
    %154 = vmatpush1.msra.mxu0 0.0
    %155 = vmatprep.subr.mxu0 0.0
    %156 = vmatpush1.msra.mxu0 0.0
    %157 = vmatprep.subr.mxu0 0.0
    %158 = vmatpush1.msra.mxu0 0.0
    %159 = vmatprep.subr.mxu0 0.0
    %160 = vmatpush1.msra.mxu0 0.0
    %161 = vmatprep.subr.mxu0 0.0
    %162 = vmatpush1.msra.mxu0 0.0
    %163 = vmatprep.subr.mxu0 %v49
    %164 = vmatpush1.msra.mxu0 %v48
    %165 = vmatprep.subr.mxu0 %v39
    %166 = vmatpush1.msra.mxu0 %v38
    %167 = vmatprep.subr.mxu0 %v29
    %168 = vmatpush1.msra.mxu0 %v28
    %169 = vmatprep.subr.mxu0 %v19
    %170 = vmatpush1.msra.mxu0 %v18
    %171 = vmatprep.subr.mxu0 0.0
    %172 = vmatpush2.msra.mxu0 0.0
    %173 = vmatprep.subr.mxu0 0.0
    %174 = vmatpush2.msra.mxu0 0.0
    %175 = vmatprep.subr.mxu0 0.0
    %176 = vmatpush2.msra.mxu0 0.0
    %177 = vmatprep.subr.mxu0 0.0
    %178 = vmatpush2.msra.mxu0 0.0
    %179 = vmatprep.subr.mxu0 0.0
    %180 = vmatpush2.msra.mxu0 0.0
    %181 = vmatprep.subr.mxu0 0.0
    %182 = vmatpush2.msra.mxu0 0.0
    %183 = vmatprep.subr.mxu0 0.0
    %184 = vmatpush2.msra.mxu0 0.0
    %185 = vmatprep.subr.mxu0 0.0
    %186 = vmatpush2.msra.mxu0 0.0
    %187 = vmatprep.subr.mxu0 0.0
    %188 = vmatpush2.msra.mxu0 0.0
    %189 = vmatprep.subr.mxu0 0.0
    %190 = vmatpush2.msra.mxu0 0.0
    %191 = vmatprep.subr.mxu0 0.0
    %192 = vmatpush2.msra.mxu0 0.0
    %193 = vmatprep.subr.mxu0 0.0
    %194 = vmatpush2.msra.mxu0 0.0
    %195 = vmatprep.subr.mxu0 0.0
    %196 = vmatpush2.msra.mxu0 0.0
    %197 = vmatprep.subr.mxu0 0.0
    %198 = vmatpush2.msra.mxu0 0.0
    %199 = vmatprep.subr.mxu0 0.0
    %200 = vmatpush2.msra.mxu0 0.0
    %201 = vmatprep.subr.mxu0 0.0
    %202 = vmatpush2.msra.mxu0 0.0
    %203 = vmatprep.mubr.f32.mxu0 0.0
    %204 = vmatmul.mubr.f32.gmra.mxu0 %v80
    %v205 = vpop.f32.mrf.mxu0
    %v206 = vadd.f32 0.0, %v205
    %v207 = vpop.f32.mrf.mxu0
    %v208 = vadd.f32 0.0, %v207
    %209 = vmatprep.mubr.f32.mxu0 0.0
    %210 = vmatmul.mubr.f32.gmra.mxu0 %v83
    %v211 = vpop.f32.mrf.mxu0
    %v212 = vadd.f32 0.0, %v211
    %v213 = vpop.f32.mrf.mxu0
    %v214 = vadd.f32 0.0, %v213
    %215 = vmatprep.mubr.f32.mxu0 0.0
    %216 = vmatmul.mubr.f32.gmra.mxu0 %v86
    %v217 = vpop.f32.mrf.mxu0
    %v218 = vadd.f32 0.0, %v217
    %v219 = vpop.f32.mrf.mxu0
    %v220 = vadd.f32 0.0, %v219
    %221 = vmatprep.mubr.f32.mxu0 0.0
    %222 = vmatmul.mubr.f32.gmra.mxu0 %v89
    %v223 = vpop.f32.mrf.mxu0
    %v224 = vadd.f32 0.0, %v223
    %v225 = vpop.f32.mrf.mxu0
    %v226 = vadd.f32 0.0, %v225
    %227 = vmatprep.mubr.f32.mxu0 0.0
    %228 = vmatmul.mubr.f32.gmra.mxu0 %v92
    %v229 = vpop.f32.mrf.mxu0
    %v230 = vpop.f32.mrf.mxu0
    %231 = vmatprep.mubr.f32.mxu0 0.0
    %232 = vmatmul.mubr.f32.gmra.mxu0 %v95
    %v233 = vpop.f32.mrf.mxu0
    %v234 = vpop.f32.mrf.mxu0
    %235 = vmatprep.mubr.f32.mxu0 0.0
    %236 = vmatmul.mubr.f32.gmra.mxu0 %v98
    %v237 = vpop.f32.mrf.mxu0
    %v238 = vpop.f32.mrf.mxu0
    %239 = vmatprep.mubr.f32.mxu0 0.0
    %240 = vmatmul.mubr.f32.gmra.mxu0 %v101
    %v241 = vpop.f32.mrf.mxu0
    %v242 = vpop.f32.mrf.mxu0
    %243 = vmatprep.mubr.f32.mxu0 0.0
    %244 = vmatmul.mubr.f32.gmra.mxu0 %v104
    %v245 = vpop.f32.mrf.mxu0
    %v246 = vadd.f32 0.0, %v245
    %v247 = vpop.f32.mrf.mxu0
    %v248 = vadd.f32 0.0, %v247
    %249 = vmatprep.mubr.f32.mxu0 0.0
    %250 = vmatmul.mubr.f32.gmra.mxu0 %v107
    %v251 = vpop.f32.mrf.mxu0
    %v252 = vadd.f32 0.0, %v251
    %v253 = vpop.f32.mrf.mxu0
    %v254 = vadd.f32 0.0, %v253
    %255 = vmatprep.mubr.f32.mxu0 0.0
    %256 = vmatmul.mubr.f32.gmra.mxu0 %v110
    %v257 = vpop.f32.mrf.mxu0
    %v258 = vadd.f32 0.0, %v257
    %v259 = vpop.f32.mrf.mxu0
    %v260 = vadd.f32 0.0, %v259
    %261 = vmatprep.mubr.f32.mxu0 0.0
    %262 = vmatmul.mubr.f32.gmra.mxu0 %v113
    %v263 = vpop.f32.mrf.mxu0
    %v264 = vadd.f32 0.0, %v263
    %v265 = vpop.f32.mrf.mxu0
    %v266 = vadd.f32 0.0, %v265
    %267 = vmatprep.mubr.f32.mxu0 0.0
    %268 = vmatmul.mubr.f32.gmra.mxu0 %v116
    %v269 = vpop.f32.mrf.mxu0
    %v270 = vpop.f32.mrf.mxu0
    %271 = vmatprep.mubr.f32.mxu0 0.0
    %272 = vmatmul.mubr.f32.gmra.mxu0 %v119
    %v273 = vpop.f32.mrf.mxu0
    %v274 = vpop.f32.mrf.mxu0
    %275 = vmatprep.mubr.f32.mxu0 0.0
    %276 = vmatmul.mubr.f32.gmra.mxu0 %v122
    %v277 = vpop.f32.mrf.mxu0
    %v278 = vpop.f32.mrf.mxu0
    %279 = vmatprep.mubr.f32.mxu0 0.0
    %280 = vmatmul.mubr.f32.gmra.mxu0 %v125
    %v281 = vpop.f32.mrf.mxu0
    %v282 = vpop.f32.mrf.mxu0
    %283 = vmatprep.mubr.f32.mxu0 0.0
    %284 = vmatmul.mubr.f32.gmra.mxu0 %v128
    %v285 = vpop.f32.mrf.mxu0
    %v286 = vpop.f32.mrf.mxu0
    %287 = vmatprep.mubr.f32.mxu0 0.0
    %288 = vmatmul.mubr.f32.gmra.mxu0 %v131
    %v289 = vpop.f32.mrf.mxu0
    %v290 = vpop.f32.mrf.mxu0
    %291 = vmatprep.mubr.f32.mxu0 0.0
    %292 = vmatmul.mubr.f32.gmra.mxu0 %v134
    %v293 = vpop.f32.mrf.mxu0
    %v294 = vpop.f32.mrf.mxu0
    %295 = vmatprep.mubr.f32.mxu0 0.0
    %296 = vmatmul.mubr.f32.gmra.mxu0 %v137
    %v297 = vpop.f32.mrf.mxu0
    %v298 = vpop.f32.mrf.mxu0
    %299 = vdwg.mxu0
    %300 = vmatprep.subr.mxu0 0.0
    %301 = vmatpush1.msra.mxu0 0.0
    %302 = vmatprep.subr.mxu0 0.0
    %303 = vmatpush1.msra.mxu0 0.0
    %304 = vmatprep.subr.mxu0 0.0
    %305 = vmatpush1.msra.mxu0 0.0
    %306 = vmatprep.subr.mxu0 0.0
    %307 = vmatpush1.msra.mxu0 0.0
    %308 = vmatprep.subr.mxu0 0.0
    %309 = vmatpush1.msra.mxu0 0.0
    %310 = vmatprep.subr.mxu0 0.0
    %311 = vmatpush1.msra.mxu0 0.0
    %312 = vmatprep.subr.mxu0 0.0
    %313 = vmatpush1.msra.mxu0 0.0
    %314 = vmatprep.subr.mxu0 0.0
    %315 = vmatpush1.msra.mxu0 0.0
    %316 = vmatprep.subr.mxu0 0.0
    %317 = vmatpush1.msra.mxu0 0.0
    %318 = vmatprep.subr.mxu0 0.0
    %319 = vmatpush1.msra.mxu0 0.0
    %320 = vmatprep.subr.mxu0 0.0
    %321 = vmatpush1.msra.mxu0 0.0
    %322 = vmatprep.subr.mxu0 0.0
    %323 = vmatpush1.msra.mxu0 0.0
    %324 = vmatprep.subr.mxu0 %v51
    %325 = vmatpush1.msra.mxu0 %v50
    %326 = vmatprep.subr.mxu0 %v41
    %327 = vmatpush1.msra.mxu0 %v40
    %328 = vmatprep.subr.mxu0 %v31
    %329 = vmatpush1.msra.mxu0 %v30
    %330 = vmatprep.subr.mxu0 %v21
    %331 = vmatpush1.msra.mxu0 %v20
    %332 = vmatprep.subr.mxu0 0.0
    %333 = vmatpush2.msra.mxu0 0.0
    %334 = vmatprep.subr.mxu0 0.0
    %335 = vmatpush2.msra.mxu0 0.0
    %336 = vmatprep.subr.mxu0 0.0
    %337 = vmatpush2.msra.mxu0 0.0
    %338 = vmatprep.subr.mxu0 0.0
    %339 = vmatpush2.msra.mxu0 0.0
    %340 = vmatprep.subr.mxu0 0.0
    %341 = vmatpush2.msra.mxu0 0.0
    %342 = vmatprep.subr.mxu0 0.0
    %343 = vmatpush2.msra.mxu0 0.0
    %344 = vmatprep.subr.mxu0 0.0
    %345 = vmatpush2.msra.mxu0 0.0
    %346 = vmatprep.subr.mxu0 0.0
    %347 = vmatpush2.msra.mxu0 0.0
    %348 = vmatprep.subr.mxu0 0.0
    %349 = vmatpush2.msra.mxu0 0.0
    %350 = vmatprep.subr.mxu0 0.0
    %351 = vmatpush2.msra.mxu0 0.0
    %352 = vmatprep.subr.mxu0 0.0
    %353 = vmatpush2.msra.mxu0 0.0
    %354 = vmatprep.subr.mxu0 0.0
    %355 = vmatpush2.msra.mxu0 0.0
    %356 = vmatprep.subr.mxu0 0.0
    %357 = vmatpush2.msra.mxu0 0.0
    %358 = vmatprep.subr.mxu0 0.0
    %359 = vmatpush2.msra.mxu0 0.0
    %360 = vmatprep.subr.mxu0 0.0
    %361 = vmatpush2.msra.mxu0 0.0
    %362 = vmatprep.subr.mxu0 0.0
    %363 = vmatpush2.msra.mxu0 0.0
    %364 = vmatprep.mubr.f32.mxu0 0.0
    %365 = vmatmul.mubr.f32.gmra.mxu0 %v80
    %v366 = vpop.f32.mrf.mxu0
    %v367 = vadd.f32 0.0, %v366
    %v368 = vpop.f32.mrf.mxu0
    %v369 = vadd.f32 0.0, %v368
    %370 = vmatprep.mubr.f32.mxu0 0.0
    %371 = vmatmul.mubr.f32.gmra.mxu0 %v83
    %v372 = vpop.f32.mrf.mxu0
    %v373 = vadd.f32 0.0, %v372
    %v374 = vpop.f32.mrf.mxu0
    %v375 = vadd.f32 0.0, %v374
    %376 = vmatprep.mubr.f32.mxu0 0.0
    %377 = vmatmul.mubr.f32.gmra.mxu0 %v86
    %v378 = vpop.f32.mrf.mxu0
    %v379 = vadd.f32 0.0, %v378
    %v380 = vpop.f32.mrf.mxu0
    %v381 = vadd.f32 0.0, %v380
    %382 = vmatprep.mubr.f32.mxu0 0.0
    %383 = vmatmul.mubr.f32.gmra.mxu0 %v89
    %v384 = vpop.f32.mrf.mxu0
    %v385 = vadd.f32 0.0, %v384
    %v386 = vpop.f32.mrf.mxu0
    %v387 = vadd.f32 0.0, %v386
    %388 = vmatprep.mubr.f32.mxu0 0.0
    %389 = vmatmul.mubr.f32.gmra.mxu0 %v92
    %v390 = vpop.f32.mrf.mxu0
    %v391 = vpop.f32.mrf.mxu0
    %392 = vmatprep.mubr.f32.mxu0 0.0
    %393 = vmatmul.mubr.f32.gmra.mxu0 %v95
    %v394 = vpop.f32.mrf.mxu0
    %v395 = vpop.f32.mrf.mxu0
    %396 = vmatprep.mubr.f32.mxu0 0.0
    %397 = vmatmul.mubr.f32.gmra.mxu0 %v98
    %v398 = vpop.f32.mrf.mxu0
    %v399 = vpop.f32.mrf.mxu0
    %400 = vmatprep.mubr.f32.mxu0 0.0
    %401 = vmatmul.mubr.f32.gmra.mxu0 %v101
    %v402 = vpop.f32.mrf.mxu0
    %v403 = vpop.f32.mrf.mxu0
    %404 = vmatprep.mubr.f32.mxu0 0.0
    %405 = vmatmul.mubr.f32.gmra.mxu0 %v104
    %v406 = vpop.f32.mrf.mxu0
    %v407 = vadd.f32 0.0, %v406
    %v408 = vpop.f32.mrf.mxu0
    %v409 = vadd.f32 0.0, %v408
    %410 = vmatprep.mubr.f32.mxu0 0.0
    %411 = vmatmul.mubr.f32.gmra.mxu0 %v107
    %v412 = vpop.f32.mrf.mxu0
    %v413 = vadd.f32 0.0, %v412
    %v414 = vpop.f32.mrf.mxu0
    %v415 = vadd.f32 0.0, %v414
    %416 = vmatprep.mubr.f32.mxu0 0.0
    %417 = vmatmul.mubr.f32.gmra.mxu0 %v110
    %v418 = vpop.f32.mrf.mxu0
    %v419 = vadd.f32 0.0, %v418
    %v420 = vpop.f32.mrf.mxu0
    %v421 = vadd.f32 0.0, %v420
    %422 = vmatprep.mubr.f32.mxu0 0.0
    %423 = vmatmul.mubr.f32.gmra.mxu0 %v113
    %v424 = vpop.f32.mrf.mxu0
    %v425 = vadd.f32 0.0, %v424
    %v426 = vpop.f32.mrf.mxu0
    %v427 = vadd.f32 0.0, %v426
    %428 = vmatprep.mubr.f32.mxu0 0.0
    %429 = vmatmul.mubr.f32.gmra.mxu0 %v116
    %v430 = vpop.f32.mrf.mxu0
    %v431 = vpop.f32.mrf.mxu0
    %432 = vmatprep.mubr.f32.mxu0 0.0
    %433 = vmatmul.mubr.f32.gmra.mxu0 %v119
    %v434 = vpop.f32.mrf.mxu0
    %v435 = vpop.f32.mrf.mxu0
    %436 = vmatprep.mubr.f32.mxu0 0.0
    %437 = vmatmul.mubr.f32.gmra.mxu0 %v122
    %v438 = vpop.f32.mrf.mxu0
    %v439 = vpop.f32.mrf.mxu0
    %440 = vmatprep.mubr.f32.mxu0 0.0
    %441 = vmatmul.mubr.f32.gmra.mxu0 %v125
    %v442 = vpop.f32.mrf.mxu0
    %v443 = vpop.f32.mrf.mxu0
    %444 = vmatprep.mubr.f32.mxu0 0.0
    %445 = vmatmul.mubr.f32.gmra.mxu0 %v128
    %v446 = vpop.f32.mrf.mxu0
    %v447 = vpop.f32.mrf.mxu0
    %448 = vmatprep.mubr.f32.mxu0 0.0
    %449 = vmatmul.mubr.f32.gmra.mxu0 %v131
    %v450 = vpop.f32.mrf.mxu0
    %v451 = vpop.f32.mrf.mxu0
    %452 = vmatprep.mubr.f32.mxu0 0.0
    %453 = vmatmul.mubr.f32.gmra.mxu0 %v134
    %v454 = vpop.f32.mrf.mxu0
    %v455 = vpop.f32.mrf.mxu0
    %456 = vmatprep.mubr.f32.mxu0 0.0
    %457 = vmatmul.mubr.f32.gmra.mxu0 %v137
    %v458 = vpop.f32.mrf.mxu0
    %v459 = vpop.f32.mrf.mxu0
    %460 = vdwg.mxu0
    %461 = vmatprep.subr.mxu0 0.0
    %462 = vmatpush1.msra.mxu0 0.0
    %463 = vmatprep.subr.mxu0 0.0
    %464 = vmatpush1.msra.mxu0 0.0
    %465 = vmatprep.subr.mxu0 0.0
    %466 = vmatpush1.msra.mxu0 0.0
    %467 = vmatprep.subr.mxu0 0.0
    %468 = vmatpush1.msra.mxu0 0.0
    %469 = vmatprep.subr.mxu0 0.0
    %470 = vmatpush1.msra.mxu0 0.0
    %471 = vmatprep.subr.mxu0 0.0
    %472 = vmatpush1.msra.mxu0 0.0
    %473 = vmatprep.subr.mxu0 0.0
    %474 = vmatpush1.msra.mxu0 0.0
    %475 = vmatprep.subr.mxu0 0.0
    %476 = vmatpush1.msra.mxu0 0.0
    %477 = vmatprep.subr.mxu0 0.0
    %478 = vmatpush1.msra.mxu0 0.0
    %479 = vmatprep.subr.mxu0 0.0
    %480 = vmatpush1.msra.mxu0 0.0
    %481 = vmatprep.subr.mxu0 0.0
    %482 = vmatpush1.msra.mxu0 0.0
    %483 = vmatprep.subr.mxu0 0.0
    %484 = vmatpush1.msra.mxu0 0.0
    %485 = vmatprep.subr.mxu0 %v53
    %486 = vmatpush1.msra.mxu0 %v52
    %487 = vmatprep.subr.mxu0 %v43
    %488 = vmatpush1.msra.mxu0 %v42
    %489 = vmatprep.subr.mxu0 %v33
    %490 = vmatpush1.msra.mxu0 %v32
    %491 = vmatprep.subr.mxu0 %v23
    %492 = vmatpush1.msra.mxu0 %v22
    %493 = vmatprep.subr.mxu0 0.0
    %494 = vmatpush2.msra.mxu0 0.0
    %495 = vmatprep.subr.mxu0 0.0
    %496 = vmatpush2.msra.mxu0 0.0
    %497 = vmatprep.subr.mxu0 0.0
    %498 = vmatpush2.msra.mxu0 0.0
    %499 = vmatprep.subr.mxu0 0.0
    %500 = vmatpush2.msra.mxu0 0.0
    %501 = vmatprep.subr.mxu0 0.0
    %502 = vmatpush2.msra.mxu0 0.0
    %503 = vmatprep.subr.mxu0 0.0
    %504 = vmatpush2.msra.mxu0 0.0
    %505 = vmatprep.subr.mxu0 0.0
    %506 = vmatpush2.msra.mxu0 0.0
    %507 = vmatprep.subr.mxu0 0.0
    %508 = vmatpush2.msra.mxu0 0.0
    %509 = vmatprep.subr.mxu0 0.0
    %510 = vmatpush2.msra.mxu0 0.0
    %511 = vmatprep.subr.mxu0 0.0
    %512 = vmatpush2.msra.mxu0 0.0
    %513 = vmatprep.subr.mxu0 0.0
    %514 = vmatpush2.msra.mxu0 0.0
    %515 = vmatprep.subr.mxu0 0.0
    %516 = vmatpush2.msra.mxu0 0.0
    %517 = vmatprep.subr.mxu0 0.0
    %518 = vmatpush2.msra.mxu0 0.0
    %519 = vmatprep.subr.mxu0 0.0
    %520 = vmatpush2.msra.mxu0 0.0
    %521 = vmatprep.subr.mxu0 0.0
    %522 = vmatpush2.msra.mxu0 0.0
    %523 = vmatprep.subr.mxu0 0.0
    %524 = vmatpush2.msra.mxu0 0.0
    %525 = vmatprep.mubr.f32.mxu0 0.0
    %526 = vmatmul.mubr.f32.gmra.mxu0 %v80
    %v527 = vpop.f32.mrf.mxu0
    %v528 = vadd.f32 0.0, %v527
    %v529 = vpop.f32.mrf.mxu0
    %v530 = vadd.f32 0.0, %v529
    %531 = vmatprep.mubr.f32.mxu0 0.0
    %532 = vmatmul.mubr.f32.gmra.mxu0 %v83
    %v533 = vpop.f32.mrf.mxu0
    %v534 = vadd.f32 0.0, %v533
    %v535 = vpop.f32.mrf.mxu0
    %v536 = vadd.f32 0.0, %v535
    %537 = vmatprep.mubr.f32.mxu0 0.0
    %538 = vmatmul.mubr.f32.gmra.mxu0 %v86
    %v539 = vpop.f32.mrf.mxu0
    %v540 = vadd.f32 0.0, %v539
    %v541 = vpop.f32.mrf.mxu0
    %v542 = vadd.f32 0.0, %v541
    %543 = vmatprep.mubr.f32.mxu0 0.0
    %544 = vmatmul.mubr.f32.gmra.mxu0 %v89
    %v545 = vpop.f32.mrf.mxu0
    %v546 = vadd.f32 0.0, %v545
    %v547 = vpop.f32.mrf.mxu0
    %v548 = vadd.f32 0.0, %v547
    %549 = vmatprep.mubr.f32.mxu0 0.0
    %550 = vmatmul.mubr.f32.gmra.mxu0 %v92
    %v551 = vpop.f32.mrf.mxu0
    %v552 = vpop.f32.mrf.mxu0
    %553 = vmatprep.mubr.f32.mxu0 0.0
    %554 = vmatmul.mubr.f32.gmra.mxu0 %v95
    %v555 = vpop.f32.mrf.mxu0
    %v556 = vpop.f32.mrf.mxu0
    %557 = vmatprep.mubr.f32.mxu0 0.0
    %558 = vmatmul.mubr.f32.gmra.mxu0 %v98
    %v559 = vpop.f32.mrf.mxu0
    %v560 = vpop.f32.mrf.mxu0
    %561 = vmatprep.mubr.f32.mxu0 0.0
    %562 = vmatmul.mubr.f32.gmra.mxu0 %v101
    %v563 = vpop.f32.mrf.mxu0
    %v564 = vpop.f32.mrf.mxu0
    %565 = vmatprep.mubr.f32.mxu0 0.0
    %566 = vmatmul.mubr.f32.gmra.mxu0 %v104
    %v567 = vpop.f32.mrf.mxu0
    %v568 = vadd.f32 0.0, %v567
    %v569 = vpop.f32.mrf.mxu0
    %v570 = vadd.f32 0.0, %v569
    %571 = vmatprep.mubr.f32.mxu0 0.0
    %572 = vmatmul.mubr.f32.gmra.mxu0 %v107
    %v573 = vpop.f32.mrf.mxu0
    %v574 = vadd.f32 0.0, %v573
    %v575 = vpop.f32.mrf.mxu0
    %v576 = vadd.f32 0.0, %v575
    %577 = vmatprep.mubr.f32.mxu0 0.0
    %578 = vmatmul.mubr.f32.gmra.mxu0 %v110
    %v579 = vpop.f32.mrf.mxu0
    %v580 = vadd.f32 0.0, %v579
    %v581 = vpop.f32.mrf.mxu0
    %v582 = vadd.f32 0.0, %v581
    %583 = vmatprep.mubr.f32.mxu0 0.0
    %584 = vmatmul.mubr.f32.gmra.mxu0 %v113
    %v585 = vpop.f32.mrf.mxu0
    %v586 = vadd.f32 0.0, %v585
    %v587 = vpop.f32.mrf.mxu0
    %v588 = vadd.f32 0.0, %v587
    %589 = vmatprep.mubr.f32.mxu0 0.0
    %590 = vmatmul.mubr.f32.gmra.mxu0 %v116
    %v591 = vpop.f32.mrf.mxu0
    %v592 = vpop.f32.mrf.mxu0
    %593 = vmatprep.mubr.f32.mxu0 0.0
    %594 = vmatmul.mubr.f32.gmra.mxu0 %v119
    %v595 = vpop.f32.mrf.mxu0
    %v596 = vpop.f32.mrf.mxu0
    %597 = vmatprep.mubr.f32.mxu0 0.0
    %598 = vmatmul.mubr.f32.gmra.mxu0 %v122
    %v599 = vpop.f32.mrf.mxu0
    %v600 = vpop.f32.mrf.mxu0
    %601 = vmatprep.mubr.f32.mxu0 0.0
    %602 = vmatmul.mubr.f32.gmra.mxu0 %v125
    %v603 = vpop.f32.mrf.mxu0
    %v604 = vpop.f32.mrf.mxu0
    %605 = vmatprep.mubr.f32.mxu0 0.0
    %606 = vmatmul.mubr.f32.gmra.mxu0 %v128
    %v607 = vpop.f32.mrf.mxu0
    %v608 = vpop.f32.mrf.mxu0
    %609 = vmatprep.mubr.f32.mxu0 0.0
    %610 = vmatmul.mubr.f32.gmra.mxu0 %v131
    %v611 = vpop.f32.mrf.mxu0
    %v612 = vpop.f32.mrf.mxu0
    %613 = vmatprep.mubr.f32.mxu0 0.0
    %614 = vmatmul.mubr.f32.gmra.mxu0 %v134
    %v615 = vpop.f32.mrf.mxu0
    %v616 = vpop.f32.mrf.mxu0
    %617 = vmatprep.mubr.f32.mxu0 0.0
    %618 = vmatmul.mubr.f32.gmra.mxu0 %v137
    %v619 = vpop.f32.mrf.mxu0
    %v620 = vpop.f32.mrf.mxu0
    %621 = vdwg.mxu0
    %622 = vmatprep.subr.mxu0 0.0
    %623 = vmatpush1.msra.mxu0 0.0
    %624 = vmatprep.subr.mxu0 0.0
    %625 = vmatpush1.msra.mxu0 0.0
    %626 = vmatprep.subr.mxu0 0.0
    %627 = vmatpush1.msra.mxu0 0.0
    %628 = vmatprep.subr.mxu0 0.0
    %629 = vmatpush1.msra.mxu0 0.0
    %630 = vmatprep.subr.mxu0 0.0
    %631 = vmatpush1.msra.mxu0 0.0
    %632 = vmatprep.subr.mxu0 0.0
    %633 = vmatpush1.msra.mxu0 0.0
    %634 = vmatprep.subr.mxu0 0.0
    %635 = vmatpush1.msra.mxu0 0.0
    %636 = vmatprep.subr.mxu0 0.0
    %637 = vmatpush1.msra.mxu0 0.0
    %638 = vmatprep.subr.mxu0 0.0
    %639 = vmatpush1.msra.mxu0 0.0
    %640 = vmatprep.subr.mxu0 0.0
    %641 = vmatpush1.msra.mxu0 0.0
    %642 = vmatprep.subr.mxu0 0.0
    %643 = vmatpush1.msra.mxu0 0.0
    %644 = vmatprep.subr.mxu0 0.0
    %645 = vmatpush1.msra.mxu0 0.0
    %646 = vmatprep.subr.mxu0 %v55
    %647 = vmatpush1.msra.mxu0 %v54
    %648 = vmatprep.subr.mxu0 %v45
    %649 = vmatpush1.msra.mxu0 %v44
    %650 = vmatprep.subr.mxu0 %v35
    %651 = vmatpush1.msra.mxu0 %v34
    %652 = vmatprep.subr.mxu0 %v25
    %653 = vmatpush1.msra.mxu0 %v24
    %654 = vmatprep.subr.mxu0 0.0
    %655 = vmatpush2.msra.mxu0 0.0
    %656 = vmatprep.subr.mxu0 0.0
    %657 = vmatpush2.msra.mxu0 0.0
    %658 = vmatprep.subr.mxu0 0.0
    %659 = vmatpush2.msra.mxu0 0.0
    %660 = vmatprep.subr.mxu0 0.0
    %661 = vmatpush2.msra.mxu0 0.0
    %662 = vmatprep.subr.mxu0 0.0
    %663 = vmatpush2.msra.mxu0 0.0
    %664 = vmatprep.subr.mxu0 0.0
    %665 = vmatpush2.msra.mxu0 0.0
    %666 = vmatprep.subr.mxu0 0.0
    %667 = vmatpush2.msra.mxu0 0.0
    %668 = vmatprep.subr.mxu0 0.0
    %669 = vmatpush2.msra.mxu0 0.0
    %670 = vmatprep.subr.mxu0 0.0
    %671 = vmatpush2.msra.mxu0 0.0
    %672 = vmatprep.subr.mxu0 0.0
    %673 = vmatpush2.msra.mxu0 0.0
    %674 = vmatprep.subr.mxu0 0.0
    %675 = vmatpush2.msra.mxu0 0.0
    %676 = vmatprep.subr.mxu0 0.0
    %677 = vmatpush2.msra.mxu0 0.0
    %678 = vmatprep.subr.mxu0 0.0
    %679 = vmatpush2.msra.mxu0 0.0
    %680 = vmatprep.subr.mxu0 0.0
    %681 = vmatpush2.msra.mxu0 0.0
    %682 = vmatprep.subr.mxu0 0.0
    %683 = vmatpush2.msra.mxu0 0.0
    %684 = vmatprep.subr.mxu0 0.0
    %685 = vmatpush2.msra.mxu0 0.0
    %686 = vmatprep.mubr.f32.mxu0 0.0
    %687 = vmatmul.mubr.f32.gmra.mxu0 %v80
    %v688 = vpop.f32.mrf.mxu0
    %v689 = vadd.f32 0.0, %v688
    %v690 = vpop.f32.mrf.mxu0
    %v691 = vadd.f32 0.0, %v690
    %692 = vmatprep.mubr.f32.mxu0 0.0
    %693 = vmatmul.mubr.f32.gmra.mxu0 %v83
    %v694 = vpop.f32.mrf.mxu0
    %v695 = vadd.f32 0.0, %v694
    %v696 = vpop.f32.mrf.mxu0
    %v697 = vadd.f32 0.0, %v696
    %698 = vmatprep.mubr.f32.mxu0 0.0
    %699 = vmatmul.mubr.f32.gmra.mxu0 %v86
    %v700 = vpop.f32.mrf.mxu0
    %v701 = vadd.f32 0.0, %v700
    %v702 = vpop.f32.mrf.mxu0
    %v703 = vadd.f32 0.0, %v702
    %704 = vmatprep.mubr.f32.mxu0 0.0
    %705 = vmatmul.mubr.f32.gmra.mxu0 %v89
    %v706 = vpop.f32.mrf.mxu0
    %v707 = vadd.f32 0.0, %v706
    %v708 = vpop.f32.mrf.mxu0
    %v709 = vadd.f32 0.0, %v708
    %710 = vmatprep.mubr.f32.mxu0 0.0
    %711 = vmatmul.mubr.f32.gmra.mxu0 %v92
    %v712 = vpop.f32.mrf.mxu0
    %v713 = vpop.f32.mrf.mxu0
    %714 = vmatprep.mubr.f32.mxu0 0.0
    %715 = vmatmul.mubr.f32.gmra.mxu0 %v95
    %v716 = vpop.f32.mrf.mxu0
    %v717 = vpop.f32.mrf.mxu0
    %718 = vmatprep.mubr.f32.mxu0 0.0
    %719 = vmatmul.mubr.f32.gmra.mxu0 %v98
    %v720 = vpop.f32.mrf.mxu0
    %v721 = vpop.f32.mrf.mxu0
    %722 = vmatprep.mubr.f32.mxu0 0.0
    %723 = vmatmul.mubr.f32.gmra.mxu0 %v101
    %v724 = vpop.f32.mrf.mxu0
    %v725 = vpop.f32.mrf.mxu0
    %726 = vmatprep.mubr.f32.mxu0 0.0
    %727 = vmatmul.mubr.f32.gmra.mxu0 %v104
    %v728 = vpop.f32.mrf.mxu0
    %v729 = vadd.f32 0.0, %v728
    %v730 = vpop.f32.mrf.mxu0
    %v731 = vadd.f32 0.0, %v730
    %732 = vmatprep.mubr.f32.mxu0 0.0
    %733 = vmatmul.mubr.f32.gmra.mxu0 %v107
    %v734 = vpop.f32.mrf.mxu0
    %v735 = vadd.f32 0.0, %v734
    %v736 = vpop.f32.mrf.mxu0
    %v737 = vadd.f32 0.0, %v736
    %738 = vmatprep.mubr.f32.mxu0 0.0
    %739 = vmatmul.mubr.f32.gmra.mxu0 %v110
    %v740 = vpop.f32.mrf.mxu0
    %v741 = vadd.f32 0.0, %v740
    %v742 = vpop.f32.mrf.mxu0
    %v743 = vadd.f32 0.0, %v742
    %744 = vmatprep.mubr.f32.mxu0 0.0
    %745 = vmatmul.mubr.f32.gmra.mxu0 %v113
    %v746 = vpop.f32.mrf.mxu0
    %v747 = vadd.f32 0.0, %v746
    %v748 = vpop.f32.mrf.mxu0
    %v749 = vadd.f32 0.0, %v748
    %750 = vmatprep.mubr.f32.mxu0 0.0
    %751 = vmatmul.mubr.f32.gmra.mxu0 %v116
    %v752 = vpop.f32.mrf.mxu0
    %v753 = vpop.f32.mrf.mxu0
    %754 = vmatprep.mubr.f32.mxu0 0.0
    %755 = vmatmul.mubr.f32.gmra.mxu0 %v119
    %v756 = vpop.f32.mrf.mxu0
    %v757 = vpop.f32.mrf.mxu0
    %758 = vmatprep.mubr.f32.mxu0 0.0
    %759 = vmatmul.mubr.f32.gmra.mxu0 %v122
    %v760 = vpop.f32.mrf.mxu0
    %v761 = vpop.f32.mrf.mxu0
    %762 = vmatprep.mubr.f32.mxu0 0.0
    %763 = vmatmul.mubr.f32.gmra.mxu0 %v125
    %v764 = vpop.f32.mrf.mxu0
    %v765 = vpop.f32.mrf.mxu0
    %766 = vmatprep.mubr.f32.mxu0 0.0
    %767 = vmatmul.mubr.f32.gmra.mxu0 %v128
    %v768 = vpop.f32.mrf.mxu0
    %v769 = vpop.f32.mrf.mxu0
    %770 = vmatprep.mubr.f32.mxu0 0.0
    %771 = vmatmul.mubr.f32.gmra.mxu0 %v131
    %v772 = vpop.f32.mrf.mxu0
    %v773 = vpop.f32.mrf.mxu0
    %774 = vmatprep.mubr.f32.mxu0 0.0
    %775 = vmatmul.mubr.f32.gmra.mxu0 %v134
    %v776 = vpop.f32.mrf.mxu0
    %v777 = vpop.f32.mrf.mxu0
    %778 = vmatprep.mubr.f32.mxu0 0.0
    %779 = vmatmul.mubr.f32.gmra.mxu0 %v137
    %v780 = vpop.f32.mrf.mxu0
    %v781 = vpop.f32.mrf.mxu0
    %782 = vdwg.mxu0
    %783 = vmatprep.subr.mxu0 0.0
    %784 = vmatpush1.msra.mxu0 0.0
    %785 = vmatprep.subr.mxu0 0.0
    %786 = vmatpush1.msra.mxu0 0.0
    %787 = vmatprep.subr.mxu0 0.0
    %788 = vmatpush1.msra.mxu0 0.0
    %789 = vmatprep.subr.mxu0 0.0
    %790 = vmatpush1.msra.mxu0 0.0
    %791 = vmatprep.subr.mxu0 0.0
    %792 = vmatpush1.msra.mxu0 0.0
    %793 = vmatprep.subr.mxu0 0.0
    %794 = vmatpush1.msra.mxu0 0.0
    %795 = vmatprep.subr.mxu0 0.0
    %796 = vmatpush1.msra.mxu0 0.0
    %797 = vmatprep.subr.mxu0 0.0
    %798 = vmatpush1.msra.mxu0 0.0
    %799 = vmatprep.subr.mxu0 0.0
    %800 = vmatpush1.msra.mxu0 0.0
    %801 = vmatprep.subr.mxu0 0.0
    %802 = vmatpush1.msra.mxu0 0.0
    %803 = vmatprep.subr.mxu0 0.0
    %804 = vmatpush1.msra.mxu0 0.0
    %805 = vmatprep.subr.mxu0 0.0
    %806 = vmatpush1.msra.mxu0 0.0
    %807 = vmatprep.subr.mxu0 %v57
    %808 = vmatpush1.msra.mxu0 %v56
    %809 = vmatprep.subr.mxu0 %v47
    %810 = vmatpush1.msra.mxu0 %v46
    %811 = vmatprep.subr.mxu0 %v37
    %812 = vmatpush1.msra.mxu0 %v36
    %813 = vmatprep.subr.mxu0 %v27
    %814 = vmatpush1.msra.mxu0 %v26
    %815 = vmatprep.subr.mxu0 0.0
    %816 = vmatpush2.msra.mxu0 0.0
    %817 = vmatprep.subr.mxu0 0.0
    %818 = vmatpush2.msra.mxu0 0.0
    %819 = vmatprep.subr.mxu0 0.0
    %820 = vmatpush2.msra.mxu0 0.0
    %821 = vmatprep.subr.mxu0 0.0
    %822 = vmatpush2.msra.mxu0 0.0
    %823 = vmatprep.subr.mxu0 0.0
    %824 = vmatpush2.msra.mxu0 0.0
    %825 = vmatprep.subr.mxu0 0.0
    %826 = vmatpush2.msra.mxu0 0.0
    %827 = vmatprep.subr.mxu0 0.0
    %828 = vmatpush2.msra.mxu0 0.0
    %829 = vmatprep.subr.mxu0 0.0
    %830 = vmatpush2.msra.mxu0 0.0
    %831 = vmatprep.subr.mxu0 0.0
    %832 = vmatpush2.msra.mxu0 0.0
    %833 = vmatprep.subr.mxu0 0.0
    %834 = vmatpush2.msra.mxu0 0.0
    %835 = vmatprep.subr.mxu0 0.0
    %836 = vmatpush2.msra.mxu0 0.0
    %837 = vmatprep.subr.mxu0 0.0
    %838 = vmatpush2.msra.mxu0 0.0
    %839 = vmatprep.subr.mxu0 0.0
    %840 = vmatpush2.msra.mxu0 0.0
    %841 = vmatprep.subr.mxu0 0.0
    %842 = vmatpush2.msra.mxu0 0.0
    %843 = vmatprep.subr.mxu0 0.0
    %844 = vmatpush2.msra.mxu0 0.0
    %845 = vmatprep.subr.mxu0 0.0
    %846 = vmatpush2.msra.mxu0 0.0
    %847 = vmatprep.mubr.f32.mxu0 0.0
    %848 = vmatmul.mubr.f32.gmra.mxu0 %v80
    %v849 = vpop.f32.mrf.mxu0
    %v850 = vadd.f32 0.0, %v849
    %v851 = vpop.f32.mrf.mxu0
    %v852 = vadd.f32 0.0, %v851
    %853 = vmatprep.mubr.f32.mxu0 0.0
    %854 = vmatmul.mubr.f32.gmra.mxu0 %v83
    %v855 = vpop.f32.mrf.mxu0
    %v856 = vadd.f32 0.0, %v855
    %v857 = vpop.f32.mrf.mxu0
    %v858 = vadd.f32 0.0, %v857
    %859 = vmatprep.mubr.f32.mxu0 0.0
    %860 = vmatmul.mubr.f32.gmra.mxu0 %v86
    %v861 = vpop.f32.mrf.mxu0
    %v862 = vadd.f32 0.0, %v861
    %v863 = vpop.f32.mrf.mxu0
    %v864 = vadd.f32 0.0, %v863
    %865 = vmatprep.mubr.f32.mxu0 0.0
    %866 = vmatmul.mubr.f32.gmra.mxu0 %v89
    %v867 = vpop.f32.mrf.mxu0
    %v868 = vadd.f32 0.0, %v867
    %v869 = vpop.f32.mrf.mxu0
    %v870 = vadd.f32 0.0, %v869
    %871 = vmatprep.mubr.f32.mxu0 0.0
    %872 = vmatmul.mubr.f32.gmra.mxu0 %v92
    %v873 = vpop.f32.mrf.mxu0
    %v874 = vpop.f32.mrf.mxu0
    %v875 = vadd.f32 0.0, %v874
    %876 = vmatprep.mubr.f32.mxu0 0.0
    %877 = vmatmul.mubr.f32.gmra.mxu0 %v95
    %v878 = vpop.f32.mrf.mxu0
    %v879 = vpop.f32.mrf.mxu0
    %v880 = vadd.f32 0.0, %v879
    %881 = vmatprep.mubr.f32.mxu0 0.0
    %882 = vmatmul.mubr.f32.gmra.mxu0 %v98
    %v883 = vpop.f32.mrf.mxu0
    %v884 = vpop.f32.mrf.mxu0
    %v885 = vadd.f32 0.0, %v884
    %886 = vmatprep.mubr.f32.mxu0 0.0
    %887 = vmatmul.mubr.f32.gmra.mxu0 %v101
    %v888 = vpop.f32.mrf.mxu0
    %v889 = vpop.f32.mrf.mxu0
    %v890 = vadd.f32 0.0, %v889
    %891 = vmatprep.mubr.f32.mxu0 0.0
    %892 = vmatmul.mubr.f32.gmra.mxu0 %v104
    %v893 = vpop.f32.mrf.mxu0
    %v894 = vadd.f32 0.0, %v893
    %v895 = vpop.f32.mrf.mxu0
    %v896 = vadd.f32 0.0, %v895
    %897 = vmatprep.mubr.f32.mxu0 0.0
    %898 = vmatmul.mubr.f32.gmra.mxu0 %v107
    %v899 = vpop.f32.mrf.mxu0
    %v900 = vadd.f32 0.0, %v899
    %v901 = vpop.f32.mrf.mxu0
    %v902 = vadd.f32 0.0, %v901
    %903 = vmatprep.mubr.f32.mxu0 0.0
    %904 = vmatmul.mubr.f32.gmra.mxu0 %v110
    %v905 = vpop.f32.mrf.mxu0
    %v906 = vadd.f32 0.0, %v905
    %v907 = vpop.f32.mrf.mxu0
    %v908 = vadd.f32 0.0, %v907
    %909 = vmatprep.mubr.f32.mxu0 0.0
    %910 = vmatmul.mubr.f32.gmra.mxu0 %v113
    %v911 = vpop.f32.mrf.mxu0
    %v912 = vadd.f32 0.0, %v911
    %v913 = vpop.f32.mrf.mxu0
    %v914 = vadd.f32 0.0, %v913
    %915 = vmatprep.mubr.f32.mxu0 0.0
    %916 = vmatmul.mubr.f32.gmra.mxu0 %v116
    %v917 = vpop.f32.mrf.mxu0
    %v918 = vpop.f32.mrf.mxu0
    %v919 = vadd.f32 0.0, %v918
    %920 = vmatprep.mubr.f32.mxu0 0.0
    %921 = vmatmul.mubr.f32.gmra.mxu0 %v119
    %v922 = vpop.f32.mrf.mxu0
    %v923 = vpop.f32.mrf.mxu0
    %v924 = vadd.f32 0.0, %v923
    %925 = vmatprep.mubr.f32.mxu0 0.0
    %926 = vmatmul.mubr.f32.gmra.mxu0 %v122
    %v927 = vpop.f32.mrf.mxu0
    %v928 = vpop.f32.mrf.mxu0
    %v929 = vadd.f32 0.0, %v928
    %930 = vmatprep.mubr.f32.mxu0 0.0
    %931 = vmatmul.mubr.f32.gmra.mxu0 %v125
    %v932 = vpop.f32.mrf.mxu0
    %v933 = vpop.f32.mrf.mxu0
    %v934 = vadd.f32 0.0, %v933
    %935 = vmatprep.mubr.f32.mxu0 0.0
    %936 = vmatmul.mubr.f32.gmra.mxu0 %v128
    %v937 = vpop.f32.mrf.mxu0
    %v938 = vpop.f32.mrf.mxu0
    %v939 = vadd.f32 0.0, %v938
    %940 = vmatprep.mubr.f32.mxu0 0.0
    %941 = vmatmul.mubr.f32.gmra.mxu0 %v131
    %v942 = vpop.f32.mrf.mxu0
    %v943 = vpop.f32.mrf.mxu0
    %v944 = vadd.f32 0.0, %v943
    %945 = vmatprep.mubr.f32.mxu0 0.0
    %946 = vmatmul.mubr.f32.gmra.mxu0 %v134
    %v947 = vpop.f32.mrf.mxu0
    %v948 = vpop.f32.mrf.mxu0
    %v949 = vadd.f32 0.0, %v948
    %950 = vmatprep.mubr.f32.mxu0 0.0
    %951 = vmatmul.mubr.f32.gmra.mxu0 %v137
    %v952 = vpop.f32.mrf.mxu0
    %v953 = vpop.f32.mrf.mxu0
    %v954 = vadd.f32 0.0, %v953
    %955 = vdwg.mxu0
    %v956 = vld [vmem:[%s2] sm:$0xff]
    %v957 = vld [vmem:[%s2 + $0x8] sm:$0xff]
    %v958 = vld [vmem:[%s2 + $0x10] sm:$0xff]
    %v959 = vld [vmem:[%s2 + $0x18] sm:$0xff]
    %v960 = vld [vmem:[%s2 + $0x20] sm:$0xff]
    %v961 = vld [vmem:[%s2 + $0x28] sm:$0xff]
    %v962 = vld [vmem:[%s2 + $0x30] sm:$0xff]
    %v963 = vld [vmem:[%s2 + $0x38] sm:$0xff]
    %v965 = vsel %vm78, %v956, 0
    %v968 = vsel %vm78, %v957, 0
    %v971 = vsel %vm78, %v958, 0
    %v974 = vsel %vm78, %v959, 0
    %v977 = vsel %vm78, %v960, 0
    %v980 = vsel %vm78, %v961, 0
    %v983 = vsel %vm78, %v962, 0
    %v986 = vsel %vm78, %v963, 0
    %988 = vmatprep.subr.mxu0 0.0
    %989 = vmatpush1.msra.mxu0 0.0
    %990 = vmatprep.subr.mxu0 0.0
    %991 = vmatpush1.msra.mxu0 0.0
    %992 = vmatprep.subr.mxu0 0.0
    %993 = vmatpush1.msra.mxu0 0.0
    %994 = vmatprep.subr.mxu0 0.0
    %995 = vmatpush1.msra.mxu0 0.0
    %996 = vmatprep.subr.mxu0 0.0
    %997 = vmatpush1.msra.mxu0 0.0
    %998 = vmatprep.subr.mxu0 0.0
    %999 = vmatpush1.msra.mxu0 0.0
    %1000 = vmatprep.subr.mxu0 0.0
    %1001 = vmatpush1.msra.mxu0 0.0
    %1002 = vmatprep.subr.mxu0 0.0
    %1003 = vmatpush1.msra.mxu0 0.0
    %1004 = vmatprep.subr.mxu0 0.0
    %1005 = vmatpush1.msra.mxu0 0.0
    %1006 = vmatprep.subr.mxu0 0.0
    %1007 = vmatpush1.msra.mxu0 0.0
    %1008 = vmatprep.subr.mxu0 0.0
    %1009 = vmatpush1.msra.mxu0 0.0
    %1010 = vmatprep.subr.mxu0 0.0
    %1011 = vmatpush1.msra.mxu0 0.0
    %1012 = vmatprep.subr.mxu0 0.0
    %1013 = vmatpush1.msra.mxu0 %v48
    %1014 = vmatprep.subr.mxu0 0.0
    %1015 = vmatpush1.msra.mxu0 %v38
    %1016 = vmatprep.subr.mxu0 0.0
    %1017 = vmatpush1.msra.mxu0 %v28
    %1018 = vmatprep.subr.mxu0 0.0
    %1019 = vmatpush1.msra.mxu0 %v18
    %1020 = vmatprep.subr.mxu0 0.0
    %1021 = vmatpush2.msra.mxu0 0.0
    %1022 = vmatprep.subr.mxu0 0.0
    %1023 = vmatpush2.msra.mxu0 0.0
    %1024 = vmatprep.subr.mxu0 0.0
    %1025 = vmatpush2.msra.mxu0 0.0
    %1026 = vmatprep.subr.mxu0 0.0
    %1027 = vmatpush2.msra.mxu0 0.0
    %1028 = vmatprep.subr.mxu0 0.0
    %1029 = vmatpush2.msra.mxu0 0.0
    %1030 = vmatprep.subr.mxu0 0.0
    %1031 = vmatpush2.msra.mxu0 0.0
    %1032 = vmatprep.subr.mxu0 0.0
    %1033 = vmatpush2.msra.mxu0 0.0
    %1034 = vmatprep.subr.mxu0 0.0
    %1035 = vmatpush2.msra.mxu0 0.0
    %1036 = vmatprep.subr.mxu0 0.0
    %1037 = vmatpush2.msra.mxu0 0.0
    %1038 = vmatprep.subr.mxu0 0.0
    %1039 = vmatpush2.msra.mxu0 0.0
    %1040 = vmatprep.subr.mxu0 0.0
    %1041 = vmatpush2.msra.mxu0 0.0
    %1042 = vmatprep.subr.mxu0 0.0
    %1043 = vmatpush2.msra.mxu0 0.0
    %1044 = vmatprep.subr.mxu0 0.0
    %1045 = vmatpush2.msra.mxu0 0.0
    %1046 = vmatprep.subr.mxu0 0.0
    %1047 = vmatpush2.msra.mxu0 0.0
    %1048 = vmatprep.subr.mxu0 0.0
    %1049 = vmatpush2.msra.mxu0 0.0
    %1050 = vmatprep.subr.mxu0 0.0
    %1051 = vmatpush2.msra.mxu0 0.0
    %1052 = vmatprep.mubr.f32.mxu0 0.0
    %1053 = vmatmul.mubr.f32.gmra.mxu0 %v965
    %v1054 = vpop.f32.mrf.mxu0
    %v1055 = vadd.f32 0.0, %v1054
    %v1056 = vpop.f32.mrf.mxu0
    %1057 = vmatprep.mubr.f32.mxu0 0.0
    %1058 = vmatmul.mubr.f32.gmra.mxu0 %v968
    %v1059 = vpop.f32.mrf.mxu0
    %v1060 = vadd.f32 0.0, %v1059
    %v1061 = vpop.f32.mrf.mxu0
    %1062 = vmatprep.mubr.f32.mxu0 0.0
    %1063 = vmatmul.mubr.f32.gmra.mxu0 %v971
    %v1064 = vpop.f32.mrf.mxu0
    %v1065 = vadd.f32 0.0, %v1064
    %v1066 = vpop.f32.mrf.mxu0
    %1067 = vmatprep.mubr.f32.mxu0 0.0
    %1068 = vmatmul.mubr.f32.gmra.mxu0 %v974
    %v1069 = vpop.f32.mrf.mxu0
    %v1070 = vadd.f32 0.0, %v1069
    %v1071 = vpop.f32.mrf.mxu0
    %1072 = vmatprep.mubr.f32.mxu0 0.0
    %1073 = vmatmul.mubr.f32.gmra.mxu0 %v977
    %v1074 = vpop.f32.mrf.mxu0
    %v1075 = vadd.f32 0.0, %v1074
    %v1076 = vpop.f32.mrf.mxu0
    %1077 = vmatprep.mubr.f32.mxu0 0.0
    %1078 = vmatmul.mubr.f32.gmra.mxu0 %v980
    %v1079 = vpop.f32.mrf.mxu0
    %v1080 = vadd.f32 0.0, %v1079
    %v1081 = vpop.f32.mrf.mxu0
    %1082 = vmatprep.mubr.f32.mxu0 0.0
    %1083 = vmatmul.mubr.f32.gmra.mxu0 %v983
    %v1084 = vpop.f32.mrf.mxu0
    %v1085 = vadd.f32 0.0, %v1084
    %v1086 = vpop.f32.mrf.mxu0
    %1087 = vmatprep.mubr.f32.mxu0 0.0
    %1088 = vmatmul.mubr.f32.gmra.mxu0 %v986
    %v1089 = vpop.f32.mrf.mxu0
    %v1090 = vadd.f32 0.0, %v1089
    %v1091 = vpop.f32.mrf.mxu0
    %1092 = vdwg.mxu0
    %s1093 = scalar_lea.vmem %s2, 64
    %v1094 = vld [vmem:[%s1093] sm:$0xff]
    %v1095 = vld [vmem:[%s1093 + $0x8] sm:$0xff]
    %v1096 = vld [vmem:[%s1093 + $0x10] sm:$0xff]
    %v1097 = vld [vmem:[%s1093 + $0x18] sm:$0xff]
    %v1098 = vld [vmem:[%s1093 + $0x20] sm:$0xff]
    %v1099 = vld [vmem:[%s1093 + $0x28] sm:$0xff]
    %v1100 = vld [vmem:[%s1093 + $0x30] sm:$0xff]
    %v1101 = vld [vmem:[%s1093 + $0x38] sm:$0xff]
    %v1103 = vsel %vm78, %v1094, 0
    %v1106 = vsel %vm78, %v1095, 0
    %v1109 = vsel %vm78, %v1096, 0
    %v1112 = vsel %vm78, %v1097, 0
    %v1115 = vsel %vm78, %v1098, 0
    %v1118 = vsel %vm78, %v1099, 0
    %v1121 = vsel %vm78, %v1100, 0
    %v1124 = vsel %vm78, %v1101, 0
    %1126 = vmatprep.subr.mxu0 0.0
    %1127 = vmatpush1.msra.mxu0 0.0
    %1128 = vmatprep.subr.mxu0 0.0
    %1129 = vmatpush1.msra.mxu0 0.0
    %1130 = vmatprep.subr.mxu0 0.0
    %1131 = vmatpush1.msra.mxu0 0.0
    %1132 = vmatprep.subr.mxu0 0.0
    %1133 = vmatpush1.msra.mxu0 0.0
    %1134 = vmatprep.subr.mxu0 0.0
    %1135 = vmatpush1.msra.mxu0 0.0
    %1136 = vmatprep.subr.mxu0 0.0
    %1137 = vmatpush1.msra.mxu0 0.0
    %1138 = vmatprep.subr.mxu0 0.0
    %1139 = vmatpush1.msra.mxu0 0.0
    %1140 = vmatprep.subr.mxu0 0.0
    %1141 = vmatpush1.msra.mxu0 0.0
    %1142 = vmatprep.subr.mxu0 0.0
    %1143 = vmatpush1.msra.mxu0 0.0
    %1144 = vmatprep.subr.mxu0 0.0
    %1145 = vmatpush1.msra.mxu0 0.0
    %1146 = vmatprep.subr.mxu0 0.0
    %1147 = vmatpush1.msra.mxu0 0.0
    %1148 = vmatprep.subr.mxu0 0.0
    %1149 = vmatpush1.msra.mxu0 0.0
    %1150 = vmatprep.subr.mxu0 0.0
    %1151 = vmatpush1.msra.mxu0 %v49
    %1152 = vmatprep.subr.mxu0 0.0
    %1153 = vmatpush1.msra.mxu0 %v39
    %1154 = vmatprep.subr.mxu0 0.0
    %1155 = vmatpush1.msra.mxu0 %v29
    %1156 = vmatprep.subr.mxu0 0.0
    %1157 = vmatpush1.msra.mxu0 %v19
    %1158 = vmatprep.subr.mxu0 0.0
    %1159 = vmatpush2.msra.mxu0 0.0
    %1160 = vmatprep.subr.mxu0 0.0
    %1161 = vmatpush2.msra.mxu0 0.0
    %1162 = vmatprep.subr.mxu0 0.0
    %1163 = vmatpush2.msra.mxu0 0.0
    %1164 = vmatprep.subr.mxu0 0.0
    %1165 = vmatpush2.msra.mxu0 0.0
    %1166 = vmatprep.subr.mxu0 0.0
    %1167 = vmatpush2.msra.mxu0 0.0
    %1168 = vmatprep.subr.mxu0 0.0
    %1169 = vmatpush2.msra.mxu0 0.0
    %1170 = vmatprep.subr.mxu0 0.0
    %1171 = vmatpush2.msra.mxu0 0.0
    %1172 = vmatprep.subr.mxu0 0.0
    %1173 = vmatpush2.msra.mxu0 0.0
    %1174 = vmatprep.subr.mxu0 0.0
    %1175 = vmatpush2.msra.mxu0 0.0
    %1176 = vmatprep.subr.mxu0 0.0
    %1177 = vmatpush2.msra.mxu0 0.0
    %1178 = vmatprep.subr.mxu0 0.0
    %1179 = vmatpush2.msra.mxu0 0.0
    %1180 = vmatprep.subr.mxu0 0.0
    %1181 = vmatpush2.msra.mxu0 0.0
    %1182 = vmatprep.subr.mxu0 0.0
    %1183 = vmatpush2.msra.mxu0 0.0
    %1184 = vmatprep.subr.mxu0 0.0
    %1185 = vmatpush2.msra.mxu0 0.0
    %1186 = vmatprep.subr.mxu0 0.0
    %1187 = vmatpush2.msra.mxu0 0.0
    %1188 = vmatprep.subr.mxu0 0.0
    %1189 = vmatpush2.msra.mxu0 0.0
    %1190 = vmatprep.mubr.f32.mxu0 0.0
    %1191 = vmatmul.mubr.f32.gmra.mxu0 %v1103
    %v1192 = vpop.f32.mrf.mxu0
    %v1193 = vadd.f32 0.0, %v1192
    %v1194 = vpop.f32.mrf.mxu0
    %1195 = vmatprep.mubr.f32.mxu0 0.0
    %1196 = vmatmul.mubr.f32.gmra.mxu0 %v1106
    %v1197 = vpop.f32.mrf.mxu0
    %v1198 = vadd.f32 0.0, %v1197
    %v1199 = vpop.f32.mrf.mxu0
    %1200 = vmatprep.mubr.f32.mxu0 0.0
    %1201 = vmatmul.mubr.f32.gmra.mxu0 %v1109
    %v1202 = vpop.f32.mrf.mxu0
    %v1203 = vadd.f32 0.0, %v1202
    %v1204 = vpop.f32.mrf.mxu0
    %1205 = vmatprep.mubr.f32.mxu0 0.0
    %1206 = vmatmul.mubr.f32.gmra.mxu0 %v1112
    %v1207 = vpop.f32.mrf.mxu0
    %v1208 = vadd.f32 0.0, %v1207
    %v1209 = vpop.f32.mrf.mxu0
    %1210 = vmatprep.mubr.f32.mxu0 0.0
    %1211 = vmatmul.mubr.f32.gmra.mxu0 %v1115
    %v1212 = vpop.f32.mrf.mxu0
    %v1213 = vadd.f32 0.0, %v1212
    %v1214 = vpop.f32.mrf.mxu0
    %1215 = vmatprep.mubr.f32.mxu0 0.0
    %1216 = vmatmul.mubr.f32.gmra.mxu0 %v1118
    %v1217 = vpop.f32.mrf.mxu0
    %v1218 = vadd.f32 0.0, %v1217
    %v1219 = vpop.f32.mrf.mxu0
    %1220 = vmatprep.mubr.f32.mxu0 0.0
    %1221 = vmatmul.mubr.f32.gmra.mxu0 %v1121
    %v1222 = vpop.f32.mrf.mxu0
    %v1223 = vadd.f32 0.0, %v1222
    %v1224 = vpop.f32.mrf.mxu0
    %1225 = vmatprep.mubr.f32.mxu0 0.0
    %1226 = vmatmul.mubr.f32.gmra.mxu0 %v1124
    %v1227 = vpop.f32.mrf.mxu0
    %v1228 = vadd.f32 0.0, %v1227
    %v1229 = vpop.f32.mrf.mxu0
    %1230 = vdwg.mxu0
    %s1231 = scalar_lea.vmem %s2, 128
    %v1232 = vld [vmem:[%s1231] sm:$0xff]
    %v1233 = vld [vmem:[%s1231 + $0x8] sm:$0xff]
    %v1234 = vld [vmem:[%s1231 + $0x10] sm:$0xff]
    %v1235 = vld [vmem:[%s1231 + $0x18] sm:$0xff]
    %v1236 = vld [vmem:[%s1231 + $0x20] sm:$0xff]
    %v1237 = vld [vmem:[%s1231 + $0x28] sm:$0xff]
    %v1238 = vld [vmem:[%s1231 + $0x30] sm:$0xff]
    %v1239 = vld [vmem:[%s1231 + $0x38] sm:$0xff]
    %v1241 = vsel %vm78, %v1232, 0
    %v1244 = vsel %vm78, %v1233, 0
    %v1247 = vsel %vm78, %v1234, 0
    %v1250 = vsel %vm78, %v1235, 0
    %v1253 = vsel %vm78, %v1236, 0
    %v1256 = vsel %vm78, %v1237, 0
    %v1259 = vsel %vm78, %v1238, 0
    %v1262 = vsel %vm78, %v1239, 0
    %1264 = vmatprep.subr.mxu0 0.0
    %1265 = vmatpush1.msra.mxu0 0.0
    %1266 = vmatprep.subr.mxu0 0.0
    %1267 = vmatpush1.msra.mxu0 0.0
    %1268 = vmatprep.subr.mxu0 0.0
    %1269 = vmatpush1.msra.mxu0 0.0
    %1270 = vmatprep.subr.mxu0 0.0
    %1271 = vmatpush1.msra.mxu0 0.0
    %1272 = vmatprep.subr.mxu0 0.0
    %1273 = vmatpush1.msra.mxu0 0.0
    %1274 = vmatprep.subr.mxu0 0.0
    %1275 = vmatpush1.msra.mxu0 0.0
    %1276 = vmatprep.subr.mxu0 0.0
    %1277 = vmatpush1.msra.mxu0 0.0
    %1278 = vmatprep.subr.mxu0 0.0
    %1279 = vmatpush1.msra.mxu0 0.0
    %1280 = vmatprep.subr.mxu0 0.0
    %1281 = vmatpush1.msra.mxu0 0.0
    %1282 = vmatprep.subr.mxu0 0.0
    %1283 = vmatpush1.msra.mxu0 0.0
    %1284 = vmatprep.subr.mxu0 0.0
    %1285 = vmatpush1.msra.mxu0 0.0
    %1286 = vmatprep.subr.mxu0 0.0
    %1287 = vmatpush1.msra.mxu0 0.0
    %1288 = vmatprep.subr.mxu0 0.0
    %1289 = vmatpush1.msra.mxu0 %v50
    %1290 = vmatprep.subr.mxu0 0.0
    %1291 = vmatpush1.msra.mxu0 %v40
    %1292 = vmatprep.subr.mxu0 0.0
    %1293 = vmatpush1.msra.mxu0 %v30
    %1294 = vmatprep.subr.mxu0 0.0
    %1295 = vmatpush1.msra.mxu0 %v20
    %1296 = vmatprep.subr.mxu0 0.0
    %1297 = vmatpush2.msra.mxu0 0.0
    %1298 = vmatprep.subr.mxu0 0.0
    %1299 = vmatpush2.msra.mxu0 0.0
    %1300 = vmatprep.subr.mxu0 0.0
    %1301 = vmatpush2.msra.mxu0 0.0
    %1302 = vmatprep.subr.mxu0 0.0
    %1303 = vmatpush2.msra.mxu0 0.0
    %1304 = vmatprep.subr.mxu0 0.0
    %1305 = vmatpush2.msra.mxu0 0.0
    %1306 = vmatprep.subr.mxu0 0.0
    %1307 = vmatpush2.msra.mxu0 0.0
    %1308 = vmatprep.subr.mxu0 0.0
    %1309 = vmatpush2.msra.mxu0 0.0
    %1310 = vmatprep.subr.mxu0 0.0
    %1311 = vmatpush2.msra.mxu0 0.0
    %1312 = vmatprep.subr.mxu0 0.0
    %1313 = vmatpush2.msra.mxu0 0.0
    %1314 = vmatprep.subr.mxu0 0.0
    %1315 = vmatpush2.msra.mxu0 0.0
    %1316 = vmatprep.subr.mxu0 0.0
    %1317 = vmatpush2.msra.mxu0 0.0
    %1318 = vmatprep.subr.mxu0 0.0
    %1319 = vmatpush2.msra.mxu0 0.0
    %1320 = vmatprep.subr.mxu0 0.0
    %1321 = vmatpush2.msra.mxu0 0.0
    %1322 = vmatprep.subr.mxu0 0.0
    %1323 = vmatpush2.msra.mxu0 0.0
    %1324 = vmatprep.subr.mxu0 0.0
    %1325 = vmatpush2.msra.mxu0 0.0
    %1326 = vmatprep.subr.mxu0 0.0
    %1327 = vmatpush2.msra.mxu0 0.0
    %1328 = vmatprep.mubr.f32.mxu0 0.0
    %1329 = vmatmul.mubr.f32.gmra.mxu0 %v1241
    %v1330 = vpop.f32.mrf.mxu0
    %v1331 = vadd.f32 0.0, %v1330
    %v1332 = vpop.f32.mrf.mxu0
    %1333 = vmatprep.mubr.f32.mxu0 0.0
    %1334 = vmatmul.mubr.f32.gmra.mxu0 %v1244
    %v1335 = vpop.f32.mrf.mxu0
    %v1336 = vadd.f32 0.0, %v1335
    %v1337 = vpop.f32.mrf.mxu0
    %1338 = vmatprep.mubr.f32.mxu0 0.0
    %1339 = vmatmul.mubr.f32.gmra.mxu0 %v1247
    %v1340 = vpop.f32.mrf.mxu0
    %v1341 = vadd.f32 0.0, %v1340
    %v1342 = vpop.f32.mrf.mxu0
    %1343 = vmatprep.mubr.f32.mxu0 0.0
    %1344 = vmatmul.mubr.f32.gmra.mxu0 %v1250
    %v1345 = vpop.f32.mrf.mxu0
    %v1346 = vadd.f32 0.0, %v1345
    %v1347 = vpop.f32.mrf.mxu0
    %1348 = vmatprep.mubr.f32.mxu0 0.0
    %1349 = vmatmul.mubr.f32.gmra.mxu0 %v1253
    %v1350 = vpop.f32.mrf.mxu0
    %v1351 = vadd.f32 0.0, %v1350
    %v1352 = vpop.f32.mrf.mxu0
    %1353 = vmatprep.mubr.f32.mxu0 0.0
    %1354 = vmatmul.mubr.f32.gmra.mxu0 %v1256
    %v1355 = vpop.f32.mrf.mxu0
    %v1356 = vadd.f32 0.0, %v1355
    %v1357 = vpop.f32.mrf.mxu0
    %1358 = vmatprep.mubr.f32.mxu0 0.0
    %1359 = vmatmul.mubr.f32.gmra.mxu0 %v1259
    %v1360 = vpop.f32.mrf.mxu0
    %v1361 = vadd.f32 0.0, %v1360
    %v1362 = vpop.f32.mrf.mxu0
    %1363 = vmatprep.mubr.f32.mxu0 0.0
    %1364 = vmatmul.mubr.f32.gmra.mxu0 %v1262
    %v1365 = vpop.f32.mrf.mxu0
    %v1366 = vadd.f32 0.0, %v1365
    %v1367 = vpop.f32.mrf.mxu0
    %1368 = vdwg.mxu0
    %s1369 = scalar_lea.vmem %s2, 192
    %v1370 = vld [vmem:[%s1369] sm:$0xff]
    %v1371 = vld [vmem:[%s1369 + $0x8] sm:$0xff]
    %v1372 = vld [vmem:[%s1369 + $0x10] sm:$0xff]
    %v1373 = vld [vmem:[%s1369 + $0x18] sm:$0xff]
    %v1374 = vld [vmem:[%s1369 + $0x20] sm:$0xff]
    %v1375 = vld [vmem:[%s1369 + $0x28] sm:$0xff]
    %v1376 = vld [vmem:[%s1369 + $0x30] sm:$0xff]
    %v1377 = vld [vmem:[%s1369 + $0x38] sm:$0xff]
    %v1379 = vsel %vm78, %v1370, 0
    %v1382 = vsel %vm78, %v1371, 0
    %v1385 = vsel %vm78, %v1372, 0
    %v1388 = vsel %vm78, %v1373, 0
    %v1391 = vsel %vm78, %v1374, 0
    %v1394 = vsel %vm78, %v1375, 0
    %v1397 = vsel %vm78, %v1376, 0
    %v1400 = vsel %vm78, %v1377, 0
    %1402 = vmatprep.subr.mxu0 0.0
    %1403 = vmatpush1.msra.mxu0 0.0
    %1404 = vmatprep.subr.mxu0 0.0
    %1405 = vmatpush1.msra.mxu0 0.0
    %1406 = vmatprep.subr.mxu0 0.0
    %1407 = vmatpush1.msra.mxu0 0.0
    %1408 = vmatprep.subr.mxu0 0.0
    %1409 = vmatpush1.msra.mxu0 0.0
    %1410 = vmatprep.subr.mxu0 0.0
    %1411 = vmatpush1.msra.mxu0 0.0
    %1412 = vmatprep.subr.mxu0 0.0
    %1413 = vmatpush1.msra.mxu0 0.0
    %1414 = vmatprep.subr.mxu0 0.0
    %1415 = vmatpush1.msra.mxu0 0.0
    %1416 = vmatprep.subr.mxu0 0.0
    %1417 = vmatpush1.msra.mxu0 0.0
    %1418 = vmatprep.subr.mxu0 0.0
    %1419 = vmatpush1.msra.mxu0 0.0
    %1420 = vmatprep.subr.mxu0 0.0
    %1421 = vmatpush1.msra.mxu0 0.0
    %1422 = vmatprep.subr.mxu0 0.0
    %1423 = vmatpush1.msra.mxu0 0.0
    %1424 = vmatprep.subr.mxu0 0.0
    %1425 = vmatpush1.msra.mxu0 0.0
    %1426 = vmatprep.subr.mxu0 0.0
    %1427 = vmatpush1.msra.mxu0 %v51
    %1428 = vmatprep.subr.mxu0 0.0
    %1429 = vmatpush1.msra.mxu0 %v41
    %1430 = vmatprep.subr.mxu0 0.0
    %1431 = vmatpush1.msra.mxu0 %v31
    %1432 = vmatprep.subr.mxu0 0.0
    %1433 = vmatpush1.msra.mxu0 %v21
    %1434 = vmatprep.subr.mxu0 0.0
    %1435 = vmatpush2.msra.mxu0 0.0
    %1436 = vmatprep.subr.mxu0 0.0
    %1437 = vmatpush2.msra.mxu0 0.0
    %1438 = vmatprep.subr.mxu0 0.0
    %1439 = vmatpush2.msra.mxu0 0.0
    %1440 = vmatprep.subr.mxu0 0.0
    %1441 = vmatpush2.msra.mxu0 0.0
    %1442 = vmatprep.subr.mxu0 0.0
    %1443 = vmatpush2.msra.mxu0 0.0
    %1444 = vmatprep.subr.mxu0 0.0
    %1445 = vmatpush2.msra.mxu0 0.0
    %1446 = vmatprep.subr.mxu0 0.0
    %1447 = vmatpush2.msra.mxu0 0.0
    %1448 = vmatprep.subr.mxu0 0.0
    %1449 = vmatpush2.msra.mxu0 0.0
    %1450 = vmatprep.subr.mxu0 0.0
    %1451 = vmatpush2.msra.mxu0 0.0
    %1452 = vmatprep.subr.mxu0 0.0
    %1453 = vmatpush2.msra.mxu0 0.0
    %1454 = vmatprep.subr.mxu0 0.0
    %1455 = vmatpush2.msra.mxu0 0.0
    %1456 = vmatprep.subr.mxu0 0.0
    %1457 = vmatpush2.msra.mxu0 0.0
    %1458 = vmatprep.subr.mxu0 0.0
    %1459 = vmatpush2.msra.mxu0 0.0
    %1460 = vmatprep.subr.mxu0 0.0
    %1461 = vmatpush2.msra.mxu0 0.0
    %1462 = vmatprep.subr.mxu0 0.0
    %1463 = vmatpush2.msra.mxu0 0.0
    %1464 = vmatprep.subr.mxu0 0.0
    %1465 = vmatpush2.msra.mxu0 0.0
    %1466 = vmatprep.mubr.f32.mxu0 0.0
    %1467 = vmatmul.mubr.f32.gmra.mxu0 %v1379
    %v1468 = vpop.f32.mrf.mxu0
    %v1469 = vadd.f32 0.0, %v1468
    %v1470 = vpop.f32.mrf.mxu0
    %1471 = vmatprep.mubr.f32.mxu0 0.0
    %1472 = vmatmul.mubr.f32.gmra.mxu0 %v1382
    %v1473 = vpop.f32.mrf.mxu0
    %v1474 = vadd.f32 0.0, %v1473
    %v1475 = vpop.f32.mrf.mxu0
    %1476 = vmatprep.mubr.f32.mxu0 0.0
    %1477 = vmatmul.mubr.f32.gmra.mxu0 %v1385
    %v1478 = vpop.f32.mrf.mxu0
    %v1479 = vadd.f32 0.0, %v1478
    %v1480 = vpop.f32.mrf.mxu0
    %1481 = vmatprep.mubr.f32.mxu0 0.0
    %1482 = vmatmul.mubr.f32.gmra.mxu0 %v1388
    %v1483 = vpop.f32.mrf.mxu0
    %v1484 = vadd.f32 0.0, %v1483
    %v1485 = vpop.f32.mrf.mxu0
    %1486 = vmatprep.mubr.f32.mxu0 0.0
    %1487 = vmatmul.mubr.f32.gmra.mxu0 %v1391
    %v1488 = vpop.f32.mrf.mxu0
    %v1489 = vadd.f32 0.0, %v1488
    %v1490 = vpop.f32.mrf.mxu0
    %1491 = vmatprep.mubr.f32.mxu0 0.0
    %1492 = vmatmul.mubr.f32.gmra.mxu0 %v1394
    %v1493 = vpop.f32.mrf.mxu0
    %v1494 = vadd.f32 0.0, %v1493
    %v1495 = vpop.f32.mrf.mxu0
    %1496 = vmatprep.mubr.f32.mxu0 0.0
    %1497 = vmatmul.mubr.f32.gmra.mxu0 %v1397
    %v1498 = vpop.f32.mrf.mxu0
    %v1499 = vadd.f32 0.0, %v1498
    %v1500 = vpop.f32.mrf.mxu0
    %1501 = vmatprep.mubr.f32.mxu0 0.0
    %1502 = vmatmul.mubr.f32.gmra.mxu0 %v1400
    %v1503 = vpop.f32.mrf.mxu0
    %v1504 = vadd.f32 0.0, %v1503
    %v1505 = vpop.f32.mrf.mxu0
    %1506 = vdwg.mxu0
    %s1507 = scalar_lea.vmem %s2, 256
    %v1508 = vld [vmem:[%s1507] sm:$0xff]
    %v1509 = vld [vmem:[%s1507 + $0x8] sm:$0xff]
    %v1510 = vld [vmem:[%s1507 + $0x10] sm:$0xff]
    %v1511 = vld [vmem:[%s1507 + $0x18] sm:$0xff]
    %v1512 = vld [vmem:[%s1507 + $0x20] sm:$0xff]
    %v1513 = vld [vmem:[%s1507 + $0x28] sm:$0xff]
    %v1514 = vld [vmem:[%s1507 + $0x30] sm:$0xff]
    %v1515 = vld [vmem:[%s1507 + $0x38] sm:$0xff]
    %v1517 = vsel %vm78, %v1508, 0
    %v1520 = vsel %vm78, %v1509, 0
    %v1523 = vsel %vm78, %v1510, 0
    %v1526 = vsel %vm78, %v1511, 0
    %v1529 = vsel %vm78, %v1512, 0
    %v1532 = vsel %vm78, %v1513, 0
    %v1535 = vsel %vm78, %v1514, 0
    %v1538 = vsel %vm78, %v1515, 0
    %1540 = vmatprep.subr.mxu0 0.0
    %1541 = vmatpush1.msra.mxu0 0.0
    %1542 = vmatprep.subr.mxu0 0.0
    %1543 = vmatpush1.msra.mxu0 0.0
    %1544 = vmatprep.subr.mxu0 0.0
    %1545 = vmatpush1.msra.mxu0 0.0
    %1546 = vmatprep.subr.mxu0 0.0
    %1547 = vmatpush1.msra.mxu0 0.0
    %1548 = vmatprep.subr.mxu0 0.0
    %1549 = vmatpush1.msra.mxu0 0.0
    %1550 = vmatprep.subr.mxu0 0.0
    %1551 = vmatpush1.msra.mxu0 0.0
    %1552 = vmatprep.subr.mxu0 0.0
    %1553 = vmatpush1.msra.mxu0 0.0
    %1554 = vmatprep.subr.mxu0 0.0
    %1555 = vmatpush1.msra.mxu0 0.0
    %1556 = vmatprep.subr.mxu0 0.0
    %1557 = vmatpush1.msra.mxu0 0.0
    %1558 = vmatprep.subr.mxu0 0.0
    %1559 = vmatpush1.msra.mxu0 0.0
    %1560 = vmatprep.subr.mxu0 0.0
    %1561 = vmatpush1.msra.mxu0 0.0
    %1562 = vmatprep.subr.mxu0 0.0
    %1563 = vmatpush1.msra.mxu0 0.0
    %1564 = vmatprep.subr.mxu0 0.0
    %1565 = vmatpush1.msra.mxu0 %v52
    %1566 = vmatprep.subr.mxu0 0.0
    %1567 = vmatpush1.msra.mxu0 %v42
    %1568 = vmatprep.subr.mxu0 0.0
    %1569 = vmatpush1.msra.mxu0 %v32
    %1570 = vmatprep.subr.mxu0 0.0
    %1571 = vmatpush1.msra.mxu0 %v22
    %1572 = vmatprep.subr.mxu0 0.0
    %1573 = vmatpush2.msra.mxu0 0.0
    %1574 = vmatprep.subr.mxu0 0.0
    %1575 = vmatpush2.msra.mxu0 0.0
    %1576 = vmatprep.subr.mxu0 0.0
    %1577 = vmatpush2.msra.mxu0 0.0
    %1578 = vmatprep.subr.mxu0 0.0
    %1579 = vmatpush2.msra.mxu0 0.0
    %1580 = vmatprep.subr.mxu0 0.0
    %1581 = vmatpush2.msra.mxu0 0.0
    %1582 = vmatprep.subr.mxu0 0.0
    %1583 = vmatpush2.msra.mxu0 0.0
    %1584 = vmatprep.subr.mxu0 0.0
    %1585 = vmatpush2.msra.mxu0 0.0
    %1586 = vmatprep.subr.mxu0 0.0
    %1587 = vmatpush2.msra.mxu0 0.0
    %1588 = vmatprep.subr.mxu0 0.0
    %1589 = vmatpush2.msra.mxu0 0.0
    %1590 = vmatprep.subr.mxu0 0.0
    %1591 = vmatpush2.msra.mxu0 0.0
    %1592 = vmatprep.subr.mxu0 0.0
    %1593 = vmatpush2.msra.mxu0 0.0
    %1594 = vmatprep.subr.mxu0 0.0
    %1595 = vmatpush2.msra.mxu0 0.0
    %1596 = vmatprep.subr.mxu0 0.0
    %1597 = vmatpush2.msra.mxu0 0.0
    %1598 = vmatprep.subr.mxu0 0.0
    %1599 = vmatpush2.msra.mxu0 0.0
    %1600 = vmatprep.subr.mxu0 0.0
    %1601 = vmatpush2.msra.mxu0 0.0
    %1602 = vmatprep.subr.mxu0 0.0
    %1603 = vmatpush2.msra.mxu0 0.0
    %1604 = vmatprep.mubr.f32.mxu0 0.0
    %1605 = vmatmul.mubr.f32.gmra.mxu0 %v1517
    %v1606 = vpop.f32.mrf.mxu0
    %v1607 = vadd.f32 0.0, %v1606
    %v1608 = vpop.f32.mrf.mxu0
    %1609 = vmatprep.mubr.f32.mxu0 0.0
    %1610 = vmatmul.mubr.f32.gmra.mxu0 %v1520
    %v1611 = vpop.f32.mrf.mxu0
    %v1612 = vadd.f32 0.0, %v1611
    %v1613 = vpop.f32.mrf.mxu0
    %1614 = vmatprep.mubr.f32.mxu0 0.0
    %1615 = vmatmul.mubr.f32.gmra.mxu0 %v1523
    %v1616 = vpop.f32.mrf.mxu0
    %v1617 = vadd.f32 0.0, %v1616
    %v1618 = vpop.f32.mrf.mxu0
    %1619 = vmatprep.mubr.f32.mxu0 0.0
    %1620 = vmatmul.mubr.f32.gmra.mxu0 %v1526
    %v1621 = vpop.f32.mrf.mxu0
    %v1622 = vadd.f32 0.0, %v1621
    %v1623 = vpop.f32.mrf.mxu0
    %1624 = vmatprep.mubr.f32.mxu0 0.0
    %1625 = vmatmul.mubr.f32.gmra.mxu0 %v1529
    %v1626 = vpop.f32.mrf.mxu0
    %v1627 = vadd.f32 0.0, %v1626
    %v1628 = vpop.f32.mrf.mxu0
    %1629 = vmatprep.mubr.f32.mxu0 0.0
    %1630 = vmatmul.mubr.f32.gmra.mxu0 %v1532
    %v1631 = vpop.f32.mrf.mxu0
    %v1632 = vadd.f32 0.0, %v1631
    %v1633 = vpop.f32.mrf.mxu0
    %1634 = vmatprep.mubr.f32.mxu0 0.0
    %1635 = vmatmul.mubr.f32.gmra.mxu0 %v1535
    %v1636 = vpop.f32.mrf.mxu0
    %v1637 = vadd.f32 0.0, %v1636
    %v1638 = vpop.f32.mrf.mxu0
    %1639 = vmatprep.mubr.f32.mxu0 0.0
    %1640 = vmatmul.mubr.f32.gmra.mxu0 %v1538
    %v1641 = vpop.f32.mrf.mxu0
    %v1642 = vadd.f32 0.0, %v1641
    %v1643 = vpop.f32.mrf.mxu0
    %1644 = vdwg.mxu0
    %s1645 = scalar_lea.vmem %s2, 320
    %v1646 = vld [vmem:[%s1645] sm:$0xff]
    %v1647 = vld [vmem:[%s1645 + $0x8] sm:$0xff]
    %v1648 = vld [vmem:[%s1645 + $0x10] sm:$0xff]
    %v1649 = vld [vmem:[%s1645 + $0x18] sm:$0xff]
    %v1650 = vld [vmem:[%s1645 + $0x20] sm:$0xff]
    %v1651 = vld [vmem:[%s1645 + $0x28] sm:$0xff]
    %v1652 = vld [vmem:[%s1645 + $0x30] sm:$0xff]
    %v1653 = vld [vmem:[%s1645 + $0x38] sm:$0xff]
    %v1655 = vsel %vm78, %v1646, 0
    %v1658 = vsel %vm78, %v1647, 0
    %v1661 = vsel %vm78, %v1648, 0
    %v1664 = vsel %vm78, %v1649, 0
    %v1667 = vsel %vm78, %v1650, 0
    %v1670 = vsel %vm78, %v1651, 0
    %v1673 = vsel %vm78, %v1652, 0
    %v1676 = vsel %vm78, %v1653, 0
    %1678 = vmatprep.subr.mxu0 0.0
    %1679 = vmatpush1.msra.mxu0 0.0
    %1680 = vmatprep.subr.mxu0 0.0
    %1681 = vmatpush1.msra.mxu0 0.0
    %1682 = vmatprep.subr.mxu0 0.0
    %1683 = vmatpush1.msra.mxu0 0.0
    %1684 = vmatprep.subr.mxu0 0.0
    %1685 = vmatpush1.msra.mxu0 0.0
    %1686 = vmatprep.subr.mxu0 0.0
    %1687 = vmatpush1.msra.mxu0 0.0
    %1688 = vmatprep.subr.mxu0 0.0
    %1689 = vmatpush1.msra.mxu0 0.0
    %1690 = vmatprep.subr.mxu0 0.0
    %1691 = vmatpush1.msra.mxu0 0.0
    %1692 = vmatprep.subr.mxu0 0.0
    %1693 = vmatpush1.msra.mxu0 0.0
    %1694 = vmatprep.subr.mxu0 0.0
    %1695 = vmatpush1.msra.mxu0 0.0
    %1696 = vmatprep.subr.mxu0 0.0
    %1697 = vmatpush1.msra.mxu0 0.0
    %1698 = vmatprep.subr.mxu0 0.0
    %1699 = vmatpush1.msra.mxu0 0.0
    %1700 = vmatprep.subr.mxu0 0.0
    %1701 = vmatpush1.msra.mxu0 0.0
    %1702 = vmatprep.subr.mxu0 0.0
    %1703 = vmatpush1.msra.mxu0 %v53
    %1704 = vmatprep.subr.mxu0 0.0
    %1705 = vmatpush1.msra.mxu0 %v43
    %1706 = vmatprep.subr.mxu0 0.0
    %1707 = vmatpush1.msra.mxu0 %v33
    %1708 = vmatprep.subr.mxu0 0.0
    %1709 = vmatpush1.msra.mxu0 %v23
    %1710 = vmatprep.subr.mxu0 0.0
    %1711 = vmatpush2.msra.mxu0 0.0
    %1712 = vmatprep.subr.mxu0 0.0
    %1713 = vmatpush2.msra.mxu0 0.0
    %1714 = vmatprep.subr.mxu0 0.0
    %1715 = vmatpush2.msra.mxu0 0.0
    %1716 = vmatprep.subr.mxu0 0.0
    %1717 = vmatpush2.msra.mxu0 0.0
    %1718 = vmatprep.subr.mxu0 0.0
    %1719 = vmatpush2.msra.mxu0 0.0
    %1720 = vmatprep.subr.mxu0 0.0
    %1721 = vmatpush2.msra.mxu0 0.0
    %1722 = vmatprep.subr.mxu0 0.0
    %1723 = vmatpush2.msra.mxu0 0.0
    %1724 = vmatprep.subr.mxu0 0.0
    %1725 = vmatpush2.msra.mxu0 0.0
    %1726 = vmatprep.subr.mxu0 0.0
    %1727 = vmatpush2.msra.mxu0 0.0
    %1728 = vmatprep.subr.mxu0 0.0
    %1729 = vmatpush2.msra.mxu0 0.0
    %1730 = vmatprep.subr.mxu0 0.0
    %1731 = vmatpush2.msra.mxu0 0.0
    %1732 = vmatprep.subr.mxu0 0.0
    %1733 = vmatpush2.msra.mxu0 0.0
    %1734 = vmatprep.subr.mxu0 0.0
    %1735 = vmatpush2.msra.mxu0 0.0
    %1736 = vmatprep.subr.mxu0 0.0
    %1737 = vmatpush2.msra.mxu0 0.0
    %1738 = vmatprep.subr.mxu0 0.0
    %1739 = vmatpush2.msra.mxu0 0.0
    %1740 = vmatprep.subr.mxu0 0.0
    %1741 = vmatpush2.msra.mxu0 0.0
    %1742 = vmatprep.mubr.f32.mxu0 0.0
    %1743 = vmatmul.mubr.f32.gmra.mxu0 %v1655
    %v1744 = vpop.f32.mrf.mxu0
    %v1745 = vadd.f32 0.0, %v1744
    %v1746 = vpop.f32.mrf.mxu0
    %1747 = vmatprep.mubr.f32.mxu0 0.0
    %1748 = vmatmul.mubr.f32.gmra.mxu0 %v1658
    %v1749 = vpop.f32.mrf.mxu0
    %v1750 = vadd.f32 0.0, %v1749
    %v1751 = vpop.f32.mrf.mxu0
    %1752 = vmatprep.mubr.f32.mxu0 0.0
    %1753 = vmatmul.mubr.f32.gmra.mxu0 %v1661
    %v1754 = vpop.f32.mrf.mxu0
    %v1755 = vadd.f32 0.0, %v1754
    %v1756 = vpop.f32.mrf.mxu0
    %1757 = vmatprep.mubr.f32.mxu0 0.0
    %1758 = vmatmul.mubr.f32.gmra.mxu0 %v1664
    %v1759 = vpop.f32.mrf.mxu0
    %v1760 = vadd.f32 0.0, %v1759
    %v1761 = vpop.f32.mrf.mxu0
    %1762 = vmatprep.mubr.f32.mxu0 0.0
    %1763 = vmatmul.mubr.f32.gmra.mxu0 %v1667
    %v1764 = vpop.f32.mrf.mxu0
    %v1765 = vadd.f32 0.0, %v1764
    %v1766 = vpop.f32.mrf.mxu0
    %1767 = vmatprep.mubr.f32.mxu0 0.0
    %1768 = vmatmul.mubr.f32.gmra.mxu0 %v1670
    %v1769 = vpop.f32.mrf.mxu0
    %v1770 = vadd.f32 0.0, %v1769
    %v1771 = vpop.f32.mrf.mxu0
    %1772 = vmatprep.mubr.f32.mxu0 0.0
    %1773 = vmatmul.mubr.f32.gmra.mxu0 %v1673
    %v1774 = vpop.f32.mrf.mxu0
    %v1775 = vadd.f32 0.0, %v1774
    %v1776 = vpop.f32.mrf.mxu0
    %1777 = vmatprep.mubr.f32.mxu0 0.0
    %1778 = vmatmul.mubr.f32.gmra.mxu0 %v1676
    %v1779 = vpop.f32.mrf.mxu0
    %v1780 = vadd.f32 0.0, %v1779
    %v1781 = vpop.f32.mrf.mxu0
    %1782 = vdwg.mxu0
    %s1783 = scalar_lea.vmem %s2, 384
    %v1784 = vld [vmem:[%s1783] sm:$0xff]
    %v1785 = vld [vmem:[%s1783 + $0x8] sm:$0xff]
    %v1786 = vld [vmem:[%s1783 + $0x10] sm:$0xff]
    %v1787 = vld [vmem:[%s1783 + $0x18] sm:$0xff]
    %v1788 = vld [vmem:[%s1783 + $0x20] sm:$0xff]
    %v1789 = vld [vmem:[%s1783 + $0x28] sm:$0xff]
    %v1790 = vld [vmem:[%s1783 + $0x30] sm:$0xff]
    %v1791 = vld [vmem:[%s1783 + $0x38] sm:$0xff]
    %v1793 = vsel %vm78, %v1784, 0
    %v1796 = vsel %vm78, %v1785, 0
    %v1799 = vsel %vm78, %v1786, 0
    %v1802 = vsel %vm78, %v1787, 0
    %v1805 = vsel %vm78, %v1788, 0
    %v1808 = vsel %vm78, %v1789, 0
    %v1811 = vsel %vm78, %v1790, 0
    %v1814 = vsel %vm78, %v1791, 0
    %1816 = vmatprep.subr.mxu0 0.0
    %1817 = vmatpush1.msra.mxu0 0.0
    %1818 = vmatprep.subr.mxu0 0.0
    %1819 = vmatpush1.msra.mxu0 0.0
    %1820 = vmatprep.subr.mxu0 0.0
    %1821 = vmatpush1.msra.mxu0 0.0
    %1822 = vmatprep.subr.mxu0 0.0
    %1823 = vmatpush1.msra.mxu0 0.0
    %1824 = vmatprep.subr.mxu0 0.0
    %1825 = vmatpush1.msra.mxu0 0.0
    %1826 = vmatprep.subr.mxu0 0.0
    %1827 = vmatpush1.msra.mxu0 0.0
    %1828 = vmatprep.subr.mxu0 0.0
    %1829 = vmatpush1.msra.mxu0 0.0
    %1830 = vmatprep.subr.mxu0 0.0
    %1831 = vmatpush1.msra.mxu0 0.0
    %1832 = vmatprep.subr.mxu0 0.0
    %1833 = vmatpush1.msra.mxu0 0.0
    %1834 = vmatprep.subr.mxu0 0.0
    %1835 = vmatpush1.msra.mxu0 0.0
    %1836 = vmatprep.subr.mxu0 0.0
    %1837 = vmatpush1.msra.mxu0 0.0
    %1838 = vmatprep.subr.mxu0 0.0
    %1839 = vmatpush1.msra.mxu0 0.0
    %1840 = vmatprep.subr.mxu0 0.0
    %1841 = vmatpush1.msra.mxu0 %v54
    %1842 = vmatprep.subr.mxu0 0.0
    %1843 = vmatpush1.msra.mxu0 %v44
    %1844 = vmatprep.subr.mxu0 0.0
    %1845 = vmatpush1.msra.mxu0 %v34
    %1846 = vmatprep.subr.mxu0 0.0
    %1847 = vmatpush1.msra.mxu0 %v24
    %1848 = vmatprep.subr.mxu0 0.0
    %1849 = vmatpush2.msra.mxu0 0.0
    %1850 = vmatprep.subr.mxu0 0.0
    %1851 = vmatpush2.msra.mxu0 0.0
    %1852 = vmatprep.subr.mxu0 0.0
    %1853 = vmatpush2.msra.mxu0 0.0
    %1854 = vmatprep.subr.mxu0 0.0
    %1855 = vmatpush2.msra.mxu0 0.0
    %1856 = vmatprep.subr.mxu0 0.0
    %1857 = vmatpush2.msra.mxu0 0.0
    %1858 = vmatprep.subr.mxu0 0.0
    %1859 = vmatpush2.msra.mxu0 0.0
    %1860 = vmatprep.subr.mxu0 0.0
    %1861 = vmatpush2.msra.mxu0 0.0
    %1862 = vmatprep.subr.mxu0 0.0
    %1863 = vmatpush2.msra.mxu0 0.0
    %1864 = vmatprep.subr.mxu0 0.0
    %1865 = vmatpush2.msra.mxu0 0.0
    %1866 = vmatprep.subr.mxu0 0.0
    %1867 = vmatpush2.msra.mxu0 0.0
    %1868 = vmatprep.subr.mxu0 0.0
    %1869 = vmatpush2.msra.mxu0 0.0
    %1870 = vmatprep.subr.mxu0 0.0
    %1871 = vmatpush2.msra.mxu0 0.0
    %1872 = vmatprep.subr.mxu0 0.0
    %1873 = vmatpush2.msra.mxu0 0.0
    %1874 = vmatprep.subr.mxu0 0.0
    %1875 = vmatpush2.msra.mxu0 0.0
    %1876 = vmatprep.subr.mxu0 0.0
    %1877 = vmatpush2.msra.mxu0 0.0
    %1878 = vmatprep.subr.mxu0 0.0
    %1879 = vmatpush2.msra.mxu0 0.0
    %1880 = vmatprep.mubr.f32.mxu0 0.0
    %1881 = vmatmul.mubr.f32.gmra.mxu0 %v1793
    %v1882 = vpop.f32.mrf.mxu0
    %v1883 = vadd.f32 0.0, %v1882
    %v1884 = vpop.f32.mrf.mxu0
    %1885 = vmatprep.mubr.f32.mxu0 0.0
    %1886 = vmatmul.mubr.f32.gmra.mxu0 %v1796
    %v1887 = vpop.f32.mrf.mxu0
    %v1888 = vadd.f32 0.0, %v1887
    %v1889 = vpop.f32.mrf.mxu0
    %1890 = vmatprep.mubr.f32.mxu0 0.0
    %1891 = vmatmul.mubr.f32.gmra.mxu0 %v1799
    %v1892 = vpop.f32.mrf.mxu0
    %v1893 = vadd.f32 0.0, %v1892
    %v1894 = vpop.f32.mrf.mxu0
    %1895 = vmatprep.mubr.f32.mxu0 0.0
    %1896 = vmatmul.mubr.f32.gmra.mxu0 %v1802
    %v1897 = vpop.f32.mrf.mxu0
    %v1898 = vadd.f32 0.0, %v1897
    %v1899 = vpop.f32.mrf.mxu0
    %1900 = vmatprep.mubr.f32.mxu0 0.0
    %1901 = vmatmul.mubr.f32.gmra.mxu0 %v1805
    %v1902 = vpop.f32.mrf.mxu0
    %v1903 = vadd.f32 0.0, %v1902
    %v1904 = vpop.f32.mrf.mxu0
    %1905 = vmatprep.mubr.f32.mxu0 0.0
    %1906 = vmatmul.mubr.f32.gmra.mxu0 %v1808
    %v1907 = vpop.f32.mrf.mxu0
    %v1908 = vadd.f32 0.0, %v1907
    %v1909 = vpop.f32.mrf.mxu0
    %1910 = vmatprep.mubr.f32.mxu0 0.0
    %1911 = vmatmul.mubr.f32.gmra.mxu0 %v1811
    %v1912 = vpop.f32.mrf.mxu0
    %v1913 = vadd.f32 0.0, %v1912
    %v1914 = vpop.f32.mrf.mxu0
    %1915 = vmatprep.mubr.f32.mxu0 0.0
    %1916 = vmatmul.mubr.f32.gmra.mxu0 %v1814
    %v1917 = vpop.f32.mrf.mxu0
    %v1918 = vadd.f32 0.0, %v1917
    %v1919 = vpop.f32.mrf.mxu0
    %1920 = vdwg.mxu0
    %s1921 = scalar_lea.vmem %s2, 448
    %v1922 = vld [vmem:[%s1921] sm:$0xff]
    %v1923 = vld [vmem:[%s1921 + $0x8] sm:$0xff]
    %v1924 = vld [vmem:[%s1921 + $0x10] sm:$0xff]
    %v1925 = vld [vmem:[%s1921 + $0x18] sm:$0xff]
    %v1926 = vld [vmem:[%s1921 + $0x20] sm:$0xff]
    %v1927 = vld [vmem:[%s1921 + $0x28] sm:$0xff]
    %v1928 = vld [vmem:[%s1921 + $0x30] sm:$0xff]
    %v1929 = vld [vmem:[%s1921 + $0x38] sm:$0xff]
    %v1931 = vsel %vm78, %v1922, 0
    %v1934 = vsel %vm78, %v1923, 0
    %v1937 = vsel %vm78, %v1924, 0
    %v1940 = vsel %vm78, %v1925, 0
    %v1943 = vsel %vm78, %v1926, 0
    %v1946 = vsel %vm78, %v1927, 0
    %v1949 = vsel %vm78, %v1928, 0
    %v1952 = vsel %vm78, %v1929, 0
    %1954 = vmatprep.subr.mxu0 0.0
    %1955 = vmatpush1.msra.mxu0 0.0
    %1956 = vmatprep.subr.mxu0 0.0
    %1957 = vmatpush1.msra.mxu0 0.0
    %1958 = vmatprep.subr.mxu0 0.0
    %1959 = vmatpush1.msra.mxu0 0.0
    %1960 = vmatprep.subr.mxu0 0.0
    %1961 = vmatpush1.msra.mxu0 0.0
    %1962 = vmatprep.subr.mxu0 0.0
    %1963 = vmatpush1.msra.mxu0 0.0
    %1964 = vmatprep.subr.mxu0 0.0
    %1965 = vmatpush1.msra.mxu0 0.0
    %1966 = vmatprep.subr.mxu0 0.0
    %1967 = vmatpush1.msra.mxu0 0.0
    %1968 = vmatprep.subr.mxu0 0.0
    %1969 = vmatpush1.msra.mxu0 0.0
    %1970 = vmatprep.subr.mxu0 0.0
    %1971 = vmatpush1.msra.mxu0 0.0
    %1972 = vmatprep.subr.mxu0 0.0
    %1973 = vmatpush1.msra.mxu0 0.0
    %1974 = vmatprep.subr.mxu0 0.0
    %1975 = vmatpush1.msra.mxu0 0.0
    %1976 = vmatprep.subr.mxu0 0.0
    %1977 = vmatpush1.msra.mxu0 0.0
    %1978 = vmatprep.subr.mxu0 0.0
    %1979 = vmatpush1.msra.mxu0 %v55
    %1980 = vmatprep.subr.mxu0 0.0
    %1981 = vmatpush1.msra.mxu0 %v45
    %1982 = vmatprep.subr.mxu0 0.0
    %1983 = vmatpush1.msra.mxu0 %v35
    %1984 = vmatprep.subr.mxu0 0.0
    %1985 = vmatpush1.msra.mxu0 %v25
    %1986 = vmatprep.subr.mxu0 0.0
    %1987 = vmatpush2.msra.mxu0 0.0
    %1988 = vmatprep.subr.mxu0 0.0
    %1989 = vmatpush2.msra.mxu0 0.0
    %1990 = vmatprep.subr.mxu0 0.0
    %1991 = vmatpush2.msra.mxu0 0.0
    %1992 = vmatprep.subr.mxu0 0.0
    %1993 = vmatpush2.msra.mxu0 0.0
    %1994 = vmatprep.subr.mxu0 0.0
    %1995 = vmatpush2.msra.mxu0 0.0
    %1996 = vmatprep.subr.mxu0 0.0
    %1997 = vmatpush2.msra.mxu0 0.0
    %1998 = vmatprep.subr.mxu0 0.0
    %1999 = vmatpush2.msra.mxu0 0.0
    %2000 = vmatprep.subr.mxu0 0.0
    %2001 = vmatpush2.msra.mxu0 0.0
    %2002 = vmatprep.subr.mxu0 0.0
    %2003 = vmatpush2.msra.mxu0 0.0
    %2004 = vmatprep.subr.mxu0 0.0
    %2005 = vmatpush2.msra.mxu0 0.0
    %2006 = vmatprep.subr.mxu0 0.0
    %2007 = vmatpush2.msra.mxu0 0.0
    %2008 = vmatprep.subr.mxu0 0.0
    %2009 = vmatpush2.msra.mxu0 0.0
    %2010 = vmatprep.subr.mxu0 0.0
    %2011 = vmatpush2.msra.mxu0 0.0
    %2012 = vmatprep.subr.mxu0 0.0
    %2013 = vmatpush2.msra.mxu0 0.0
    %2014 = vmatprep.subr.mxu0 0.0
    %2015 = vmatpush2.msra.mxu0 0.0
    %2016 = vmatprep.subr.mxu0 0.0
    %2017 = vmatpush2.msra.mxu0 0.0
    %2018 = vmatprep.mubr.f32.mxu0 0.0
    %2019 = vmatmul.mubr.f32.gmra.mxu0 %v1931
    %v2020 = vpop.f32.mrf.mxu0
    %v2021 = vadd.f32 0.0, %v2020
    %v2022 = vpop.f32.mrf.mxu0
    %2023 = vmatprep.mubr.f32.mxu0 0.0
    %2024 = vmatmul.mubr.f32.gmra.mxu0 %v1934
    %v2025 = vpop.f32.mrf.mxu0
    %v2026 = vadd.f32 0.0, %v2025
    %v2027 = vpop.f32.mrf.mxu0
    %2028 = vmatprep.mubr.f32.mxu0 0.0
    %2029 = vmatmul.mubr.f32.gmra.mxu0 %v1937
    %v2030 = vpop.f32.mrf.mxu0
    %v2031 = vadd.f32 0.0, %v2030
    %v2032 = vpop.f32.mrf.mxu0
    %2033 = vmatprep.mubr.f32.mxu0 0.0
    %2034 = vmatmul.mubr.f32.gmra.mxu0 %v1940
    %v2035 = vpop.f32.mrf.mxu0
    %v2036 = vadd.f32 0.0, %v2035
    %v2037 = vpop.f32.mrf.mxu0
    %2038 = vmatprep.mubr.f32.mxu0 0.0
    %2039 = vmatmul.mubr.f32.gmra.mxu0 %v1943
    %v2040 = vpop.f32.mrf.mxu0
    %v2041 = vadd.f32 0.0, %v2040
    %v2042 = vpop.f32.mrf.mxu0
    %2043 = vmatprep.mubr.f32.mxu0 0.0
    %2044 = vmatmul.mubr.f32.gmra.mxu0 %v1946
    %v2045 = vpop.f32.mrf.mxu0
    %v2046 = vadd.f32 0.0, %v2045
    %v2047 = vpop.f32.mrf.mxu0
    %2048 = vmatprep.mubr.f32.mxu0 0.0
    %2049 = vmatmul.mubr.f32.gmra.mxu0 %v1949
    %v2050 = vpop.f32.mrf.mxu0
    %v2051 = vadd.f32 0.0, %v2050
    %v2052 = vpop.f32.mrf.mxu0
    %2053 = vmatprep.mubr.f32.mxu0 0.0
    %2054 = vmatmul.mubr.f32.gmra.mxu0 %v1952
    %v2055 = vpop.f32.mrf.mxu0
    %v2056 = vadd.f32 0.0, %v2055
    %v2057 = vpop.f32.mrf.mxu0
    %2058 = vdwg.mxu0
    %s2059 = scalar_lea.vmem %s2, 512
    %v2060 = vld [vmem:[%s2059] sm:$0xff]
    %v2061 = vld [vmem:[%s2059 + $0x8] sm:$0xff]
    %v2062 = vld [vmem:[%s2059 + $0x10] sm:$0xff]
    %v2063 = vld [vmem:[%s2059 + $0x18] sm:$0xff]
    %v2064 = vld [vmem:[%s2059 + $0x20] sm:$0xff]
    %v2065 = vld [vmem:[%s2059 + $0x28] sm:$0xff]
    %v2066 = vld [vmem:[%s2059 + $0x30] sm:$0xff]
    %v2067 = vld [vmem:[%s2059 + $0x38] sm:$0xff]
    %v2069 = vsel %vm78, %v2060, 0
    %v2072 = vsel %vm78, %v2061, 0
    %v2075 = vsel %vm78, %v2062, 0
    %v2078 = vsel %vm78, %v2063, 0
    %v2081 = vsel %vm78, %v2064, 0
    %v2084 = vsel %vm78, %v2065, 0
    %v2087 = vsel %vm78, %v2066, 0
    %v2090 = vsel %vm78, %v2067, 0
    %2092 = vmatprep.subr.mxu0 0.0
    %2093 = vmatpush1.msra.mxu0 0.0
    %2094 = vmatprep.subr.mxu0 0.0
    %2095 = vmatpush1.msra.mxu0 0.0
    %2096 = vmatprep.subr.mxu0 0.0
    %2097 = vmatpush1.msra.mxu0 0.0
    %2098 = vmatprep.subr.mxu0 0.0
    %2099 = vmatpush1.msra.mxu0 0.0
    %2100 = vmatprep.subr.mxu0 0.0
    %2101 = vmatpush1.msra.mxu0 0.0
    %2102 = vmatprep.subr.mxu0 0.0
    %2103 = vmatpush1.msra.mxu0 0.0
    %2104 = vmatprep.subr.mxu0 0.0
    %2105 = vmatpush1.msra.mxu0 0.0
    %2106 = vmatprep.subr.mxu0 0.0
    %2107 = vmatpush1.msra.mxu0 0.0
    %2108 = vmatprep.subr.mxu0 0.0
    %2109 = vmatpush1.msra.mxu0 0.0
    %2110 = vmatprep.subr.mxu0 0.0
    %2111 = vmatpush1.msra.mxu0 0.0
    %2112 = vmatprep.subr.mxu0 0.0
    %2113 = vmatpush1.msra.mxu0 0.0
    %2114 = vmatprep.subr.mxu0 0.0
    %2115 = vmatpush1.msra.mxu0 0.0
    %2116 = vmatprep.subr.mxu0 0.0
    %2117 = vmatpush1.msra.mxu0 %v56
    %2118 = vmatprep.subr.mxu0 0.0
    %2119 = vmatpush1.msra.mxu0 %v46
    %2120 = vmatprep.subr.mxu0 0.0
    %2121 = vmatpush1.msra.mxu0 %v36
    %2122 = vmatprep.subr.mxu0 0.0
    %2123 = vmatpush1.msra.mxu0 %v26
    %2124 = vmatprep.subr.mxu0 0.0
    %2125 = vmatpush2.msra.mxu0 0.0
    %2126 = vmatprep.subr.mxu0 0.0
    %2127 = vmatpush2.msra.mxu0 0.0
    %2128 = vmatprep.subr.mxu0 0.0
    %2129 = vmatpush2.msra.mxu0 0.0
    %2130 = vmatprep.subr.mxu0 0.0
    %2131 = vmatpush2.msra.mxu0 0.0
    %2132 = vmatprep.subr.mxu0 0.0
    %2133 = vmatpush2.msra.mxu0 0.0
    %2134 = vmatprep.subr.mxu0 0.0
    %2135 = vmatpush2.msra.mxu0 0.0
    %2136 = vmatprep.subr.mxu0 0.0
    %2137 = vmatpush2.msra.mxu0 0.0
    %2138 = vmatprep.subr.mxu0 0.0
    %2139 = vmatpush2.msra.mxu0 0.0
    %2140 = vmatprep.subr.mxu0 0.0
    %2141 = vmatpush2.msra.mxu0 0.0
    %2142 = vmatprep.subr.mxu0 0.0
    %2143 = vmatpush2.msra.mxu0 0.0
    %2144 = vmatprep.subr.mxu0 0.0
    %2145 = vmatpush2.msra.mxu0 0.0
    %2146 = vmatprep.subr.mxu0 0.0
    %2147 = vmatpush2.msra.mxu0 0.0
    %2148 = vmatprep.subr.mxu0 0.0
    %2149 = vmatpush2.msra.mxu0 0.0
    %2150 = vmatprep.subr.mxu0 0.0
    %2151 = vmatpush2.msra.mxu0 0.0
    %2152 = vmatprep.subr.mxu0 0.0
    %2153 = vmatpush2.msra.mxu0 0.0
    %2154 = vmatprep.subr.mxu0 0.0
    %2155 = vmatpush2.msra.mxu0 0.0
    %2156 = vmatprep.mubr.f32.mxu0 0.0
    %2157 = vmatmul.mubr.f32.gmra.mxu0 %v2069
    %v2158 = vpop.f32.mrf.mxu0
    %v2159 = vadd.f32 0.0, %v2158
    %v2160 = vpop.f32.mrf.mxu0
    %2161 = vmatprep.mubr.f32.mxu0 0.0
    %2162 = vmatmul.mubr.f32.gmra.mxu0 %v2072
    %v2163 = vpop.f32.mrf.mxu0
    %v2164 = vadd.f32 0.0, %v2163
    %v2165 = vpop.f32.mrf.mxu0
    %2166 = vmatprep.mubr.f32.mxu0 0.0
    %2167 = vmatmul.mubr.f32.gmra.mxu0 %v2075
    %v2168 = vpop.f32.mrf.mxu0
    %v2169 = vadd.f32 0.0, %v2168
    %v2170 = vpop.f32.mrf.mxu0
    %2171 = vmatprep.mubr.f32.mxu0 0.0
    %2172 = vmatmul.mubr.f32.gmra.mxu0 %v2078
    %v2173 = vpop.f32.mrf.mxu0
    %v2174 = vadd.f32 0.0, %v2173
    %v2175 = vpop.f32.mrf.mxu0
    %2176 = vmatprep.mubr.f32.mxu0 0.0
    %2177 = vmatmul.mubr.f32.gmra.mxu0 %v2081
    %v2178 = vpop.f32.mrf.mxu0
    %v2179 = vadd.f32 0.0, %v2178
    %v2180 = vpop.f32.mrf.mxu0
    %2181 = vmatprep.mubr.f32.mxu0 0.0
    %2182 = vmatmul.mubr.f32.gmra.mxu0 %v2084
    %v2183 = vpop.f32.mrf.mxu0
    %v2184 = vadd.f32 0.0, %v2183
    %v2185 = vpop.f32.mrf.mxu0
    %2186 = vmatprep.mubr.f32.mxu0 0.0
    %2187 = vmatmul.mubr.f32.gmra.mxu0 %v2087
    %v2188 = vpop.f32.mrf.mxu0
    %v2189 = vadd.f32 0.0, %v2188
    %v2190 = vpop.f32.mrf.mxu0
    %2191 = vmatprep.mubr.f32.mxu0 0.0
    %2192 = vmatmul.mubr.f32.gmra.mxu0 %v2090
    %v2193 = vpop.f32.mrf.mxu0
    %v2194 = vadd.f32 0.0, %v2193
    %v2195 = vpop.f32.mrf.mxu0
    %2196 = vdwg.mxu0
    %v2197 = vxor.u32 %v246, 2147483648
    %v2198 = vxor.u32 %v248, 2147483648
    %v2199 = vxor.u32 %v407, 2147483648
    %v2200 = vxor.u32 %v409, 2147483648
    %v2201 = vxor.u32 %v568, 2147483648
    %v2202 = vxor.u32 %v570, 2147483648
    %v2203 = vxor.u32 %v729, 2147483648
    %v2204 = vxor.u32 %v731, 2147483648
    %v2205 = vxor.u32 %v894, 2147483648
    %v2206 = vxor.u32 %v896, 2147483648
    %v2207 = vxor.u32 %v252, 2147483648
    %v2208 = vxor.u32 %v254, 2147483648
    %v2209 = vxor.u32 %v413, 2147483648
    %v2210 = vxor.u32 %v415, 2147483648
    %v2211 = vxor.u32 %v574, 2147483648
    %v2212 = vxor.u32 %v576, 2147483648
    %v2213 = vxor.u32 %v735, 2147483648
    %v2214 = vxor.u32 %v737, 2147483648
    %v2215 = vxor.u32 %v900, 2147483648
    %v2216 = vxor.u32 %v902, 2147483648
    %v2217 = vxor.u32 %v258, 2147483648
    %v2218 = vxor.u32 %v260, 2147483648
    %v2219 = vxor.u32 %v419, 2147483648
    %v2220 = vxor.u32 %v421, 2147483648
    %v2221 = vxor.u32 %v580, 2147483648
    %v2222 = vxor.u32 %v582, 2147483648
    %v2223 = vxor.u32 %v741, 2147483648
    %v2224 = vxor.u32 %v743, 2147483648
    %v2225 = vxor.u32 %v906, 2147483648
    %v2226 = vxor.u32 %v908, 2147483648
    %v2227 = vxor.u32 %v264, 2147483648
    %v2228 = vxor.u32 %v266, 2147483648
    %v2229 = vxor.u32 %v425, 2147483648
    %v2230 = vxor.u32 %v427, 2147483648
    %v2231 = vxor.u32 %v586, 2147483648
    %v2232 = vxor.u32 %v588, 2147483648
    %v2233 = vxor.u32 %v747, 2147483648
    %v2234 = vxor.u32 %v749, 2147483648
    %v2235 = vxor.u32 %v912, 2147483648
    %v2236 = vxor.u32 %v914, 2147483648
    %v2237 = vmul.f32 %v2197, 1.442695
    %v2238 = vpow.pop %v2237
    %v2239 = vmul.f32 %v2198, 1.442695
    %v2240 = vpow.pop %v2239
    %v2241 = vmul.f32 %v2199, 1.442695
    %v2242 = vpow.pop %v2241
    %v2243 = vmul.f32 %v2200, 1.442695
    %v2244 = vpow.pop %v2243
    %v2245 = vmul.f32 %v2201, 1.442695
    %v2246 = vpow.pop %v2245
    %v2247 = vmul.f32 %v2202, 1.442695
    %v2248 = vpow.pop %v2247
    %v2249 = vmul.f32 %v2203, 1.442695
    %v2250 = vpow.pop %v2249
    %v2251 = vmul.f32 %v2204, 1.442695
    %v2252 = vpow.pop %v2251
    %v2253 = vmul.f32 %v2205, 1.442695
    %v2254 = vpow.pop %v2253
    %v2255 = vmul.f32 %v2206, 1.442695
    %v2256 = vpow.pop %v2255
    %v2257 = vmul.f32 %v2207, 1.442695
    %v2258 = vpow.pop %v2257
    %v2259 = vmul.f32 %v2208, 1.442695
    %v2260 = vpow.pop %v2259
    %v2261 = vmul.f32 %v2209, 1.442695
    %v2262 = vpow.pop %v2261
    %v2263 = vmul.f32 %v2210, 1.442695
    %v2264 = vpow.pop %v2263
    %v2265 = vmul.f32 %v2211, 1.442695
    %v2266 = vpow.pop %v2265
    %v2267 = vmul.f32 %v2212, 1.442695
    %v2268 = vpow.pop %v2267
    %v2269 = vmul.f32 %v2213, 1.442695
    %v2270 = vpow.pop %v2269
    %v2271 = vmul.f32 %v2214, 1.442695
    %v2272 = vpow.pop %v2271
    %v2273 = vmul.f32 %v2215, 1.442695
    %v2274 = vpow.pop %v2273
    %v2275 = vmul.f32 %v2216, 1.442695
    %v2276 = vpow.pop %v2275
    %v2277 = vmul.f32 %v2217, 1.442695
    %v2278 = vpow.pop %v2277
    %v2279 = vmul.f32 %v2218, 1.442695
    %v2280 = vpow.pop %v2279
    %v2281 = vmul.f32 %v2219, 1.442695
    %v2282 = vpow.pop %v2281
    %v2283 = vmul.f32 %v2220, 1.442695
    %v2284 = vpow.pop %v2283
    %v2285 = vmul.f32 %v2221, 1.442695
    %v2286 = vpow.pop %v2285
    %v2287 = vmul.f32 %v2222, 1.442695
    %v2288 = vpow.pop %v2287
    %v2289 = vmul.f32 %v2223, 1.442695
    %v2290 = vpow.pop %v2289
    %v2291 = vmul.f32 %v2224, 1.442695
    %v2292 = vpow.pop %v2291
    %v2293 = vmul.f32 %v2225, 1.442695
    %v2294 = vpow.pop %v2293
    %v2295 = vmul.f32 %v2226, 1.442695
    %v2296 = vpow.pop %v2295
    %v2297 = vmul.f32 %v2227, 1.442695
    %v2298 = vpow.pop %v2297
    %v2299 = vmul.f32 %v2228, 1.442695
    %v2300 = vpow.pop %v2299
    %v2301 = vmul.f32 %v2229, 1.442695
    %v2302 = vpow.pop %v2301
    %v2303 = vmul.f32 %v2230, 1.442695
    %v2304 = vpow.pop %v2303
    %v2305 = vmul.f32 %v2231, 1.442695
    %v2306 = vpow.pop %v2305
    %v2307 = vmul.f32 %v2232, 1.442695
    %v2308 = vpow.pop %v2307
    %v2309 = vmul.f32 %v2233, 1.442695
    %v2310 = vpow.pop %v2309
    %v2311 = vmul.f32 %v2234, 1.442695
    %v2312 = vpow.pop %v2311
    %v2313 = vmul.f32 %v2235, 1.442695
    %v2314 = vpow.pop %v2313
    %v2315 = vmul.f32 %v2236, 1.442695
    %v2316 = vpow.pop %v2315
    %v2317 = vadd.f32 %v2238, 1.0
    %v2318 = vadd.f32 %v2240, 1.0
    %v2319 = vadd.f32 %v2242, 1.0
    %v2320 = vadd.f32 %v2244, 1.0
    %v2321 = vadd.f32 %v2246, 1.0
    %v2322 = vadd.f32 %v2248, 1.0
    %v2323 = vadd.f32 %v2250, 1.0
    %v2324 = vadd.f32 %v2252, 1.0
    %v2325 = vadd.f32 %v2254, 1.0
    %v2326 = vadd.f32 %v2256, 1.0
    %v2327 = vadd.f32 %v2258, 1.0
    %v2328 = vadd.f32 %v2260, 1.0
    %v2329 = vadd.f32 %v2262, 1.0
    %v2330 = vadd.f32 %v2264, 1.0
    %v2331 = vadd.f32 %v2266, 1.0
    %v2332 = vadd.f32 %v2268, 1.0
    %v2333 = vadd.f32 %v2270, 1.0
    %v2334 = vadd.f32 %v2272, 1.0
    %v2335 = vadd.f32 %v2274, 1.0
    %v2336 = vadd.f32 %v2276, 1.0
    %v2337 = vadd.f32 %v2278, 1.0
    %v2338 = vadd.f32 %v2280, 1.0
    %v2339 = vadd.f32 %v2282, 1.0
    %v2340 = vadd.f32 %v2284, 1.0
    %v2341 = vadd.f32 %v2286, 1.0
    %v2342 = vadd.f32 %v2288, 1.0
    %v2343 = vadd.f32 %v2290, 1.0
    %v2344 = vadd.f32 %v2292, 1.0
    %v2345 = vadd.f32 %v2294, 1.0
    %v2346 = vadd.f32 %v2296, 1.0
    %v2347 = vadd.f32 %v2298, 1.0
    %v2348 = vadd.f32 %v2300, 1.0
    %v2349 = vadd.f32 %v2302, 1.0
    %v2350 = vadd.f32 %v2304, 1.0
    %v2351 = vadd.f32 %v2306, 1.0
    %v2352 = vadd.f32 %v2308, 1.0
    %v2353 = vadd.f32 %v2310, 1.0
    %v2354 = vadd.f32 %v2312, 1.0
    %v2355 = vadd.f32 %v2314, 1.0
    %v2356 = vadd.f32 %v2316, 1.0
    %v2357 = vrcp.pop %v2317
    %v2358 = vmul.f32 1.0, %v2357
    %v2359 = vrcp.pop %v2318
    %v2360 = vmul.f32 1.0, %v2359
    %v2361 = vrcp.pop %v2319
    %v2362 = vmul.f32 1.0, %v2361
    %v2363 = vrcp.pop %v2320
    %v2364 = vmul.f32 1.0, %v2363
    %v2365 = vrcp.pop %v2321
    %v2366 = vmul.f32 1.0, %v2365
    %v2367 = vrcp.pop %v2322
    %v2368 = vmul.f32 1.0, %v2367
    %v2369 = vrcp.pop %v2323
    %v2370 = vmul.f32 1.0, %v2369
    %v2371 = vrcp.pop %v2324
    %v2372 = vmul.f32 1.0, %v2371
    %v2373 = vrcp.pop %v2325
    %v2374 = vmul.f32 1.0, %v2373
    %v2375 = vrcp.pop %v2326
    %v2376 = vmul.f32 1.0, %v2375
    %v2377 = vrcp.pop %v2327
    %v2378 = vmul.f32 1.0, %v2377
    %v2379 = vrcp.pop %v2328
    %v2380 = vmul.f32 1.0, %v2379
    %v2381 = vrcp.pop %v2329
    %v2382 = vmul.f32 1.0, %v2381
    %v2383 = vrcp.pop %v2330
    %v2384 = vmul.f32 1.0, %v2383
    %v2385 = vrcp.pop %v2331
    %v2386 = vmul.f32 1.0, %v2385
    %v2387 = vrcp.pop %v2332
    %v2388 = vmul.f32 1.0, %v2387
    %v2389 = vrcp.pop %v2333
    %v2390 = vmul.f32 1.0, %v2389
    %v2391 = vrcp.pop %v2334
    %v2392 = vmul.f32 1.0, %v2391
    %v2393 = vrcp.pop %v2335
    %v2394 = vmul.f32 1.0, %v2393
    %v2395 = vrcp.pop %v2336
    %v2396 = vmul.f32 1.0, %v2395
    %v2397 = vrcp.pop %v2337
    %v2398 = vmul.f32 1.0, %v2397
    %v2399 = vrcp.pop %v2338
    %v2400 = vmul.f32 1.0, %v2399
    %v2401 = vrcp.pop %v2339
    %v2402 = vmul.f32 1.0, %v2401
    %v2403 = vrcp.pop %v2340
    %v2404 = vmul.f32 1.0, %v2403
    %v2405 = vrcp.pop %v2341
    %v2406 = vmul.f32 1.0, %v2405
    %v2407 = vrcp.pop %v2342
    %v2408 = vmul.f32 1.0, %v2407
    %v2409 = vrcp.pop %v2343
    %v2410 = vmul.f32 1.0, %v2409
    %v2411 = vrcp.pop %v2344
    %v2412 = vmul.f32 1.0, %v2411
    %v2413 = vrcp.pop %v2345
    %v2414 = vmul.f32 1.0, %v2413
    %v2415 = vrcp.pop %v2346
    %v2416 = vmul.f32 1.0, %v2415
    %v2417 = vrcp.pop %v2347
    %v2418 = vmul.f32 1.0, %v2417
    %v2419 = vrcp.pop %v2348
    %v2420 = vmul.f32 1.0, %v2419
    %v2421 = vrcp.pop %v2349
    %v2422 = vmul.f32 1.0, %v2421
    %v2423 = vrcp.pop %v2350
    %v2424 = vmul.f32 1.0, %v2423
    %v2425 = vrcp.pop %v2351
    %v2426 = vmul.f32 1.0, %v2425
    %v2427 = vrcp.pop %v2352
    %v2428 = vmul.f32 1.0, %v2427
    %v2429 = vrcp.pop %v2353
    %v2430 = vmul.f32 1.0, %v2429
    %v2431 = vrcp.pop %v2354
    %v2432 = vmul.f32 1.0, %v2431
    %v2433 = vrcp.pop %v2355
    %v2434 = vmul.f32 1.0, %v2433
    %v2435 = vrcp.pop %v2356
    %v2436 = vmul.f32 1.0, %v2435
    %v2437 = vxor.u32 %v1075, 2147483648
    %v2438 = vxor.u32 %v1080, 2147483648
    %v2439 = vxor.u32 %v1085, 2147483648
    %v2440 = vxor.u32 %v1090, 2147483648
    %v2441 = vmul.f32 %v2437, 1.442695
    %v2442 = vpow.pop %v2441
    %v2443 = vmul.f32 %v2438, 1.442695
    %v2444 = vpow.pop %v2443
    %v2445 = vmul.f32 %v2439, 1.442695
    %v2446 = vpow.pop %v2445
    %v2447 = vmul.f32 %v2440, 1.442695
    %v2448 = vpow.pop %v2447
    %v2449 = vadd.f32 %v2442, 1.0
    %v2450 = vadd.f32 %v2444, 1.0
    %v2451 = vadd.f32 %v2446, 1.0
    %v2452 = vadd.f32 %v2448, 1.0
    %v2453 = vrcp.pop %v2449
    %v2454 = vmul.f32 1.0, %v2453
    %v2455 = vrcp.pop %v2450
    %v2456 = vmul.f32 1.0, %v2455
    %v2457 = vrcp.pop %v2451
    %v2458 = vmul.f32 1.0, %v2457
    %v2459 = vrcp.pop %v2452
    %v2460 = vmul.f32 1.0, %v2459
    %v2461 = vxor.u32 %v1213, 2147483648
    %v2462 = vxor.u32 %v1218, 2147483648
    %v2463 = vxor.u32 %v1223, 2147483648
    %v2464 = vxor.u32 %v1228, 2147483648
    %v2465 = vmul.f32 %v2461, 1.442695
    %v2466 = vpow.pop %v2465
    %v2467 = vmul.f32 %v2462, 1.442695
    %v2468 = vpow.pop %v2467
    %v2469 = vmul.f32 %v2463, 1.442695
    %v2470 = vpow.pop %v2469
    %v2471 = vmul.f32 %v2464, 1.442695
    %v2472 = vpow.pop %v2471
    %v2473 = vadd.f32 %v2466, 1.0
    %v2474 = vadd.f32 %v2468, 1.0
    %v2475 = vadd.f32 %v2470, 1.0
    %v2476 = vadd.f32 %v2472, 1.0
    %v2477 = vrcp.pop %v2473
    %v2478 = vmul.f32 1.0, %v2477
    %v2479 = vrcp.pop %v2474
    %v2480 = vmul.f32 1.0, %v2479
    %v2481 = vrcp.pop %v2475
    %v2482 = vmul.f32 1.0, %v2481
    %v2483 = vrcp.pop %v2476
    %v2484 = vmul.f32 1.0, %v2483
    %v2485 = vxor.u32 %v1351, 2147483648
    %v2486 = vxor.u32 %v1356, 2147483648
    %v2487 = vxor.u32 %v1361, 2147483648
    %v2488 = vxor.u32 %v1366, 2147483648
    %v2489 = vmul.f32 %v2485, 1.442695
    %v2490 = vpow.pop %v2489
    %v2491 = vmul.f32 %v2486, 1.442695
    %v2492 = vpow.pop %v2491
    %v2493 = vmul.f32 %v2487, 1.442695
    %v2494 = vpow.pop %v2493
    %v2495 = vmul.f32 %v2488, 1.442695
    %v2496 = vpow.pop %v2495
    %v2497 = vadd.f32 %v2490, 1.0
    %v2498 = vadd.f32 %v2492, 1.0
    %v2499 = vadd.f32 %v2494, 1.0
    %v2500 = vadd.f32 %v2496, 1.0
    %v2501 = vrcp.pop %v2497
    %v2502 = vmul.f32 1.0, %v2501
    %v2503 = vrcp.pop %v2498
    %v2504 = vmul.f32 1.0, %v2503
    %v2505 = vrcp.pop %v2499
    %v2506 = vmul.f32 1.0, %v2505
    %v2507 = vrcp.pop %v2500
    %v2508 = vmul.f32 1.0, %v2507
    %v2509 = vxor.u32 %v1489, 2147483648
    %v2510 = vxor.u32 %v1494, 2147483648
    %v2511 = vxor.u32 %v1499, 2147483648
    %v2512 = vxor.u32 %v1504, 2147483648
    %v2513 = vmul.f32 %v2509, 1.442695
    %v2514 = vpow.pop %v2513
    %v2515 = vmul.f32 %v2510, 1.442695
    %v2516 = vpow.pop %v2515
    %v2517 = vmul.f32 %v2511, 1.442695
    %v2518 = vpow.pop %v2517
    %v2519 = vmul.f32 %v2512, 1.442695
    %v2520 = vpow.pop %v2519
    %v2521 = vadd.f32 %v2514, 1.0
    %v2522 = vadd.f32 %v2516, 1.0
    %v2523 = vadd.f32 %v2518, 1.0
    %v2524 = vadd.f32 %v2520, 1.0
    %v2525 = vrcp.pop %v2521
    %v2526 = vmul.f32 1.0, %v2525
    %v2527 = vrcp.pop %v2522
    %v2528 = vmul.f32 1.0, %v2527
    %v2529 = vrcp.pop %v2523
    %v2530 = vmul.f32 1.0, %v2529
    %v2531 = vrcp.pop %v2524
    %v2532 = vmul.f32 1.0, %v2531
    %v2533 = vxor.u32 %v1627, 2147483648
    %v2534 = vxor.u32 %v1632, 2147483648
    %v2535 = vxor.u32 %v1637, 2147483648
    %v2536 = vxor.u32 %v1642, 2147483648
    %v2537 = vmul.f32 %v2533, 1.442695
    %v2538 = vpow.pop %v2537
    %v2539 = vmul.f32 %v2534, 1.442695
    %v2540 = vpow.pop %v2539
    %v2541 = vmul.f32 %v2535, 1.442695
    %v2542 = vpow.pop %v2541
    %v2543 = vmul.f32 %v2536, 1.442695
    %v2544 = vpow.pop %v2543
    %v2545 = vadd.f32 %v2538, 1.0
    %v2546 = vadd.f32 %v2540, 1.0
    %v2547 = vadd.f32 %v2542, 1.0
    %v2548 = vadd.f32 %v2544, 1.0
    %v2549 = vrcp.pop %v2545
    %v2550 = vmul.f32 1.0, %v2549
    %v2551 = vrcp.pop %v2546
    %v2552 = vmul.f32 1.0, %v2551
    %v2553 = vrcp.pop %v2547
    %v2554 = vmul.f32 1.0, %v2553
    %v2555 = vrcp.pop %v2548
    %v2556 = vmul.f32 1.0, %v2555
    %v2557 = vxor.u32 %v1765, 2147483648
    %v2558 = vxor.u32 %v1770, 2147483648
    %v2559 = vxor.u32 %v1775, 2147483648
    %v2560 = vxor.u32 %v1780, 2147483648
    %v2561 = vmul.f32 %v2557, 1.442695
    %v2562 = vpow.pop %v2561
    %v2563 = vmul.f32 %v2558, 1.442695
    %v2564 = vpow.pop %v2563
    %v2565 = vmul.f32 %v2559, 1.442695
    %v2566 = vpow.pop %v2565
    %v2567 = vmul.f32 %v2560, 1.442695
    %v2568 = vpow.pop %v2567
    %v2569 = vadd.f32 %v2562, 1.0
    %v2570 = vadd.f32 %v2564, 1.0
    %v2571 = vadd.f32 %v2566, 1.0
    %v2572 = vadd.f32 %v2568, 1.0
    %v2573 = vrcp.pop %v2569
    %v2574 = vmul.f32 1.0, %v2573
    %v2575 = vrcp.pop %v2570
    %v2576 = vmul.f32 1.0, %v2575
    %v2577 = vrcp.pop %v2571
    %v2578 = vmul.f32 1.0, %v2577
    %v2579 = vrcp.pop %v2572
    %v2580 = vmul.f32 1.0, %v2579
    %v2581 = vxor.u32 %v1903, 2147483648
    %v2582 = vxor.u32 %v1908, 2147483648
    %v2583 = vxor.u32 %v1913, 2147483648
    %v2584 = vxor.u32 %v1918, 2147483648
    %v2585 = vmul.f32 %v2581, 1.442695
    %v2586 = vpow.pop %v2585
    %v2587 = vmul.f32 %v2582, 1.442695
    %v2588 = vpow.pop %v2587
    %v2589 = vmul.f32 %v2583, 1.442695
    %v2590 = vpow.pop %v2589
    %v2591 = vmul.f32 %v2584, 1.442695
    %v2592 = vpow.pop %v2591
    %v2593 = vadd.f32 %v2586, 1.0
    %v2594 = vadd.f32 %v2588, 1.0
    %v2595 = vadd.f32 %v2590, 1.0
    %v2596 = vadd.f32 %v2592, 1.0
    %v2597 = vrcp.pop %v2593
    %v2598 = vmul.f32 1.0, %v2597
    %v2599 = vrcp.pop %v2594
    %v2600 = vmul.f32 1.0, %v2599
    %v2601 = vrcp.pop %v2595
    %v2602 = vmul.f32 1.0, %v2601
    %v2603 = vrcp.pop %v2596
    %v2604 = vmul.f32 1.0, %v2603
    %v2605 = vxor.u32 %v2041, 2147483648
    %v2606 = vxor.u32 %v2046, 2147483648
    %v2607 = vxor.u32 %v2051, 2147483648
    %v2608 = vxor.u32 %v2056, 2147483648
    %v2609 = vmul.f32 %v2605, 1.442695
    %v2610 = vpow.pop %v2609
    %v2611 = vmul.f32 %v2606, 1.442695
    %v2612 = vpow.pop %v2611
    %v2613 = vmul.f32 %v2607, 1.442695
    %v2614 = vpow.pop %v2613
    %v2615 = vmul.f32 %v2608, 1.442695
    %v2616 = vpow.pop %v2615
    %v2617 = vadd.f32 %v2610, 1.0
    %v2618 = vadd.f32 %v2612, 1.0
    %v2619 = vadd.f32 %v2614, 1.0
    %v2620 = vadd.f32 %v2616, 1.0
    %v2621 = vrcp.pop %v2617
    %v2622 = vmul.f32 1.0, %v2621
    %v2623 = vrcp.pop %v2618
    %v2624 = vmul.f32 1.0, %v2623
    %v2625 = vrcp.pop %v2619
    %v2626 = vmul.f32 1.0, %v2625
    %v2627 = vrcp.pop %v2620
    %v2628 = vmul.f32 1.0, %v2627
    %v2629 = vxor.u32 %v2179, 2147483648
    %v2630 = vxor.u32 %v2184, 2147483648
    %v2631 = vxor.u32 %v2189, 2147483648
    %v2632 = vxor.u32 %v2194, 2147483648
    %v2633 = vmul.f32 %v2629, 1.442695
    %v2634 = vpow.pop %v2633
    %v2635 = vmul.f32 %v2630, 1.442695
    %v2636 = vpow.pop %v2635
    %v2637 = vmul.f32 %v2631, 1.442695
    %v2638 = vpow.pop %v2637
    %v2639 = vmul.f32 %v2632, 1.442695
    %v2640 = vpow.pop %v2639
    %v2641 = vadd.f32 %v2634, 1.0
    %v2642 = vadd.f32 %v2636, 1.0
    %v2643 = vadd.f32 %v2638, 1.0
    %v2644 = vadd.f32 %v2640, 1.0
    %v2645 = vrcp.pop %v2641
    %v2646 = vmul.f32 1.0, %v2645
    %v2647 = vrcp.pop %v2642
    %v2648 = vmul.f32 1.0, %v2647
    %v2649 = vrcp.pop %v2643
    %v2650 = vmul.f32 1.0, %v2649
    %v2651 = vrcp.pop %v2644
    %v2652 = vmul.f32 1.0, %v2651
    %v2653 = vxor.u32 %v919, 2147483648
    %v2654 = vxor.u32 %v924, 2147483648
    %v2655 = vxor.u32 %v929, 2147483648
    %v2656 = vxor.u32 %v934, 2147483648
    %v2657 = vmul.f32 %v2653, 1.442695
    %v2658 = vpow.pop %v2657
    %v2659 = vmul.f32 %v2654, 1.442695
    %v2660 = vpow.pop %v2659
    %v2661 = vmul.f32 %v2655, 1.442695
    %v2662 = vpow.pop %v2661
    %v2663 = vmul.f32 %v2656, 1.442695
    %v2664 = vpow.pop %v2663
    %v2665 = vadd.f32 %v2658, 1.0
    %v2666 = vadd.f32 %v2660, 1.0
    %v2667 = vadd.f32 %v2662, 1.0
    %v2668 = vadd.f32 %v2664, 1.0
    %v2669 = vrcp.pop %v2665
    %v2670 = vmul.f32 1.0, %v2669
    %v2671 = vrcp.pop %v2666
    %v2672 = vmul.f32 1.0, %v2671
    %v2673 = vrcp.pop %v2667
    %v2674 = vmul.f32 1.0, %v2673
    %v2675 = vrcp.pop %v2668
    %v2676 = vmul.f32 1.0, %v2675
    %v2677 = vxor.u32 %v939, 2147483648
    %v2678 = vxor.u32 %v944, 2147483648
    %v2679 = vxor.u32 %v949, 2147483648
    %v2680 = vxor.u32 %v954, 2147483648
    %v2681 = vmul.f32 %v2677, 1.442695
    %v2682 = vpow.pop %v2681
    %v2683 = vmul.f32 %v2678, 1.442695
    %v2684 = vpow.pop %v2683
    %v2685 = vmul.f32 %v2679, 1.442695
    %v2686 = vpow.pop %v2685
    %v2687 = vmul.f32 %v2680, 1.442695
    %v2688 = vpow.pop %v2687
    %v2689 = vadd.f32 %v2682, 1.0
    %v2690 = vadd.f32 %v2684, 1.0
    %v2691 = vadd.f32 %v2686, 1.0
    %v2692 = vadd.f32 %v2688, 1.0
    %v2693 = vrcp.pop %v2689
    %v2694 = vmul.f32 1.0, %v2693
    %v2695 = vrcp.pop %v2690
    %v2696 = vmul.f32 1.0, %v2695
    %v2697 = vrcp.pop %v2691
    %v2698 = vmul.f32 1.0, %v2697
    %v2699 = vrcp.pop %v2692
    %v2700 = vmul.f32 1.0, %v2699
    %v2701 = vsub.f32 1.0, %v2358
    %v2702 = vsub.f32 1.0, %v2378
    %v2703 = vsub.f32 1.0, %v2398
    %v2704 = vsub.f32 1.0, %v2418
    %v2705 = vmul.f32 %v206, %v2701
    %v2706 = vmul.f32 %v212, %v2702
    %v2707 = vmul.f32 %v218, %v2703
    %v2708 = vmul.f32 %v224, %v2704
    %v2709 = vmul.f32 %v2358, 0.0
    %v2710 = vmul.f32 %v2378, 0.0
    %v2711 = vmul.f32 %v2398, 0.0
    %v2712 = vmul.f32 %v2418, 0.0
    %v2713 = vadd.f32 %v2705, %v2709
    %v2714 = vadd.f32 %v2706, %v2710
    %v2715 = vadd.f32 %v2707, %v2711
    %v2716 = vadd.f32 %v2708, %v2712
    %v2717 = vmul.f32 %v206, %v2358
    %v2718 = vmul.f32 %v212, %v2378
    %v2719 = vmul.f32 %v218, %v2398
    %v2720 = vmul.f32 %v224, %v2418
    %v2721 = vmul.f32 %v2701, 0.0
    %v2722 = vmul.f32 %v2702, 0.0
    %v2723 = vmul.f32 %v2703, 0.0
    %v2724 = vmul.f32 %v2704, 0.0
    %v2725 = vadd.f32 %v2717, %v2721
    %v2726 = vadd.f32 %v2718, %v2722
    %v2727 = vadd.f32 %v2719, %v2723
    %v2728 = vadd.f32 %v2720, %v2724
    %2729 = vst [vmem:[#allocation4] sm:$0xff] %v2713
    %2730 = vst [vmem:[#allocation4 + $0x8] sm:$0xff] %v2714
    %2731 = vst [vmem:[#allocation4 + $0x10] sm:$0xff] %v2715
    %2732 = vst [vmem:[#allocation4 + $0x18] sm:$0xff] %v2716
    %2733 = vst [vmem:[#allocation4 + $0x20] sm:$0xff] %v2725
    %2734 = vst [vmem:[#allocation4 + $0x28] sm:$0xff] %v2726
    %2735 = vst [vmem:[#allocation4 + $0x30] sm:$0xff] %v2727
    %2736 = vst [vmem:[#allocation4 + $0x38] sm:$0xff] %v2728
    %v2737 = vsub.f32 1.0, %v2454
    %v2738 = vsub.f32 1.0, %v2456
    %v2739 = vsub.f32 1.0, %v2458
    %v2740 = vsub.f32 1.0, %v2460
    %v2741 = vmul.f32 %v1055, %v2737
    %v2742 = vmul.f32 %v1060, %v2738
    %v2743 = vmul.f32 %v1065, %v2739
    %v2744 = vmul.f32 %v1070, %v2740
    %v2745 = vmul.f32 %v2454, 0.0
    %v2746 = vmul.f32 %v2456, 0.0
    %v2747 = vmul.f32 %v2458, 0.0
    %v2748 = vmul.f32 %v2460, 0.0
    %v2749 = vadd.f32 %v2741, %v2745
    %v2750 = vadd.f32 %v2742, %v2746
    %v2751 = vadd.f32 %v2743, %v2747
    %v2752 = vadd.f32 %v2744, %v2748
    %v2753 = vmul.f32 %v1055, %v2454
    %v2754 = vmul.f32 %v1060, %v2456
    %v2755 = vmul.f32 %v1065, %v2458
    %v2756 = vmul.f32 %v1070, %v2460
    %v2757 = vmul.f32 %v2737, 0.0
    %v2758 = vmul.f32 %v2738, 0.0
    %v2759 = vmul.f32 %v2739, 0.0
    %v2760 = vmul.f32 %v2740, 0.0
    %v2761 = vadd.f32 %v2753, %v2757
    %v2762 = vadd.f32 %v2754, %v2758
    %v2763 = vadd.f32 %v2755, %v2759
    %v2764 = vadd.f32 %v2756, %v2760
    %v2765 = vsub.f32 1.0, %v2360
    %v2766 = vsub.f32 1.0, %v2380
    %v2767 = vsub.f32 1.0, %v2400
    %v2768 = vsub.f32 1.0, %v2420
    %v2769 = vmul.f32 %v208, %v2765
    %v2770 = vmul.f32 %v214, %v2766
    %v2771 = vmul.f32 %v220, %v2767
    %v2772 = vmul.f32 %v226, %v2768
    %v2773 = vmul.f32 %v2749, %v2360
    %v2774 = vmul.f32 %v2750, %v2380
    %v2775 = vmul.f32 %v2751, %v2400
    %v2776 = vmul.f32 %v2752, %v2420
    %v2777 = vadd.f32 %v2769, %v2773
    %v2778 = vadd.f32 %v2770, %v2774
    %v2779 = vadd.f32 %v2771, %v2775
    %v2780 = vadd.f32 %v2772, %v2776
    %v2781 = vmul.f32 %v208, %v2360
    %v2782 = vmul.f32 %v214, %v2380
    %v2783 = vmul.f32 %v220, %v2400
    %v2784 = vmul.f32 %v226, %v2420
    %v2785 = vmul.f32 %v2761, %v2765
    %v2786 = vmul.f32 %v2762, %v2766
    %v2787 = vmul.f32 %v2763, %v2767
    %v2788 = vmul.f32 %v2764, %v2768
    %v2789 = vadd.f32 %v2781, %v2785
    %v2790 = vadd.f32 %v2782, %v2786
    %v2791 = vadd.f32 %v2783, %v2787
    %v2792 = vadd.f32 %v2784, %v2788
    %s2793 = scalar_lea.vmem [#allocation4], 64
    %2794 = vst [vmem:[%s2793] sm:$0xff] %v2777
    %2795 = vst [vmem:[%s2793 + $0x8] sm:$0xff] %v2778
    %2796 = vst [vmem:[%s2793 + $0x10] sm:$0xff] %v2779
    %2797 = vst [vmem:[%s2793 + $0x18] sm:$0xff] %v2780
    %2798 = vst [vmem:[%s2793 + $0x20] sm:$0xff] %v2789
    %2799 = vst [vmem:[%s2793 + $0x28] sm:$0xff] %v2790
    %2800 = vst [vmem:[%s2793 + $0x30] sm:$0xff] %v2791
    %2801 = vst [vmem:[%s2793 + $0x38] sm:$0xff] %v2792
    %v2802 = vsub.f32 1.0, %v2478
    %v2803 = vsub.f32 1.0, %v2480
    %v2804 = vsub.f32 1.0, %v2482
    %v2805 = vsub.f32 1.0, %v2484
    %v2806 = vmul.f32 %v1193, %v2802
    %v2807 = vmul.f32 %v1198, %v2803
    %v2808 = vmul.f32 %v1203, %v2804
    %v2809 = vmul.f32 %v1208, %v2805
    %v2810 = vmul.f32 %v2749, %v2478
    %v2811 = vmul.f32 %v2750, %v2480
    %v2812 = vmul.f32 %v2751, %v2482
    %v2813 = vmul.f32 %v2752, %v2484
    %v2814 = vadd.f32 %v2806, %v2810
    %v2815 = vadd.f32 %v2807, %v2811
    %v2816 = vadd.f32 %v2808, %v2812
    %v2817 = vadd.f32 %v2809, %v2813
    %v2818 = vmul.f32 %v1193, %v2478
    %v2819 = vmul.f32 %v1198, %v2480
    %v2820 = vmul.f32 %v1203, %v2482
    %v2821 = vmul.f32 %v1208, %v2484
    %v2822 = vmul.f32 %v2761, %v2802
    %v2823 = vmul.f32 %v2762, %v2803
    %v2824 = vmul.f32 %v2763, %v2804
    %v2825 = vmul.f32 %v2764, %v2805
    %v2826 = vadd.f32 %v2818, %v2822
    %v2827 = vadd.f32 %v2819, %v2823
    %v2828 = vadd.f32 %v2820, %v2824
    %v2829 = vadd.f32 %v2821, %v2825
    %v2830 = vsub.f32 1.0, %v2362
    %v2831 = vsub.f32 1.0, %v2382
    %v2832 = vsub.f32 1.0, %v2402
    %v2833 = vsub.f32 1.0, %v2422
    %v2834 = vmul.f32 %v367, %v2830
    %v2835 = vmul.f32 %v373, %v2831
    %v2836 = vmul.f32 %v379, %v2832
    %v2837 = vmul.f32 %v385, %v2833
    %v2838 = vmul.f32 %v2814, %v2362
    %v2839 = vmul.f32 %v2815, %v2382
    %v2840 = vmul.f32 %v2816, %v2402
    %v2841 = vmul.f32 %v2817, %v2422
    %v2842 = vadd.f32 %v2834, %v2838
    %v2843 = vadd.f32 %v2835, %v2839
    %v2844 = vadd.f32 %v2836, %v2840
    %v2845 = vadd.f32 %v2837, %v2841
    %v2846 = vmul.f32 %v367, %v2362
    %v2847 = vmul.f32 %v373, %v2382
    %v2848 = vmul.f32 %v379, %v2402
    %v2849 = vmul.f32 %v385, %v2422
    %v2850 = vmul.f32 %v2826, %v2830
    %v2851 = vmul.f32 %v2827, %v2831
    %v2852 = vmul.f32 %v2828, %v2832
    %v2853 = vmul.f32 %v2829, %v2833
    %v2854 = vadd.f32 %v2846, %v2850
    %v2855 = vadd.f32 %v2847, %v2851
    %v2856 = vadd.f32 %v2848, %v2852
    %v2857 = vadd.f32 %v2849, %v2853
    %s2858 = scalar_lea.vmem [#allocation4], 128
    %2859 = vst [vmem:[%s2858] sm:$0xff] %v2842
    %2860 = vst [vmem:[%s2858 + $0x8] sm:$0xff] %v2843
    %2861 = vst [vmem:[%s2858 + $0x10] sm:$0xff] %v2844
    %2862 = vst [vmem:[%s2858 + $0x18] sm:$0xff] %v2845
    %2863 = vst [vmem:[%s2858 + $0x20] sm:$0xff] %v2854
    %2864 = vst [vmem:[%s2858 + $0x28] sm:$0xff] %v2855
    %2865 = vst [vmem:[%s2858 + $0x30] sm:$0xff] %v2856
    %2866 = vst [vmem:[%s2858 + $0x38] sm:$0xff] %v2857
    %v2867 = vsub.f32 1.0, %v2502
    %v2868 = vsub.f32 1.0, %v2504
    %v2869 = vsub.f32 1.0, %v2506
    %v2870 = vsub.f32 1.0, %v2508
    %v2871 = vmul.f32 %v1331, %v2867
    %v2872 = vmul.f32 %v1336, %v2868
    %v2873 = vmul.f32 %v1341, %v2869
    %v2874 = vmul.f32 %v1346, %v2870
    %v2875 = vmul.f32 %v2814, %v2502
    %v2876 = vmul.f32 %v2815, %v2504
    %v2877 = vmul.f32 %v2816, %v2506
    %v2878 = vmul.f32 %v2817, %v2508
    %v2879 = vadd.f32 %v2871, %v2875
    %v2880 = vadd.f32 %v2872, %v2876
    %v2881 = vadd.f32 %v2873, %v2877
    %v2882 = vadd.f32 %v2874, %v2878
    %v2883 = vmul.f32 %v1331, %v2502
    %v2884 = vmul.f32 %v1336, %v2504
    %v2885 = vmul.f32 %v1341, %v2506
    %v2886 = vmul.f32 %v1346, %v2508
    %v2887 = vmul.f32 %v2826, %v2867
    %v2888 = vmul.f32 %v2827, %v2868
    %v2889 = vmul.f32 %v2828, %v2869
    %v2890 = vmul.f32 %v2829, %v2870
    %v2891 = vadd.f32 %v2883, %v2887
    %v2892 = vadd.f32 %v2884, %v2888
    %v2893 = vadd.f32 %v2885, %v2889
    %v2894 = vadd.f32 %v2886, %v2890
    %v2895 = vsub.f32 1.0, %v2364
    %v2896 = vsub.f32 1.0, %v2384
    %v2897 = vsub.f32 1.0, %v2404
    %v2898 = vsub.f32 1.0, %v2424
    %v2899 = vmul.f32 %v369, %v2895
    %v2900 = vmul.f32 %v375, %v2896
    %v2901 = vmul.f32 %v381, %v2897
    %v2902 = vmul.f32 %v387, %v2898
    %v2903 = vmul.f32 %v2879, %v2364
    %v2904 = vmul.f32 %v2880, %v2384
    %v2905 = vmul.f32 %v2881, %v2404
    %v2906 = vmul.f32 %v2882, %v2424
    %v2907 = vadd.f32 %v2899, %v2903
    %v2908 = vadd.f32 %v2900, %v2904
    %v2909 = vadd.f32 %v2901, %v2905
    %v2910 = vadd.f32 %v2902, %v2906
    %v2911 = vmul.f32 %v369, %v2364
    %v2912 = vmul.f32 %v375, %v2384
    %v2913 = vmul.f32 %v381, %v2404
    %v2914 = vmul.f32 %v387, %v2424
    %v2915 = vmul.f32 %v2891, %v2895
    %v2916 = vmul.f32 %v2892, %v2896
    %v2917 = vmul.f32 %v2893, %v2897
    %v2918 = vmul.f32 %v2894, %v2898
    %v2919 = vadd.f32 %v2911, %v2915
    %v2920 = vadd.f32 %v2912, %v2916
    %v2921 = vadd.f32 %v2913, %v2917
    %v2922 = vadd.f32 %v2914, %v2918
    %s2923 = scalar_lea.vmem [#allocation4], 192
    %2924 = vst [vmem:[%s2923] sm:$0xff] %v2907
    %2925 = vst [vmem:[%s2923 + $0x8] sm:$0xff] %v2908
    %2926 = vst [vmem:[%s2923 + $0x10] sm:$0xff] %v2909
    %2927 = vst [vmem:[%s2923 + $0x18] sm:$0xff] %v2910
    %2928 = vst [vmem:[%s2923 + $0x20] sm:$0xff] %v2919
    %2929 = vst [vmem:[%s2923 + $0x28] sm:$0xff] %v2920
    %2930 = vst [vmem:[%s2923 + $0x30] sm:$0xff] %v2921
    %2931 = vst [vmem:[%s2923 + $0x38] sm:$0xff] %v2922
    %v2932 = vsub.f32 1.0, %v2526
    %v2933 = vsub.f32 1.0, %v2528
    %v2934 = vsub.f32 1.0, %v2530
    %v2935 = vsub.f32 1.0, %v2532
    %v2936 = vmul.f32 %v1469, %v2932
    %v2937 = vmul.f32 %v1474, %v2933
    %v2938 = vmul.f32 %v1479, %v2934
    %v2939 = vmul.f32 %v1484, %v2935
    %v2940 = vmul.f32 %v2879, %v2526
    %v2941 = vmul.f32 %v2880, %v2528
    %v2942 = vmul.f32 %v2881, %v2530
    %v2943 = vmul.f32 %v2882, %v2532
    %v2944 = vadd.f32 %v2936, %v2940
    %v2945 = vadd.f32 %v2937, %v2941
    %v2946 = vadd.f32 %v2938, %v2942
    %v2947 = vadd.f32 %v2939, %v2943
    %v2948 = vmul.f32 %v1469, %v2526
    %v2949 = vmul.f32 %v1474, %v2528
    %v2950 = vmul.f32 %v1479, %v2530
    %v2951 = vmul.f32 %v1484, %v2532
    %v2952 = vmul.f32 %v2891, %v2932
    %v2953 = vmul.f32 %v2892, %v2933
    %v2954 = vmul.f32 %v2893, %v2934
    %v2955 = vmul.f32 %v2894, %v2935
    %v2956 = vadd.f32 %v2948, %v2952
    %v2957 = vadd.f32 %v2949, %v2953
    %v2958 = vadd.f32 %v2950, %v2954
    %v2959 = vadd.f32 %v2951, %v2955
    %v2960 = vsub.f32 1.0, %v2366
    %v2961 = vsub.f32 1.0, %v2386
    %v2962 = vsub.f32 1.0, %v2406
    %v2963 = vsub.f32 1.0, %v2426
    %v2964 = vmul.f32 %v528, %v2960
    %v2965 = vmul.f32 %v534, %v2961
    %v2966 = vmul.f32 %v540, %v2962
    %v2967 = vmul.f32 %v546, %v2963
    %v2968 = vmul.f32 %v2944, %v2366
    %v2969 = vmul.f32 %v2945, %v2386
    %v2970 = vmul.f32 %v2946, %v2406
    %v2971 = vmul.f32 %v2947, %v2426
    %v2972 = vadd.f32 %v2964, %v2968
    %v2973 = vadd.f32 %v2965, %v2969
    %v2974 = vadd.f32 %v2966, %v2970
    %v2975 = vadd.f32 %v2967, %v2971
    %v2976 = vmul.f32 %v528, %v2366
    %v2977 = vmul.f32 %v534, %v2386
    %v2978 = vmul.f32 %v540, %v2406
    %v2979 = vmul.f32 %v546, %v2426
    %v2980 = vmul.f32 %v2956, %v2960
    %v2981 = vmul.f32 %v2957, %v2961
    %v2982 = vmul.f32 %v2958, %v2962
    %v2983 = vmul.f32 %v2959, %v2963
    %v2984 = vadd.f32 %v2976, %v2980
    %v2985 = vadd.f32 %v2977, %v2981
    %v2986 = vadd.f32 %v2978, %v2982
    %v2987 = vadd.f32 %v2979, %v2983
    %s2988 = scalar_lea.vmem [#allocation4], 256
    %2989 = vst [vmem:[%s2988] sm:$0xff] %v2972
    %2990 = vst [vmem:[%s2988 + $0x8] sm:$0xff] %v2973
    %2991 = vst [vmem:[%s2988 + $0x10] sm:$0xff] %v2974
    %2992 = vst [vmem:[%s2988 + $0x18] sm:$0xff] %v2975
    %2993 = vst [vmem:[%s2988 + $0x20] sm:$0xff] %v2984
    %2994 = vst [vmem:[%s2988 + $0x28] sm:$0xff] %v2985
    %2995 = vst [vmem:[%s2988 + $0x30] sm:$0xff] %v2986
    %2996 = vst [vmem:[%s2988 + $0x38] sm:$0xff] %v2987
    %v2997 = vsub.f32 1.0, %v2550
    %v2998 = vsub.f32 1.0, %v2552
    %v2999 = vsub.f32 1.0, %v2554
    %v3000 = vsub.f32 1.0, %v2556
    %v3001 = vmul.f32 %v1607, %v2997
    %v3002 = vmul.f32 %v1612, %v2998
    %v3003 = vmul.f32 %v1617, %v2999
    %v3004 = vmul.f32 %v1622, %v3000
    %v3005 = vmul.f32 %v2944, %v2550
    %v3006 = vmul.f32 %v2945, %v2552
    %v3007 = vmul.f32 %v2946, %v2554
    %v3008 = vmul.f32 %v2947, %v2556
    %v3009 = vadd.f32 %v3001, %v3005
    %v3010 = vadd.f32 %v3002, %v3006
    %v3011 = vadd.f32 %v3003, %v3007
    %v3012 = vadd.f32 %v3004, %v3008
    %v3013 = vmul.f32 %v1607, %v2550
    %v3014 = vmul.f32 %v1612, %v2552
    %v3015 = vmul.f32 %v1617, %v2554
    %v3016 = vmul.f32 %v1622, %v2556
    %v3017 = vmul.f32 %v2956, %v2997
    %v3018 = vmul.f32 %v2957, %v2998
    %v3019 = vmul.f32 %v2958, %v2999
    %v3020 = vmul.f32 %v2959, %v3000
    %v3021 = vadd.f32 %v3013, %v3017
    %v3022 = vadd.f32 %v3014, %v3018
    %v3023 = vadd.f32 %v3015, %v3019
    %v3024 = vadd.f32 %v3016, %v3020
    %v3025 = vsub.f32 1.0, %v2368
    %v3026 = vsub.f32 1.0, %v2388
    %v3027 = vsub.f32 1.0, %v2408
    %v3028 = vsub.f32 1.0, %v2428
    %v3029 = vmul.f32 %v530, %v3025
    %v3030 = vmul.f32 %v536, %v3026
    %v3031 = vmul.f32 %v542, %v3027
    %v3032 = vmul.f32 %v548, %v3028
    %v3033 = vmul.f32 %v3009, %v2368
    %v3034 = vmul.f32 %v3010, %v2388
    %v3035 = vmul.f32 %v3011, %v2408
    %v3036 = vmul.f32 %v3012, %v2428
    %v3037 = vadd.f32 %v3029, %v3033
    %v3038 = vadd.f32 %v3030, %v3034
    %v3039 = vadd.f32 %v3031, %v3035
    %v3040 = vadd.f32 %v3032, %v3036
    %v3041 = vmul.f32 %v530, %v2368
    %v3042 = vmul.f32 %v536, %v2388
    %v3043 = vmul.f32 %v542, %v2408
    %v3044 = vmul.f32 %v548, %v2428
    %v3045 = vmul.f32 %v3021, %v3025
    %v3046 = vmul.f32 %v3022, %v3026
    %v3047 = vmul.f32 %v3023, %v3027
    %v3048 = vmul.f32 %v3024, %v3028
    %v3049 = vadd.f32 %v3041, %v3045
    %v3050 = vadd.f32 %v3042, %v3046
    %v3051 = vadd.f32 %v3043, %v3047
    %v3052 = vadd.f32 %v3044, %v3048
    %s3053 = scalar_lea.vmem [#allocation4], 320
    %3054 = vst [vmem:[%s3053] sm:$0xff] %v3037
    %3055 = vst [vmem:[%s3053 + $0x8] sm:$0xff] %v3038
    %3056 = vst [vmem:[%s3053 + $0x10] sm:$0xff] %v3039
    %3057 = vst [vmem:[%s3053 + $0x18] sm:$0xff] %v3040
    %3058 = vst [vmem:[%s3053 + $0x20] sm:$0xff] %v3049
    %3059 = vst [vmem:[%s3053 + $0x28] sm:$0xff] %v3050
    %3060 = vst [vmem:[%s3053 + $0x30] sm:$0xff] %v3051
    %3061 = vst [vmem:[%s3053 + $0x38] sm:$0xff] %v3052
    %v3062 = vsub.f32 1.0, %v2574
    %v3063 = vsub.f32 1.0, %v2576
    %v3064 = vsub.f32 1.0, %v2578
    %v3065 = vsub.f32 1.0, %v2580
    %v3066 = vmul.f32 %v1745, %v3062
    %v3067 = vmul.f32 %v1750, %v3063
    %v3068 = vmul.f32 %v1755, %v3064
    %v3069 = vmul.f32 %v1760, %v3065
    %v3070 = vmul.f32 %v3009, %v2574
    %v3071 = vmul.f32 %v3010, %v2576
    %v3072 = vmul.f32 %v3011, %v2578
    %v3073 = vmul.f32 %v3012, %v2580
    %v3074 = vadd.f32 %v3066, %v3070
    %v3075 = vadd.f32 %v3067, %v3071
    %v3076 = vadd.f32 %v3068, %v3072
    %v3077 = vadd.f32 %v3069, %v3073
    %v3078 = vmul.f32 %v1745, %v2574
    %v3079 = vmul.f32 %v1750, %v2576
    %v3080 = vmul.f32 %v1755, %v2578
    %v3081 = vmul.f32 %v1760, %v2580
    %v3082 = vmul.f32 %v3021, %v3062
    %v3083 = vmul.f32 %v3022, %v3063
    %v3084 = vmul.f32 %v3023, %v3064
    %v3085 = vmul.f32 %v3024, %v3065
    %v3086 = vadd.f32 %v3078, %v3082
    %v3087 = vadd.f32 %v3079, %v3083
    %v3088 = vadd.f32 %v3080, %v3084
    %v3089 = vadd.f32 %v3081, %v3085
    %v3090 = vsub.f32 1.0, %v2370
    %v3091 = vsub.f32 1.0, %v2390
    %v3092 = vsub.f32 1.0, %v2410
    %v3093 = vsub.f32 1.0, %v2430
    %v3094 = vmul.f32 %v689, %v3090
    %v3095 = vmul.f32 %v695, %v3091
    %v3096 = vmul.f32 %v701, %v3092
    %v3097 = vmul.f32 %v707, %v3093
    %v3098 = vmul.f32 %v3074, %v2370
    %v3099 = vmul.f32 %v3075, %v2390
    %v3100 = vmul.f32 %v3076, %v2410
    %v3101 = vmul.f32 %v3077, %v2430
    %v3102 = vadd.f32 %v3094, %v3098
    %v3103 = vadd.f32 %v3095, %v3099
    %v3104 = vadd.f32 %v3096, %v3100
    %v3105 = vadd.f32 %v3097, %v3101
    %v3106 = vmul.f32 %v689, %v2370
    %v3107 = vmul.f32 %v695, %v2390
    %v3108 = vmul.f32 %v701, %v2410
    %v3109 = vmul.f32 %v707, %v2430
    %v3110 = vmul.f32 %v3086, %v3090
    %v3111 = vmul.f32 %v3087, %v3091
    %v3112 = vmul.f32 %v3088, %v3092
    %v3113 = vmul.f32 %v3089, %v3093
    %v3114 = vadd.f32 %v3106, %v3110
    %v3115 = vadd.f32 %v3107, %v3111
    %v3116 = vadd.f32 %v3108, %v3112
    %v3117 = vadd.f32 %v3109, %v3113
    %s3118 = scalar_lea.vmem [#allocation4], 384
    %3119 = vst [vmem:[%s3118] sm:$0xff] %v3102
    %3120 = vst [vmem:[%s3118 + $0x8] sm:$0xff] %v3103
    %3121 = vst [vmem:[%s3118 + $0x10] sm:$0xff] %v3104
    %3122 = vst [vmem:[%s3118 + $0x18] sm:$0xff] %v3105
    %3123 = vst [vmem:[%s3118 + $0x20] sm:$0xff] %v3114
    %3124 = vst [vmem:[%s3118 + $0x28] sm:$0xff] %v3115
    %3125 = vst [vmem:[%s3118 + $0x30] sm:$0xff] %v3116
    %3126 = vst [vmem:[%s3118 + $0x38] sm:$0xff] %v3117
    %v3127 = vsub.f32 1.0, %v2598
    %v3128 = vsub.f32 1.0, %v2600
    %v3129 = vsub.f32 1.0, %v2602
    %v3130 = vsub.f32 1.0, %v2604
    %v3131 = vmul.f32 %v1883, %v3127
    %v3132 = vmul.f32 %v1888, %v3128
    %v3133 = vmul.f32 %v1893, %v3129
    %v3134 = vmul.f32 %v1898, %v3130
    %v3135 = vmul.f32 %v3074, %v2598
    %v3136 = vmul.f32 %v3075, %v2600
    %v3137 = vmul.f32 %v3076, %v2602
    %v3138 = vmul.f32 %v3077, %v2604
    %v3139 = vadd.f32 %v3131, %v3135
    %v3140 = vadd.f32 %v3132, %v3136
    %v3141 = vadd.f32 %v3133, %v3137
    %v3142 = vadd.f32 %v3134, %v3138
    %v3143 = vmul.f32 %v1883, %v2598
    %v3144 = vmul.f32 %v1888, %v2600
    %v3145 = vmul.f32 %v1893, %v2602
    %v3146 = vmul.f32 %v1898, %v2604
    %v3147 = vmul.f32 %v3086, %v3127
    %v3148 = vmul.f32 %v3087, %v3128
    %v3149 = vmul.f32 %v3088, %v3129
    %v3150 = vmul.f32 %v3089, %v3130
    %v3151 = vadd.f32 %v3143, %v3147
    %v3152 = vadd.f32 %v3144, %v3148
    %v3153 = vadd.f32 %v3145, %v3149
    %v3154 = vadd.f32 %v3146, %v3150
    %v3155 = vsub.f32 1.0, %v2372
    %v3156 = vsub.f32 1.0, %v2392
    %v3157 = vsub.f32 1.0, %v2412
    %v3158 = vsub.f32 1.0, %v2432
    %v3159 = vmul.f32 %v691, %v3155
    %v3160 = vmul.f32 %v697, %v3156
    %v3161 = vmul.f32 %v703, %v3157
    %v3162 = vmul.f32 %v709, %v3158
    %v3163 = vmul.f32 %v3139, %v2372
    %v3164 = vmul.f32 %v3140, %v2392
    %v3165 = vmul.f32 %v3141, %v2412
    %v3166 = vmul.f32 %v3142, %v2432
    %v3167 = vadd.f32 %v3159, %v3163
    %v3168 = vadd.f32 %v3160, %v3164
    %v3169 = vadd.f32 %v3161, %v3165
    %v3170 = vadd.f32 %v3162, %v3166
    %v3171 = vmul.f32 %v691, %v2372
    %v3172 = vmul.f32 %v697, %v2392
    %v3173 = vmul.f32 %v703, %v2412
    %v3174 = vmul.f32 %v709, %v2432
    %v3175 = vmul.f32 %v3151, %v3155
    %v3176 = vmul.f32 %v3152, %v3156
    %v3177 = vmul.f32 %v3153, %v3157
    %v3178 = vmul.f32 %v3154, %v3158
    %v3179 = vadd.f32 %v3171, %v3175
    %v3180 = vadd.f32 %v3172, %v3176
    %v3181 = vadd.f32 %v3173, %v3177
    %v3182 = vadd.f32 %v3174, %v3178
    %s3183 = scalar_lea.vmem [#allocation4], 448
    %3184 = vst [vmem:[%s3183] sm:$0xff] %v3167
    %3185 = vst [vmem:[%s3183 + $0x8] sm:$0xff] %v3168
    %3186 = vst [vmem:[%s3183 + $0x10] sm:$0xff] %v3169
    %3187 = vst [vmem:[%s3183 + $0x18] sm:$0xff] %v3170
    %3188 = vst [vmem:[%s3183 + $0x20] sm:$0xff] %v3179
    %3189 = vst [vmem:[%s3183 + $0x28] sm:$0xff] %v3180
    %3190 = vst [vmem:[%s3183 + $0x30] sm:$0xff] %v3181
    %3191 = vst [vmem:[%s3183 + $0x38] sm:$0xff] %v3182
    %v3192 = vsub.f32 1.0, %v2622
    %v3193 = vsub.f32 1.0, %v2624
    %v3194 = vsub.f32 1.0, %v2626
    %v3195 = vsub.f32 1.0, %v2628
    %v3196 = vmul.f32 %v2021, %v3192
    %v3197 = vmul.f32 %v2026, %v3193
    %v3198 = vmul.f32 %v2031, %v3194
    %v3199 = vmul.f32 %v2036, %v3195
    %v3200 = vmul.f32 %v3139, %v2622
    %v3201 = vmul.f32 %v3140, %v2624
    %v3202 = vmul.f32 %v3141, %v2626
    %v3203 = vmul.f32 %v3142, %v2628
    %v3204 = vadd.f32 %v3196, %v3200
    %v3205 = vadd.f32 %v3197, %v3201
    %v3206 = vadd.f32 %v3198, %v3202
    %v3207 = vadd.f32 %v3199, %v3203
    %v3208 = vmul.f32 %v2021, %v2622
    %v3209 = vmul.f32 %v2026, %v2624
    %v3210 = vmul.f32 %v2031, %v2626
    %v3211 = vmul.f32 %v2036, %v2628
    %v3212 = vmul.f32 %v3151, %v3192
    %v3213 = vmul.f32 %v3152, %v3193
    %v3214 = vmul.f32 %v3153, %v3194
    %v3215 = vmul.f32 %v3154, %v3195
    %v3216 = vadd.f32 %v3208, %v3212
    %v3217 = vadd.f32 %v3209, %v3213
    %v3218 = vadd.f32 %v3210, %v3214
    %v3219 = vadd.f32 %v3211, %v3215
    %v3220 = vsub.f32 1.0, %v2374
    %v3221 = vsub.f32 1.0, %v2394
    %v3222 = vsub.f32 1.0, %v2414
    %v3223 = vsub.f32 1.0, %v2434
    %v3224 = vmul.f32 %v850, %v3220
    %v3225 = vmul.f32 %v856, %v3221
    %v3226 = vmul.f32 %v862, %v3222
    %v3227 = vmul.f32 %v868, %v3223
    %v3228 = vmul.f32 %v3204, %v2374
    %v3229 = vmul.f32 %v3205, %v2394
    %v3230 = vmul.f32 %v3206, %v2414
    %v3231 = vmul.f32 %v3207, %v2434
    %v3232 = vadd.f32 %v3224, %v3228
    %v3233 = vadd.f32 %v3225, %v3229
    %v3234 = vadd.f32 %v3226, %v3230
    %v3235 = vadd.f32 %v3227, %v3231
    %v3236 = vmul.f32 %v850, %v2374
    %v3237 = vmul.f32 %v856, %v2394
    %v3238 = vmul.f32 %v862, %v2414
    %v3239 = vmul.f32 %v868, %v2434
    %v3240 = vmul.f32 %v3216, %v3220
    %v3241 = vmul.f32 %v3217, %v3221
    %v3242 = vmul.f32 %v3218, %v3222
    %v3243 = vmul.f32 %v3219, %v3223
    %v3244 = vadd.f32 %v3236, %v3240
    %v3245 = vadd.f32 %v3237, %v3241
    %v3246 = vadd.f32 %v3238, %v3242
    %v3247 = vadd.f32 %v3239, %v3243
    %s3248 = scalar_lea.vmem [#allocation4], 512
    %3249 = vst [vmem:[%s3248] sm:$0xff] %v3232
    %3250 = vst [vmem:[%s3248 + $0x8] sm:$0xff] %v3233
    %3251 = vst [vmem:[%s3248 + $0x10] sm:$0xff] %v3234
    %3252 = vst [vmem:[%s3248 + $0x18] sm:$0xff] %v3235
    %3253 = vst [vmem:[%s3248 + $0x20] sm:$0xff] %v3244
    %3254 = vst [vmem:[%s3248 + $0x28] sm:$0xff] %v3245
    %3255 = vst [vmem:[%s3248 + $0x30] sm:$0xff] %v3246
    %3256 = vst [vmem:[%s3248 + $0x38] sm:$0xff] %v3247
    %v3257 = vsub.f32 1.0, %v2646
    %v3258 = vsub.f32 1.0, %v2648
    %v3259 = vsub.f32 1.0, %v2650
    %v3260 = vsub.f32 1.0, %v2652
    %v3261 = vmul.f32 %v2159, %v3257
    %v3262 = vmul.f32 %v2164, %v3258
    %v3263 = vmul.f32 %v2169, %v3259
    %v3264 = vmul.f32 %v2174, %v3260
    %v3265 = vmul.f32 %v3204, %v2646
    %v3266 = vmul.f32 %v3205, %v2648
    %v3267 = vmul.f32 %v3206, %v2650
    %v3268 = vmul.f32 %v3207, %v2652
    %v3269 = vadd.f32 %v3261, %v3265
    %v3270 = vadd.f32 %v3262, %v3266
    %v3271 = vadd.f32 %v3263, %v3267
    %v3272 = vadd.f32 %v3264, %v3268
    %v3273 = vmul.f32 %v2159, %v2646
    %v3274 = vmul.f32 %v2164, %v2648
    %v3275 = vmul.f32 %v2169, %v2650
    %v3276 = vmul.f32 %v2174, %v2652
    %v3277 = vmul.f32 %v3216, %v3257
    %v3278 = vmul.f32 %v3217, %v3258
    %v3279 = vmul.f32 %v3218, %v3259
    %v3280 = vmul.f32 %v3219, %v3260
    %v3281 = vadd.f32 %v3273, %v3277
    %v3282 = vadd.f32 %v3274, %v3278
    %v3283 = vadd.f32 %v3275, %v3279
    %v3284 = vadd.f32 %v3276, %v3280
    %v3285 = vsub.f32 1.0, %v2376
    %v3286 = vsub.f32 1.0, %v2396
    %v3287 = vsub.f32 1.0, %v2416
    %v3288 = vsub.f32 1.0, %v2436
    %v3289 = vmul.f32 %v852, %v3285
    %v3290 = vmul.f32 %v858, %v3286
    %v3291 = vmul.f32 %v864, %v3287
    %v3292 = vmul.f32 %v870, %v3288
    %v3293 = vmul.f32 %v3269, %v2376
    %v3294 = vmul.f32 %v3270, %v2396
    %v3295 = vmul.f32 %v3271, %v2416
    %v3296 = vmul.f32 %v3272, %v2436
    %v3297 = vadd.f32 %v3289, %v3293
    %v3298 = vadd.f32 %v3290, %v3294
    %v3299 = vadd.f32 %v3291, %v3295
    %v3300 = vadd.f32 %v3292, %v3296
    %v3301 = vmul.f32 %v852, %v2376
    %v3302 = vmul.f32 %v858, %v2396
    %v3303 = vmul.f32 %v864, %v2416
    %v3304 = vmul.f32 %v870, %v2436
    %v3305 = vmul.f32 %v3281, %v3285
    %v3306 = vmul.f32 %v3282, %v3286
    %v3307 = vmul.f32 %v3283, %v3287
    %v3308 = vmul.f32 %v3284, %v3288
    %v3309 = vadd.f32 %v3301, %v3305
    %v3310 = vadd.f32 %v3302, %v3306
    %v3311 = vadd.f32 %v3303, %v3307
    %v3312 = vadd.f32 %v3304, %v3308
    %s3313 = scalar_lea.vmem [#allocation4], 576
    %3314 = vst [vmem:[%s3313] sm:$0xff] %v3297
    %3315 = vst [vmem:[%s3313 + $0x8] sm:$0xff] %v3298
    %3316 = vst [vmem:[%s3313 + $0x10] sm:$0xff] %v3299
    %3317 = vst [vmem:[%s3313 + $0x18] sm:$0xff] %v3300
    %3318 = vst [vmem:[%s3313 + $0x20] sm:$0xff] %v3309
    %3319 = vst [vmem:[%s3313 + $0x28] sm:$0xff] %v3310
    %3320 = vst [vmem:[%s3313 + $0x30] sm:$0xff] %v3311
    %3321 = vst [vmem:[%s3313 + $0x38] sm:$0xff] %v3312
    %v3322 = vtanh.pop %v3297
    %v3323 = vtanh.pop %v3298
    %v3324 = vtanh.pop %v3299
    %v3325 = vtanh.pop %v3300
    %v3326 = vmul.f32 %v3322, %v2670
    %v3327 = vmul.f32 %v3323, %v2672
    %v3328 = vmul.f32 %v3324, %v2674
    %v3329 = vmul.f32 %v3325, %v2676
    %v3330 = vtanh.pop %v3309
    %v3331 = vtanh.pop %v3310
    %v3332 = vtanh.pop %v3311
    %v3333 = vtanh.pop %v3312
    %v3334 = vmul.f32 %v3330, %v2694
    %v3335 = vmul.f32 %v3331, %v2696
    %v3336 = vmul.f32 %v3332, %v2698
    %v3337 = vmul.f32 %v3333, %v2700
    %v3338 = vadd.f32 %v3326, %v3334
    %v3339 = vadd.f32 %v3327, %v3335
    %v3340 = vadd.f32 %v3328, %v3336
    %v3341 = vadd.f32 %v3329, %v3337
    %v3342 = vsub.f32 2.0, %v2670
    %v3343 = vsub.f32 2.0, %v2672
    %v3344 = vsub.f32 2.0, %v2674
    %v3345 = vsub.f32 2.0, %v2676
    %v3346 = vsub.f32 %v3342, %v2694
    %v3347 = vsub.f32 %v3343, %v2696
    %v3348 = vsub.f32 %v3344, %v2698
    %v3349 = vsub.f32 %v3345, %v2700
    %v3350 = vmul.f32 %v3346, %v875
    %v3351 = vmul.f32 %v3347, %v880
    %v3352 = vmul.f32 %v3348, %v885
    %v3353 = vmul.f32 %v3349, %v890
    %v3354 = vadd.f32 %v3338, %v3350
    %v3355 = vadd.f32 %v3339, %v3351
    %v3356 = vadd.f32 %v3340, %v3352
    %v3357 = vadd.f32 %v3341, %v3353
    %3358 = vst [vmem:[#allocation2] sm:$0xff] %v3354
    %3359 = vst [vmem:[#allocation2 + $0x8] sm:$0xff] %v3355
    %3360 = vst [vmem:[#allocation2 + $0x10] sm:$0xff] %v3356
    %3361 = vst [vmem:[#allocation2 + $0x18] sm:$0xff] %v3357
    // Predicated region
    $region14: #{tpu_custom_call.1} parent=1 // pred_check
      _
    $region15: #{tpu_custom_call.1} parent=1 // pred_check_branch
      %3363 = sbr.rel (0) target = $region17
    $region16: #{tpu_custom_call.1} parent=1 // pred_region
      %s3365 = ssub.s32 512, 512
      %3366 = vsyncadd [#allocation3], %s3365
      %s3367 = sshll.u32 [#allocation2], 4
      %s3368 = int_to_ptr.vmem [resolvable:$true] %s3367
      %3373 = dma.vmem_to_hbm [thread:$0]  %s3368, 512, %s3, [#allocation3], 128, 128, 8
    $region17: #{tpu_custom_call.1} parent=1 // pred_fallthru
      _
    // Predicated region
    $region18: #{tpu_custom_call.1} parent=1 // pred_check
      _
    $region19: #{tpu_custom_call.1} parent=1 // pred_check_branch
      %3375 = sbr.rel (0) target = $region21
    $region20: #{tpu_custom_call.1} parent=1 // pred_region
      %s3377 = ssub.s32 10240, 10240
      %3378 = vsyncadd [#allocation5], %s3377
      %s3379 = sshll.u32 [#allocation4], 4
      %s3380 = int_to_ptr.vmem [resolvable:$true] %s3379
      %3385 = dma.vmem_to_hbm [thread:$0]  %s3380, 10240, %s4, [#allocation5], 128, 128, 8
    $region21: #{tpu_custom_call.1} parent=1 // pred_fallthru
      _
    // Predicated region
    $region22: #{tpu_custom_call.1} parent=1 // pred_check
      _
    $region23: #{tpu_custom_call.1} parent=1 // pred_check_branch
      %3387 = sbr.rel (0) target = $region25
    $region24: #{tpu_custom_call.1} parent=1 // pred_region
      %3388 = dma.done [#allocation3], 512
    $region25: #{tpu_custom_call.1} parent=1 // pred_fallthru
      _
    // Predicated region
    $region26: #{tpu_custom_call.1} parent=1 // pred_check
      _
    $region27: #{tpu_custom_call.1} parent=1 // pred_check_branch
      %3390 = sbr.rel (0) target = $region29
    $region28: #{tpu_custom_call.1} parent=1 // pred_region
      %3391 = dma.done [#allocation5], 10240
    $region29: #{tpu_custom_call.1} parent=1 // pred_fallthru
      _
    %3392 = vsyncpa [#allocation3], 1
    %3393 = vsyncpa [#allocation5], 1

</llo_original>
